<compile_context>
chip_gen: v6e
topology: v6e:2x2x1
jax: 0.10.0
libtpu: 0.0.40
codegen_flags: <defaults>
</compile_context>

<pallas_src>
import jax
import jax.numpy as jnp
from jax import lax
from jax.experimental import pallas as pl
from jax.experimental.pallas import tpu as pltpu

_EPS = 1e-5  # PyTorch LayerNorm default eps


def _layernorm(x, g, b):
    # x: (R, C), g/b broadcastable (1, C); normalize last dim (biased var, like torch)
    mu = jnp.mean(x, axis=-1, keepdims=True)
    var = jnp.mean(jnp.square(x - mu), axis=-1, keepdims=True)
    return (x - mu) * lax.rsqrt(var + _EPS) * g + b


def graph_constructor_kernel(
    x_ref,     # (Bb, N, T)   batch block of the (squeezed) input
    wt_ref,    # (T, dim)     trans_Merge_line conv weight (reshaped)
    pdim_ref,  # (5, dim)     rows: bt, tn_g, tn_b, bn_g, bn_b
    w_ref,     # (N, dim)     calc_adj.w
    wqk_ref,   # (2D, dim)    rows [0,D)=wq ; [D,2D)=wk * head_mix_coeff / sqrt(hd)
    bqk_ref,   # (1, 2D)      [bq | bk * head_mix_coeff / sqrt(hd)]
    pnod_ref,  # (8, N)       rows: sn_g, sn_b, an_g, an_b, ln_g, ln_b, a1_g, a1_b
    al_ref,    # (N, N)       calc_adj.attn_linear
    al1_ref,   # (N, N)       calc_adj.attn_linear_1
    out_ref,   # (Bb, N, N)
):
    Bb, N, T = x_ref.shape
    node_dim = wt_ref.shape[1]
    D = wqk_ref.shape[0] // 2

    pd = pdim_ref[...]
    bt, tn_g, tn_b, bn_g, bn_b = tuple(pd[i:i + 1] for i in range(5))
    pn = pnod_ref[...]
    sn_g, sn_b, an_g, an_b, ln_g, ln_b, a1_g, a1_b = tuple(pn[i:i + 1] for i in range(8))

    # Fold the batch block into the M (sublane) dimension for all node-wise stages.
    x = x_ref[...].reshape(Bb * N, T)                                   # (Bb*N, T)

    # trans_Merge_line: Conv2d(1, dim, (1, T)) == x @ Wt + bt
    time = jnp.dot(x, wt_ref[...], preferred_element_type=jnp.float32) + bt
    time = _layernorm(time, tn_g, tn_b)                                 # time_norm
    nv1 = _layernorm(time, bn_g, bn_b)                                  # calc_adj.bn  (Bb*N, dim)

    # nodevec1_1 = einsum('bnd,nl->bnl', nv1, w) + nv1 = rowsum(nv1) * w[n,:] + nv1
    nv1_3 = nv1.reshape(Bb, N, node_dim)
    rs = jnp.sum(nv1_3, axis=-1, keepdims=True)                         # (Bb, N, 1)
    nv11 = rs * w_ref[...] + nv1_3                                      # (Bb, N, dim)

    # skip_atten = nodevec1_1 @ nodevec1_1^T (batched), then LayerNorm over nodes
    skip = lax.dot_general(nv11, nv11, (((2,), (2,)), ((0,), (0,))),
                           preferred_element_type=jnp.float32)          # (Bb, N, N)
    skip = _layernorm(skip.reshape(Bb * N, N), sn_g, sn_b)

    # query/key 1x1 convs fused into one per-node matmul
    qk = lax.dot_general(nv1, wqk_ref[...], (((1,), (1,)), ((), ())),
                         preferred_element_type=jnp.float32) + bqk_ref[...]   # (Bb*N, 2D)
    q = qk[:, :D].reshape(Bb, N, D)
    k = qk[:, D:].reshape(Bb, N, D)   # already scaled by (1 + colsum(mlp_w)) / sqrt(hd)

    # Per-head attention + mlp head mixing + residual + sum over heads collapse to a
    # single batched matmul:  s = sum_h c[h] * Q_h K_h^T / sqrt(hd) = Q @ K_scaled^T.
    # (The mlp bias summed over heads is a per-row constant and cancels in attn_norm.)
    s = lax.dot_general(q, k, (((2,), (2,)), ((0,), (0,))),
                        preferred_element_type=jnp.float32).reshape(Bb * N, N)

    resolution = _layernorm(s, an_g, an_b) + skip                       # (Bb*N, N)

    r_ln = _layernorm(resolution, ln_g, ln_b)
    res1 = jnp.maximum(
        jnp.dot(r_ln, al_ref[...], preferred_element_type=jnp.float32), 0.0)
    res1 = jnp.dot(res1, al1_ref[...], preferred_element_type=jnp.float32)

    rel2 = jnp.maximum(_layernorm(res1 + resolution, a1_g, a1_b), 0.0)

    # softmax over the last (nodes) axis; reciprocal on the (otherwise idle) EUP slot
    m = jnp.max(rel2, axis=-1, keepdims=True)
    e = jnp.exp(rel2 - m)
    inv = pl.reciprocal(jnp.sum(e, axis=-1, keepdims=True), approx=True)
    out_ref[...] = (e * inv).reshape(Bb, N, N)


def _pick_batch_block(batch, max_block=8):
    """Largest divisor of `batch` <= max_block that still leaves >= 2 grid steps
    (so a v7x chip can shard the parallel axis over both TensorCores)."""
    best = 1
    for bb in range(1, min(batch, max_block) + 1):
        if batch % bb == 0 and (batch // bb >= 2 or batch == 1):
            best = bb
    return best


def graph_constructor_forward(x, params, *, heads, head_dim, batch_block=None):
    """x: (B, nodes, time_step) float32 (NCHW input with C=1 already squeezed)."""
    B, N, T = x.shape
    node_dim = params["wt"].shape[1]
    D = heads * head_dim
    Bb = _pick_batch_block(B) if batch_block is None else batch_block
    assert B % Bb == 0, "batch block must divide batch"

    # Fold mlp head-mixing + residual + head-sum + 1/sqrt(hd) into the key weights:
    #   sum_h (mlp(attn)+attn)_h = const + sum_h (1 + colsum(mlp_w)[h]) * Q_h K_h^T / sqrt(hd)
    c = (1.0 + jnp.sum(params["mlp_w"], axis=0)) / (head_dim ** 0.5)        # (heads,)
    c_vec = jnp.repeat(c, head_dim)                                          # (D,)
    wqk = jnp.concatenate([params["wq"], params["wk"] * c_vec[:, None]], axis=0)   # (2D, dim)
    bqk = jnp.concatenate([params["bq"], params["bk"] * c_vec[None, :]], axis=1)   # (1, 2D)

    # Pack the small per-feature parameters into two slabs.
    pdim = jnp.concatenate([params["bt"], params["tn_g"], params["tn_b"],
                            params["bn_g"], params["bn_b"]], axis=0)         # (5, dim)
    pnod = jnp.concatenate([params["sn_g"], params["sn_b"],
                            params["an_g"], params["an_b"],
                            params["ln_g"], params["ln_b"],
                            params["a1_g"], params["a1_b"]], axis=0)         # (8, N)

    def rep2(shape):
        return pl.BlockSpec(shape, lambda b: (0, 0))

    in_specs = [
        pl.BlockSpec((Bb, N, T), lambda b: (b, 0, 0)),
        rep2((T, node_dim)),
        rep2((5, node_dim)),
        rep2((N, node_dim)),
        rep2((2 * D, node_dim)),
        rep2((1, 2 * D)),
        rep2((8, N)),
        rep2((N, N)),
        rep2((N, N)),
    ]

    return pl.pallas_call(
        graph_constructor_kernel,
        out_shape=jax.ShapeDtypeStruct((B, N, N), jnp.float32),
        grid=(B // Bb,),
        in_specs=in_specs,
        out_specs=pl.BlockSpec((Bb, N, N), lambda b: (b, 0, 0)),
        compiler_params=pltpu.CompilerParams(dimension_semantics=("parallel",)),
    )(x, params["wt"], pdim, params["w"], wqk, bqk, pnod, params["al"], params["al1"])


def init_params(key, *, nodes, dim, time_step, heads, head_dim):
    """Deterministic synthetic parameters matching the module's __init__ shapes."""
    D = heads * head_dim
    ks = iter(jax.random.split(key, 10))

    def xavier(k, shape, gain=1.0):
        fan_out, fan_in = shape[0], shape[-1]
        a = gain * (6.0 / (fan_in + fan_out)) ** 0.5
        return jax.random.uniform(k, shape, jnp.float32, -a, a)

    f32 = jnp.float32
    params = {
        # trans_Merge_line: Conv2d(1, dim, kernel=(1, T)) -> weight reshaped to (T, dim)
        "wt": xavier(next(ks), (time_step, dim)),
        "bt": 0.01 * jax.random.normal(next(ks), (1, dim), f32),
        # LayerNorms (PyTorch default init would be gamma=1, beta=0)
        "tn_g": jnp.ones((1, dim), f32), "tn_b": jnp.zeros((1, dim), f32),
        "bn_g": jnp.ones((1, dim), f32), "bn_b": jnp.zeros((1, dim), f32),
        "sn_g": jnp.ones((1, nodes), f32), "sn_b": jnp.zeros((1, nodes), f32),
        "an_g": jnp.ones((1, nodes), f32), "an_b": jnp.zeros((1, nodes), f32),
        "ln_g": jnp.ones((1, nodes), f32), "ln_b": jnp.zeros((1, nodes), f32),
        "a1_g": jnp.ones((1, nodes), f32), "a1_b": jnp.zeros((1, nodes), f32),
        # calc_adj parameters
        "w": xavier(next(ks), (nodes, dim), gain=1.414),
        "wq": xavier(next(ks), (D, dim)),
        "bq": jnp.zeros((1, D), f32),
        "wk": xavier(next(ks), (D, dim)),
        "bk": jnp.zeros((1, D), f32),
        "mlp_w": xavier(next(ks), (heads, heads)),
        "mlp_b": 0.01 * jax.random.normal(next(ks), (heads,), f32),   # nonzero on purpose
        "al": xavier(next(ks), (nodes, nodes), gain=1.414),
        "al1": xavier(next(ks), (nodes, nodes), gain=1.414),
    }
    return params


def _reference_forward(x, params, *, heads, head_dim):
    """Plain-JAX reference implementing the PyTorch forward literally (eval mode)."""
    def ln(v, g, b):
        mu = jnp.mean(v, axis=-1, keepdims=True)
        var = jnp.mean(jnp.square(v - mu), axis=-1, keepdims=True)
        return (v - mu) * lax.rsqrt(var + _EPS) * g + b

    B, N, T = x.shape
    time = jnp.einsum("bnt,td->bnd", x, params["wt"]) + params["bt"][0]
    time = ln(time, params["tn_g"][0], params["tn_b"][0])
    nv1 = ln(time, params["bn_g"][0], params["bn_b"][0])

    nv11 = jnp.einsum("bnd,nl->bnl", nv1, params["w"]) + nv1
    skip = jnp.einsum("bnd,bmd->bnm", nv11, nv11)
    skip = ln(skip, params["sn_g"][0], params["sn_b"][0])

    q = jnp.einsum("bnd,ed->bne", nv1, params["wq"]) + params["bq"][0]
    k = jnp.einsum("bnd,ed->bne", nv1, params["wk"]) + params["bk"][0]
    q = q.reshape(B, N, heads, head_dim)
    k = k.reshape(B, N, heads, head_dim)
    attn = jnp.einsum("bnhd,bmhd->bhnm", q, k) / (head_dim ** 0.5)
    mixed = jnp.einsum("gh,bhnm->bgnm", params["mlp_w"], attn) + params["mlp_b"][:, None, None]
    attn = mixed + attn
    s = jnp.sum(attn, axis=1)

    resolution = ln(s, params["an_g"][0], params["an_b"][0]) + skip
    r = ln(resolution, params["ln_g"][0], params["ln_b"][0])
    res1 = jnp.maximum(jnp.einsum("bnm,ml->bnl", r, params["al"]), 0.0)
    res1 = jnp.einsum("bnm,ml->bnl", res1, params["al1"])
    rel2 = ln(res1 + resolution, params["a1_g"][0], params["a1_b"][0])
    rel2 = jnp.maximum(rel2, 0.0)
    m = jnp.max(rel2, axis=-1, keepdims=True)
    e = jnp.exp(rel2 - m)
    return e / jnp.sum(e, axis=-1, keepdims=True)


if __name__ == "__main__":
    jax.config.update("jax_default_matmul_precision", "highest")

    # small shapes consistent with the module's forward
    B, nodes, dim, time_step = 2, 16, 32, 8
    heads, head_dim = 2, 8

    key = jax.random.PRNGKey(0)
    pkey, xkey = jax.random.split(key)
    params = init_params(pkey, nodes=nodes, dim=dim, time_step=time_step,
                         heads=heads, head_dim=head_dim)

    # PyTorch input: (batch, in_dim=1, nodes, time_step) NCHW
    x_nchw = jax.random.normal(xkey, (B, 1, nodes, time_step), jnp.float32)
    x = x_nchw[:, 0, :, :]   # kernel layout: (B, nodes, time_step)

    adj = graph_constructor_forward(x, params, heads=heads, head_dim=head_dim)
    adj = jax.block_until_ready(adj)

    ref = jax.block_until_ready(_reference_forward(x, params, heads=heads, head_dim=head_dim))

    assert adj.shape == (B, nodes, nodes)
    assert bool(jnp.all(jnp.isfinite(adj)))
    # rows of the returned adjacency are softmax-normalized (approx reciprocal -> loose tol)
    assert bool(jnp.allclose(jnp.sum(adj, axis=-1), 1.0, atol=1e-2))
    # kernel matches the literal per-head / mlp-bias reference (validates the algebraic folds)
    assert bool(jnp.allclose(adj, ref, atol=5e-3, rtol=5e-3))
    print("KERNEL_OK")
</pallas_src>

<mosaic_0001>
module attributes {stable_mosaic.version = 11 : i64} {
  func.func @graph_constructor_kernel(%arg0: i32, %arg1: memref<1x16x8xf32, #tpu.memory_space<vmem>>, %arg2: memref<8x32xf32, #tpu.memory_space<vmem>>, %arg3: memref<5x32xf32, #tpu.memory_space<vmem>>, %arg4: memref<16x32xf32, #tpu.memory_space<vmem>>, %arg5: memref<32x32xf32, #tpu.memory_space<vmem>>, %arg6: memref<1x32xf32, #tpu.memory_space<vmem>>, %arg7: memref<8x16xf32, #tpu.memory_space<vmem>>, %arg8: memref<16x16xf32, #tpu.memory_space<vmem>>, %arg9: memref<16x16xf32, #tpu.memory_space<vmem>>, %arg10: memref<1x16x16xf32, #tpu.memory_space<vmem>>) attributes {dimension_semantics = [#tpu.dimension_semantics<parallel>], iteration_bounds = array<i64: 2>, scalar_prefetch = 0 : i64, scratch_operands = 0 : i64, tpu.core_type = #tpu.core_type<tc>, window_params = [{transform_indices = @transform_0, window_bounds = array<i64: 1, 16, 8>}, {pipeline_mode = #tpu.pipeline_mode<synchronous>, transform_indices = @transform_1, window_bounds = array<i64: 8, 32>}, {pipeline_mode = #tpu.pipeline_mode<synchronous>, transform_indices = @transform_2, window_bounds = array<i64: 5, 32>}, {pipeline_mode = #tpu.pipeline_mode<synchronous>, transform_indices = @transform_3, window_bounds = array<i64: 16, 32>}, {pipeline_mode = #tpu.pipeline_mode<synchronous>, transform_indices = @transform_4, window_bounds = array<i64: 32, 32>}, {pipeline_mode = #tpu.pipeline_mode<synchronous>, transform_indices = @transform_5, window_bounds = array<i64: 1, 32>}, {pipeline_mode = #tpu.pipeline_mode<synchronous>, transform_indices = @transform_6, window_bounds = array<i64: 8, 16>}, {pipeline_mode = #tpu.pipeline_mode<synchronous>, transform_indices = @transform_7, window_bounds = array<i64: 16, 16>}, {pipeline_mode = #tpu.pipeline_mode<synchronous>, transform_indices = @transform_8, window_bounds = array<i64: 16, 16>}, {transform_indices = @transform_9, window_bounds = array<i64: 1, 16, 16>}]} {
    %c0 = arith.constant 0 : index
    %c0_0 = arith.constant 0 : index
    %0 = vector.load %arg3[%c0, %c0_0] : memref<5x32xf32, #tpu.memory_space<vmem>>, vector<5x32xf32>
    %1 = vector.extract_strided_slice %0 {offsets = [0, 0], sizes = [1, 32], strides = [1, 1]} : vector<5x32xf32> to vector<1x32xf32>
    %2 = vector.extract_strided_slice %0 {offsets = [1, 0], sizes = [1, 32], strides = [1, 1]} : vector<5x32xf32> to vector<1x32xf32>
    %3 = vector.extract_strided_slice %0 {offsets = [2, 0], sizes = [1, 32], strides = [1, 1]} : vector<5x32xf32> to vector<1x32xf32>
    %4 = vector.extract_strided_slice %0 {offsets = [3, 0], sizes = [1, 32], strides = [1, 1]} : vector<5x32xf32> to vector<1x32xf32>
    %5 = vector.extract_strided_slice %0 {offsets = [4, 0], sizes = [1, 32], strides = [1, 1]} : vector<5x32xf32> to vector<1x32xf32>
    %c0_1 = arith.constant 0 : index
    %c0_2 = arith.constant 0 : index
    %6 = vector.load %arg7[%c0_1, %c0_2] : memref<8x16xf32, #tpu.memory_space<vmem>>, vector<8x16xf32>
    %7 = vector.extract_strided_slice %6 {offsets = [0, 0], sizes = [1, 16], strides = [1, 1]} : vector<8x16xf32> to vector<1x16xf32>
    %8 = vector.extract_strided_slice %6 {offsets = [1, 0], sizes = [1, 16], strides = [1, 1]} : vector<8x16xf32> to vector<1x16xf32>
    %9 = vector.extract_strided_slice %6 {offsets = [2, 0], sizes = [1, 16], strides = [1, 1]} : vector<8x16xf32> to vector<1x16xf32>
    %10 = vector.extract_strided_slice %6 {offsets = [3, 0], sizes = [1, 16], strides = [1, 1]} : vector<8x16xf32> to vector<1x16xf32>
    %11 = vector.extract_strided_slice %6 {offsets = [4, 0], sizes = [1, 16], strides = [1, 1]} : vector<8x16xf32> to vector<1x16xf32>
    %12 = vector.extract_strided_slice %6 {offsets = [5, 0], sizes = [1, 16], strides = [1, 1]} : vector<8x16xf32> to vector<1x16xf32>
    %13 = vector.extract_strided_slice %6 {offsets = [6, 0], sizes = [1, 16], strides = [1, 1]} : vector<8x16xf32> to vector<1x16xf32>
    %14 = vector.extract_strided_slice %6 {offsets = [7, 0], sizes = [1, 16], strides = [1, 1]} : vector<8x16xf32> to vector<1x16xf32>
    %c0_3 = arith.constant 0 : index
    %c0_4 = arith.constant 0 : index
    %c0_5 = arith.constant 0 : index
    %15 = vector.load %arg1[%c0_3, %c0_4, %c0_5] : memref<1x16x8xf32, #tpu.memory_space<vmem>>, vector<1x16x8xf32>
    %16 = vector.shape_cast %15 : vector<1x16x8xf32> to vector<16x8xf32>
    %c0_6 = arith.constant 0 : index
    %c0_7 = arith.constant 0 : index
    %17 = vector.load %arg2[%c0_6, %c0_7] : memref<8x32xf32, #tpu.memory_space<vmem>>, vector<8x32xf32>
    %cst = arith.constant dense<0.000000e+00> : vector<16x32xf32>
    %18 = tpu.matmul %16, %17, %cst {dimension_numbers = #tpu.dot_dimension_numbers<[1], [0], [0], [1], [0, 0, 1, 1], [], []>, precision = #tpu.contract_precision<fp32>} : vector<16x8xf32>, vector<8x32xf32>, vector<16x32xf32> -> vector<16x32xf32>
    %19 = vector.broadcast %1 : vector<1x32xf32> to vector<16x32xf32>
    %20 = arith.addf %18, %19 : vector<16x32xf32>
    %cst_8 = arith.constant dense<0.000000e+00> : vector<16xf32>
    %21 = vector.multi_reduction <add>, %20, %cst_8 [1] : vector<16x32xf32> to vector<16xf32>
    %22 = vector.shape_cast %21 : vector<16xf32> to vector<16x1xf32>
    %cst_9 = arith.constant 3.200000e+01 : f32
    %23 = vector.broadcast %cst_9 : f32 to vector<16x1xf32>
    %24 = arith.divf %22, %23 : vector<16x1xf32>
    %25 = vector.broadcast %24 : vector<16x1xf32> to vector<16x32xf32>
    %26 = arith.subf %20, %25 : vector<16x32xf32>
    %27 = arith.mulf %26, %26 : vector<16x32xf32>
    %cst_10 = arith.constant dense<0.000000e+00> : vector<16xf32>
    %28 = vector.multi_reduction <add>, %27, %cst_10 [1] : vector<16x32xf32> to vector<16xf32>
    %29 = vector.shape_cast %28 : vector<16xf32> to vector<16x1xf32>
    %cst_11 = arith.constant 3.200000e+01 : f32
    %30 = vector.broadcast %cst_11 : f32 to vector<16x1xf32>
    %31 = arith.divf %29, %30 : vector<16x1xf32>
    %32 = vector.broadcast %24 : vector<16x1xf32> to vector<16x32xf32>
    %33 = arith.subf %20, %32 : vector<16x32xf32>
    %cst_12 = arith.constant 9.99999974E-6 : f32
    %34 = vector.broadcast %cst_12 : f32 to vector<16x1xf32>
    %35 = arith.addf %31, %34 : vector<16x1xf32>
    %36 = math.rsqrt %35 : vector<16x1xf32>
    %37 = vector.broadcast %36 : vector<16x1xf32> to vector<16x32xf32>
    %38 = arith.mulf %33, %37 : vector<16x32xf32>
    %39 = vector.broadcast %2 : vector<1x32xf32> to vector<16x32xf32>
    %40 = arith.mulf %38, %39 : vector<16x32xf32>
    %41 = vector.broadcast %3 : vector<1x32xf32> to vector<16x32xf32>
    %42 = arith.addf %40, %41 : vector<16x32xf32>
    %cst_13 = arith.constant dense<0.000000e+00> : vector<16xf32>
    %43 = vector.multi_reduction <add>, %42, %cst_13 [1] : vector<16x32xf32> to vector<16xf32>
    %44 = vector.shape_cast %43 : vector<16xf32> to vector<16x1xf32>
    %cst_14 = arith.constant 3.200000e+01 : f32
    %45 = vector.broadcast %cst_14 : f32 to vector<16x1xf32>
    %46 = arith.divf %44, %45 : vector<16x1xf32>
    %47 = vector.broadcast %46 : vector<16x1xf32> to vector<16x32xf32>
    %48 = arith.subf %42, %47 : vector<16x32xf32>
    %49 = arith.mulf %48, %48 : vector<16x32xf32>
    %cst_15 = arith.constant dense<0.000000e+00> : vector<16xf32>
    %50 = vector.multi_reduction <add>, %49, %cst_15 [1] : vector<16x32xf32> to vector<16xf32>
    %51 = vector.shape_cast %50 : vector<16xf32> to vector<16x1xf32>
    %cst_16 = arith.constant 3.200000e+01 : f32
    %52 = vector.broadcast %cst_16 : f32 to vector<16x1xf32>
    %53 = arith.divf %51, %52 : vector<16x1xf32>
    %54 = vector.broadcast %46 : vector<16x1xf32> to vector<16x32xf32>
    %55 = arith.subf %42, %54 : vector<16x32xf32>
    %cst_17 = arith.constant 9.99999974E-6 : f32
    %56 = vector.broadcast %cst_17 : f32 to vector<16x1xf32>
    %57 = arith.addf %53, %56 : vector<16x1xf32>
    %58 = math.rsqrt %57 : vector<16x1xf32>
    %59 = vector.broadcast %58 : vector<16x1xf32> to vector<16x32xf32>
    %60 = arith.mulf %55, %59 : vector<16x32xf32>
    %61 = vector.broadcast %4 : vector<1x32xf32> to vector<16x32xf32>
    %62 = arith.mulf %60, %61 : vector<16x32xf32>
    %63 = vector.broadcast %5 : vector<1x32xf32> to vector<16x32xf32>
    %64 = arith.addf %62, %63 : vector<16x32xf32>
    %65 = vector.shape_cast %64 : vector<16x32xf32> to vector<1x16x32xf32>
    %cst_18 = arith.constant dense<0.000000e+00> : vector<1x16xf32>
    %66 = vector.multi_reduction <add>, %65, %cst_18 [2] : vector<1x16x32xf32> to vector<1x16xf32>
    %67 = vector.shape_cast %66 : vector<1x16xf32> to vector<1x16x1xf32>
    %c0_19 = arith.constant 0 : index
    %c0_20 = arith.constant 0 : index
    %68 = vector.load %arg4[%c0_19, %c0_20] : memref<16x32xf32, #tpu.memory_space<vmem>>, vector<16x32xf32>
    %69 = vector.shape_cast %68 : vector<16x32xf32> to vector<1x16x32xf32>
    %70 = vector.broadcast %67 : vector<1x16x1xf32> to vector<1x16x32xf32>
    %71 = arith.mulf %70, %69 : vector<1x16x32xf32>
    %72 = arith.addf %71, %65 : vector<1x16x32xf32>
    %cst_21 = arith.constant dense<0.000000e+00> : vector<1x16x16xf32>
    %73 = tpu.matmul %72, %72, %cst_21 {dimension_numbers = #tpu.dot_dimension_numbers<[2], [2], [1], [1], [0, 0, 0, 1, 1, 1], [0], [0]>, precision = #tpu.contract_precision<fp32>} : vector<1x16x32xf32>, vector<1x16x32xf32>, vector<1x16x16xf32> -> vector<1x16x16xf32>
    %74 = vector.shape_cast %73 : vector<1x16x16xf32> to vector<16x16xf32>
    %cst_22 = arith.constant dense<0.000000e+00> : vector<16xf32>
    %75 = vector.multi_reduction <add>, %74, %cst_22 [1] : vector<16x16xf32> to vector<16xf32>
    %76 = vector.shape_cast %75 : vector<16xf32> to vector<16x1xf32>
    %cst_23 = arith.constant 1.600000e+01 : f32
    %77 = vector.broadcast %cst_23 : f32 to vector<16x1xf32>
    %78 = arith.divf %76, %77 : vector<16x1xf32>
    %79 = vector.broadcast %78 : vector<16x1xf32> to vector<16x16xf32>
    %80 = arith.subf %74, %79 : vector<16x16xf32>
    %81 = arith.mulf %80, %80 : vector<16x16xf32>
    %cst_24 = arith.constant dense<0.000000e+00> : vector<16xf32>
    %82 = vector.multi_reduction <add>, %81, %cst_24 [1] : vector<16x16xf32> to vector<16xf32>
    %83 = vector.shape_cast %82 : vector<16xf32> to vector<16x1xf32>
    %cst_25 = arith.constant 1.600000e+01 : f32
    %84 = vector.broadcast %cst_25 : f32 to vector<16x1xf32>
    %85 = arith.divf %83, %84 : vector<16x1xf32>
    %86 = vector.broadcast %78 : vector<16x1xf32> to vector<16x16xf32>
    %87 = arith.subf %74, %86 : vector<16x16xf32>
    %cst_26 = arith.constant 9.99999974E-6 : f32
    %88 = vector.broadcast %cst_26 : f32 to vector<16x1xf32>
    %89 = arith.addf %85, %88 : vector<16x1xf32>
    %90 = math.rsqrt %89 : vector<16x1xf32>
    %91 = vector.broadcast %90 : vector<16x1xf32> to vector<16x16xf32>
    %92 = arith.mulf %87, %91 : vector<16x16xf32>
    %93 = vector.broadcast %7 : vector<1x16xf32> to vector<16x16xf32>
    %94 = arith.mulf %92, %93 : vector<16x16xf32>
    %95 = vector.broadcast %8 : vector<1x16xf32> to vector<16x16xf32>
    %96 = arith.addf %94, %95 : vector<16x16xf32>
    %c0_27 = arith.constant 0 : index
    %c0_28 = arith.constant 0 : index
    %97 = vector.load %arg5[%c0_27, %c0_28] : memref<32x32xf32, #tpu.memory_space<vmem>>, vector<32x32xf32>
    %cst_29 = arith.constant dense<0.000000e+00> : vector<16x32xf32>
    %98 = tpu.matmul %64, %97, %cst_29 {dimension_numbers = #tpu.dot_dimension_numbers<[1], [1], [0], [0], [0, 0, 1, 0], [], []>, precision = #tpu.contract_precision<fp32>} : vector<16x32xf32>, vector<32x32xf32>, vector<16x32xf32> -> vector<16x32xf32>
    %c0_30 = arith.constant 0 : index
    %c0_31 = arith.constant 0 : index
    %99 = vector.load %arg6[%c0_30, %c0_31] : memref<1x32xf32, #tpu.memory_space<vmem>>, vector<1x32xf32>
    %100 = vector.broadcast %99 : vector<1x32xf32> to vector<16x32xf32>
    %101 = arith.addf %98, %100 : vector<16x32xf32>
    %102 = vector.extract_strided_slice %101 {offsets = [0, 0], sizes = [16, 16], strides = [1, 1]} : vector<16x32xf32> to vector<16x16xf32>
    %103 = vector.shape_cast %102 : vector<16x16xf32> to vector<1x16x16xf32>
    %104 = vector.extract_strided_slice %101 {offsets = [0, 16], sizes = [16, 16], strides = [1, 1]} : vector<16x32xf32> to vector<16x16xf32>
    %105 = vector.shape_cast %104 : vector<16x16xf32> to vector<1x16x16xf32>
    %cst_32 = arith.constant dense<0.000000e+00> : vector<1x16x16xf32>
    %106 = tpu.matmul %103, %105, %cst_32 {dimension_numbers = #tpu.dot_dimension_numbers<[2], [2], [1], [1], [0, 0, 0, 1, 1, 1], [0], [0]>, precision = #tpu.contract_precision<fp32>} : vector<1x16x16xf32>, vector<1x16x16xf32>, vector<1x16x16xf32> -> vector<1x16x16xf32>
    %107 = vector.shape_cast %106 : vector<1x16x16xf32> to vector<16x16xf32>
    %cst_33 = arith.constant dense<0.000000e+00> : vector<16xf32>
    %108 = vector.multi_reduction <add>, %107, %cst_33 [1] : vector<16x16xf32> to vector<16xf32>
    %109 = vector.shape_cast %108 : vector<16xf32> to vector<16x1xf32>
    %cst_34 = arith.constant 1.600000e+01 : f32
    %110 = vector.broadcast %cst_34 : f32 to vector<16x1xf32>
    %111 = arith.divf %109, %110 : vector<16x1xf32>
    %112 = vector.broadcast %111 : vector<16x1xf32> to vector<16x16xf32>
    %113 = arith.subf %107, %112 : vector<16x16xf32>
    %114 = arith.mulf %113, %113 : vector<16x16xf32>
    %cst_35 = arith.constant dense<0.000000e+00> : vector<16xf32>
    %115 = vector.multi_reduction <add>, %114, %cst_35 [1] : vector<16x16xf32> to vector<16xf32>
    %116 = vector.shape_cast %115 : vector<16xf32> to vector<16x1xf32>
    %cst_36 = arith.constant 1.600000e+01 : f32
    %117 = vector.broadcast %cst_36 : f32 to vector<16x1xf32>
    %118 = arith.divf %116, %117 : vector<16x1xf32>
    %119 = vector.broadcast %111 : vector<16x1xf32> to vector<16x16xf32>
    %120 = arith.subf %107, %119 : vector<16x16xf32>
    %cst_37 = arith.constant 9.99999974E-6 : f32
    %121 = vector.broadcast %cst_37 : f32 to vector<16x1xf32>
    %122 = arith.addf %118, %121 : vector<16x1xf32>
    %123 = math.rsqrt %122 : vector<16x1xf32>
    %124 = vector.broadcast %123 : vector<16x1xf32> to vector<16x16xf32>
    %125 = arith.mulf %120, %124 : vector<16x16xf32>
    %126 = vector.broadcast %9 : vector<1x16xf32> to vector<16x16xf32>
    %127 = arith.mulf %125, %126 : vector<16x16xf32>
    %128 = vector.broadcast %10 : vector<1x16xf32> to vector<16x16xf32>
    %129 = arith.addf %127, %128 : vector<16x16xf32>
    %130 = arith.addf %129, %96 : vector<16x16xf32>
    %cst_38 = arith.constant dense<0.000000e+00> : vector<16xf32>
    %131 = vector.multi_reduction <add>, %130, %cst_38 [1] : vector<16x16xf32> to vector<16xf32>
    %132 = vector.shape_cast %131 : vector<16xf32> to vector<16x1xf32>
    %cst_39 = arith.constant 1.600000e+01 : f32
    %133 = vector.broadcast %cst_39 : f32 to vector<16x1xf32>
    %134 = arith.divf %132, %133 : vector<16x1xf32>
    %135 = vector.broadcast %134 : vector<16x1xf32> to vector<16x16xf32>
    %136 = arith.subf %130, %135 : vector<16x16xf32>
    %137 = arith.mulf %136, %136 : vector<16x16xf32>
    %cst_40 = arith.constant dense<0.000000e+00> : vector<16xf32>
    %138 = vector.multi_reduction <add>, %137, %cst_40 [1] : vector<16x16xf32> to vector<16xf32>
    %139 = vector.shape_cast %138 : vector<16xf32> to vector<16x1xf32>
    %cst_41 = arith.constant 1.600000e+01 : f32
    %140 = vector.broadcast %cst_41 : f32 to vector<16x1xf32>
    %141 = arith.divf %139, %140 : vector<16x1xf32>
    %142 = vector.broadcast %134 : vector<16x1xf32> to vector<16x16xf32>
    %143 = arith.subf %130, %142 : vector<16x16xf32>
    %cst_42 = arith.constant 9.99999974E-6 : f32
    %144 = vector.broadcast %cst_42 : f32 to vector<16x1xf32>
    %145 = arith.addf %141, %144 : vector<16x1xf32>
    %146 = math.rsqrt %145 : vector<16x1xf32>
    %147 = vector.broadcast %146 : vector<16x1xf32> to vector<16x16xf32>
    %148 = arith.mulf %143, %147 : vector<16x16xf32>
    %149 = vector.broadcast %11 : vector<1x16xf32> to vector<16x16xf32>
    %150 = arith.mulf %148, %149 : vector<16x16xf32>
    %151 = vector.broadcast %12 : vector<1x16xf32> to vector<16x16xf32>
    %152 = arith.addf %150, %151 : vector<16x16xf32>
    %c0_43 = arith.constant 0 : index
    %c0_44 = arith.constant 0 : index
    %153 = vector.load %arg8[%c0_43, %c0_44] : memref<16x16xf32, #tpu.memory_space<vmem>>, vector<16x16xf32>
    %cst_45 = arith.constant dense<0.000000e+00> : vector<16x16xf32>
    %154 = tpu.matmul %152, %153, %cst_45 {dimension_numbers = #tpu.dot_dimension_numbers<[1], [0], [0], [1], [0, 0, 1, 1], [], []>, precision = #tpu.contract_precision<fp32>} : vector<16x16xf32>, vector<16x16xf32>, vector<16x16xf32> -> vector<16x16xf32>
    %cst_46 = arith.constant 0.000000e+00 : f32
    %155 = vector.broadcast %cst_46 : f32 to vector<16x16xf32>
    %156 = arith.maximumf %154, %155 : vector<16x16xf32>
    %c0_47 = arith.constant 0 : index
    %c0_48 = arith.constant 0 : index
    %157 = vector.load %arg9[%c0_47, %c0_48] : memref<16x16xf32, #tpu.memory_space<vmem>>, vector<16x16xf32>
    %cst_49 = arith.constant dense<0.000000e+00> : vector<16x16xf32>
    %158 = tpu.matmul %156, %157, %cst_49 {dimension_numbers = #tpu.dot_dimension_numbers<[1], [0], [0], [1], [0, 0, 1, 1], [], []>, precision = #tpu.contract_precision<fp32>} : vector<16x16xf32>, vector<16x16xf32>, vector<16x16xf32> -> vector<16x16xf32>
    %159 = arith.addf %158, %130 : vector<16x16xf32>
    %cst_50 = arith.constant dense<0.000000e+00> : vector<16xf32>
    %160 = vector.multi_reduction <add>, %159, %cst_50 [1] : vector<16x16xf32> to vector<16xf32>
    %161 = vector.shape_cast %160 : vector<16xf32> to vector<16x1xf32>
    %cst_51 = arith.constant 1.600000e+01 : f32
    %162 = vector.broadcast %cst_51 : f32 to vector<16x1xf32>
    %163 = arith.divf %161, %162 : vector<16x1xf32>
    %164 = vector.broadcast %163 : vector<16x1xf32> to vector<16x16xf32>
    %165 = arith.subf %159, %164 : vector<16x16xf32>
    %166 = arith.mulf %165, %165 : vector<16x16xf32>
    %cst_52 = arith.constant dense<0.000000e+00> : vector<16xf32>
    %167 = vector.multi_reduction <add>, %166, %cst_52 [1] : vector<16x16xf32> to vector<16xf32>
    %168 = vector.shape_cast %167 : vector<16xf32> to vector<16x1xf32>
    %cst_53 = arith.constant 1.600000e+01 : f32
    %169 = vector.broadcast %cst_53 : f32 to vector<16x1xf32>
    %170 = arith.divf %168, %169 : vector<16x1xf32>
    %171 = vector.broadcast %163 : vector<16x1xf32> to vector<16x16xf32>
    %172 = arith.subf %159, %171 : vector<16x16xf32>
    %cst_54 = arith.constant 9.99999974E-6 : f32
    %173 = vector.broadcast %cst_54 : f32 to vector<16x1xf32>
    %174 = arith.addf %170, %173 : vector<16x1xf32>
    %175 = math.rsqrt %174 : vector<16x1xf32>
    %176 = vector.broadcast %175 : vector<16x1xf32> to vector<16x16xf32>
    %177 = arith.mulf %172, %176 : vector<16x16xf32>
    %178 = vector.broadcast %13 : vector<1x16xf32> to vector<16x16xf32>
    %179 = arith.mulf %177, %178 : vector<16x16xf32>
    %180 = vector.broadcast %14 : vector<1x16xf32> to vector<16x16xf32>
    %181 = arith.addf %179, %180 : vector<16x16xf32>
    %cst_55 = arith.constant 0.000000e+00 : f32
    %182 = vector.broadcast %cst_55 : f32 to vector<16x16xf32>
    %183 = arith.maximumf %181, %182 : vector<16x16xf32>
    %cst_56 = arith.constant dense<0xFF800000> : vector<16xf32>
    %184 = vector.multi_reduction <maximumf>, %183, %cst_56 [1] : vector<16x16xf32> to vector<16xf32>
    %185 = vector.shape_cast %184 : vector<16xf32> to vector<16x1xf32>
    %186 = vector.broadcast %185 : vector<16x1xf32> to vector<16x16xf32>
    %187 = arith.subf %183, %186 : vector<16x16xf32>
    %188 = math.exp %187 : vector<16x16xf32>
    %cst_57 = arith.constant dense<0.000000e+00> : vector<16xf32>
    %189 = vector.multi_reduction <add>, %188, %cst_57 [1] : vector<16x16xf32> to vector<16xf32>
    %190 = vector.shape_cast %189 : vector<16xf32> to vector<16x1xf32>
    %191 = tpu.reciprocal %190 {approx = true} : vector<16x1xf32> -> vector<16x1xf32>
    %192 = vector.broadcast %191 : vector<16x1xf32> to vector<16x16xf32>
    %193 = arith.mulf %188, %192 : vector<16x16xf32>
    %194 = vector.shape_cast %193 : vector<16x16xf32> to vector<1x16x16xf32>
    %c0_58 = arith.constant 0 : index
    %c0_59 = arith.constant 0 : index
    %c0_60 = arith.constant 0 : index
    %195 = vector.load %arg10[%c0_58, %c0_59, %c0_60] : memref<1x16x16xf32, #tpu.memory_space<vmem>>, vector<1x16x16xf32>
    tpu.vector_store %arg10[%c0_58, %c0_59, %c0_60], %194 {strides = array<i32>} : memref<1x16x16xf32, #tpu.memory_space<vmem>>, vector<1x16x16xf32>,
    return
  }
  func.func @transform_0(%arg0: i32) -> (i32, i32, i32) {
    %c0_i32 = arith.constant 0 : i32
    %c0_i32_0 = arith.constant 0 : i32
    %c0_i32_1 = arith.constant 0 : i32
    return %arg0, %c0_i32, %c0_i32_0 : i32, i32, i32
  }
  func.func @transform_1(%arg0: i32) -> (i32, i32) {
    %c0_i32 = arith.constant 0 : i32
    %c0_i32_0 = arith.constant 0 : i32
    %c0_i32_1 = arith.constant 0 : i32
    return %c0_i32, %c0_i32_0 : i32, i32
  }
  func.func @transform_2(%arg0: i32) -> (i32, i32) {
    %c0_i32 = arith.constant 0 : i32
    %c0_i32_0 = arith.constant 0 : i32
    %c0_i32_1 = arith.constant 0 : i32
    return %c0_i32, %c0_i32_0 : i32, i32
  }
  func.func @transform_3(%arg0: i32) -> (i32, i32) {
    %c0_i32 = arith.constant 0 : i32
    %c0_i32_0 = arith.constant 0 : i32
    %c0_i32_1 = arith.constant 0 : i32
    return %c0_i32, %c0_i32_0 : i32, i32
  }
  func.func @transform_4(%arg0: i32) -> (i32, i32) {
    %c0_i32 = arith.constant 0 : i32
    %c0_i32_0 = arith.constant 0 : i32
    %c0_i32_1 = arith.constant 0 : i32
    return %c0_i32, %c0_i32_0 : i32, i32
  }
  func.func @transform_5(%arg0: i32) -> (i32, i32) {
    %c0_i32 = arith.constant 0 : i32
    %c0_i32_0 = arith.constant 0 : i32
    %c0_i32_1 = arith.constant 0 : i32
    return %c0_i32, %c0_i32_0 : i32, i32
  }
  func.func @transform_6(%arg0: i32) -> (i32, i32) {
    %c0_i32 = arith.constant 0 : i32
    %c0_i32_0 = arith.constant 0 : i32
    %c0_i32_1 = arith.constant 0 : i32
    return %c0_i32, %c0_i32_0 : i32, i32
  }
  func.func @transform_7(%arg0: i32) -> (i32, i32) {
    %c0_i32 = arith.constant 0 : i32
    %c0_i32_0 = arith.constant 0 : i32
    %c0_i32_1 = arith.constant 0 : i32
    return %c0_i32, %c0_i32_0 : i32, i32
  }
  func.func @transform_8(%arg0: i32) -> (i32, i32) {
    %c0_i32 = arith.constant 0 : i32
    %c0_i32_0 = arith.constant 0 : i32
    %c0_i32_1 = arith.constant 0 : i32
    return %c0_i32, %c0_i32_0 : i32, i32
  }
  func.func @transform_9(%arg0: i32) -> (i32, i32, i32) {
    %c0_i32 = arith.constant 0 : i32
    %c0_i32_0 = arith.constant 0 : i32
    %c0_i32_1 = arith.constant 0 : i32
    return %arg0, %c0_i32, %c0_i32_0 : i32, i32, i32
  }
}

</mosaic_0001>

<llo_original>
// kernel: tpu_custom_call.1
$region0: #{tpu_custom_call.1}
  #allocation0 [shape = 'u32[]', space=smem, size = 0x4, offset = 0x4, fixed_abs, tag = 'smem constant byte address 0x4 - core index']
  #allocation1 [shape = 'u32[144,128]{1,0:T(1,128)}', space=vmem, size = 0x12000, scoped, tag = 'internal scratch']
  %s0 = inlined_call_operand.vmem [shape: f32[2,16,8], index: 0, kind: input, shape index: {}]
  %s1 = inlined_call_operand.hbm [shape: f32[8,32], index: 1, kind: input, shape index: {}]
  %s2 = inlined_call_operand.hbm [shape: f32[5,32], index: 2, kind: input, shape index: {}]
  %s3 = inlined_call_operand.vmem [shape: f32[16,32], index: 3, kind: input, shape index: {}]
  %s4 = inlined_call_operand.vmem [shape: f32[32,32], index: 4, kind: input, shape index: {}]
  %s5 = inlined_call_operand.vmem [shape: f32[1,32], index: 5, kind: input, shape index: {}]
  %s6 = inlined_call_operand.vmem [shape: f32[8,16], index: 6, kind: input, shape index: {}]
  %s7 = inlined_call_operand.hbm [shape: f32[16,16], index: 7, kind: input, shape index: {}]
  %s8 = inlined_call_operand.hbm [shape: f32[16,16], index: 8, kind: input, shape index: {}]
  %s9 = inlined_call_operand.hbm [shape: f32[2,16,16], index: 9, kind: output, shape index: {}]
  %s10 = sld [smem:[#allocation0]]
  $region85: #{tpu_custom_call.1} parent=0
    _
  %s12 = ssub.s32 1, %s10
  %s13 = scalar_select 0, %s12, %s10
  $region1: #{tpu_custom_call.1} parent=0
    #allocation2 [shape = 'u8[4096]{0}', space=vmem, size = 0x1000, scoped, tag = 'input window, operand 1, single buffered']
    #allocation3 [shape = 's32[2]{0}', space=sflag, size = 0x8, scoped, tag = 'scoped memory for tpu_custom_call.1']
    #allocation4 [shape = 's32[2]{0}', space=sflag, size = 0x8, scoped, tag = 'scoped memory for tpu_custom_call.1']
    #allocation5 [shape = 'u8[4096]{0}', space=vmem, size = 0x1000, scoped, tag = 'input window, operand 2, single buffered']
    #allocation6 [shape = 's32[1]{0}', space=sflag, size = 0x4, scoped, tag = 'scoped memory for tpu_custom_call.1']
    #allocation7 [shape = 'u8[8192]{0}', space=vmem, size = 0x2000, scoped, tag = 'input window, operand 7, single buffered']
    #allocation8 [shape = 'u8[8192]{0}', space=vmem, size = 0x2000, scoped, tag = 'input window, operand 8, single buffered']
    #allocation9 [shape = 's32[1]{0}', space=sflag, size = 0x4, scoped, tag = 'scoped memory for tpu_custom_call.1']
    #allocation10 [shape = 'u8[16384]{0}', space=vmem, size = 0x4000, scoped, tag = 'output window, operand 0']
    %14 = vsyncpa [#allocation3], 0
    %15 = vsyncpa [#allocation6], 0
    %16 = vsyncpa [#allocation9], 0
    %17 = vsyncpa [#allocation4], 0
    %s18 = scalar_lea.sflag [#allocation4], 1
    %19 = vsyncpa %s18, 0
    loop: start=0, step=1, limit=4
    $region2: #{tpu_custom_call.1} parent=1 // loop_pre_header
      _
    $region3: #{tpu_custom_call.1} parent=1 // loop_header
      %s21 = sphi 0, %s25
      %p22 = scmp.ge.s32.totalorder %s21, 4
      %s31 = sphi 0, %s33
      %s34 = sphi 0, %s31
      %s35 = sphi 0, %s34
      %s51 = sphi 0, %s35
      %s55 = sphi 0, %s55
      %s57 = sphi 0, %s55
      %s58 = sphi 0, %s57
      %s72 = sphi 0, %s58
      %s76 = sphi 0, %s76
      %s78 = sphi 0, %s76
      %s79 = sphi 0, %s78
      %s93 = sphi 0, %s79
      %s97 = sphi 0, %s97
      %s99 = sphi 0, %s97
      %s100 = sphi 0, %s99
      %s114 = sphi 0, %s100
      %s118 = sphi 0, %s118
      %s120 = sphi 0, %s118
      %s121 = sphi 0, %s120
      %s135 = sphi 0, %s121
      %s139 = sphi 0, %s139
      %s141 = sphi 0, %s139
      %s142 = sphi 0, %s141
      %s156 = sphi 0, %s142
      %s160 = sphi 0, %s160
      %s162 = sphi 0, %s160
      %s163 = sphi 0, %s162
      %s177 = sphi 0, %s163
      %s181 = sphi 0, %s181
      %s183 = sphi 0, %s181
      %s184 = sphi 0, %s183
      %s198 = sphi 0, %s184
      %s202 = sphi 0, %s202
      %s204 = sphi 0, %s202
      %s205 = sphi 0, %s204
      %s219 = sphi 0, %s205
      %s225 = sphi 0, %s227
      %s228 = sphi 0, %s225
      %s229 = sphi 0, %s228
      %s245 = sphi 0, %s229
    $region4: #{tpu_custom_call.1} parent=1 // loop_header_branch
      %24 = sbr.rel (%p22) target = $region8
    $region5: #{tpu_custom_call.1} parent=1 // loop_body
      %s26 = ssub.s32 %s21, 1
      %s27 = ssub.s32 %s21, 2
      %s28 = sadd.s32 %s21, 1
      %s29 = ssub.s32 %s21, %s28
      %p30 = scmp.eq.s32.totalorder %s29, 0
      %s32 = sadd.s32 %s31, 1
      %s33 = scalar_select %p30, %s31, %s32
      %p36 = pneg %p30
      %p37 = scmp.eq.s32.totalorder %s21, 1
      %p38 = por %p36, %p37
      %p39 = scmp.ne.s32.totalorder %s31, %s34
      %p40 = scmp.eq.s32.totalorder %s21, 0
      %p41 = por %p39, %p40
      %p42 = scmp.ne.s32.totalorder %s31, %s34
      %p43 = scmp.eq.s32.totalorder %s26, 1
      %p44 = por %p42, %p43
      %p45 = scmp.ne.s32.totalorder %s34, %s35
      %p46 = scmp.eq.s32.totalorder %s26, 0
      %p47 = por %p45, %p46
      %p48 = scmp.ne.s32.totalorder %s34, %s35
      %p49 = scmp.eq.s32.totalorder %s27, 1
      %p50 = por %p48, %p49
      %p52 = scmp.ne.s32.totalorder %s35, %s51
      %p53 = scmp.eq.s32.totalorder %s27, 0
      %p54 = por %p52, %p53
      %s56 = sadd.s32 %s55, 1
      %p59 = scmp.eq.s32.totalorder %s21, 1
      %p60 = scmp.ne.s32.totalorder %s55, %s57
      %p61 = scmp.eq.s32.totalorder %s21, 0
      %p62 = por %p60, %p61
      %p63 = scmp.ne.s32.totalorder %s55, %s57
      %p64 = scmp.eq.s32.totalorder %s26, 1
      %p65 = por %p63, %p64
      %p66 = scmp.ne.s32.totalorder %s57, %s58
      %p67 = scmp.eq.s32.totalorder %s26, 0
      %p68 = por %p66, %p67
      %p69 = scmp.ne.s32.totalorder %s57, %s58
      %p70 = scmp.eq.s32.totalorder %s27, 1
      %p71 = por %p69, %p70
      %p73 = scmp.ne.s32.totalorder %s58, %s72
      %p74 = scmp.eq.s32.totalorder %s27, 0
      %p75 = por %p73, %p74
      %s77 = sadd.s32 %s76, 1
      %p80 = scmp.eq.s32.totalorder %s21, 1
      %p81 = scmp.ne.s32.totalorder %s76, %s78
      %p82 = scmp.eq.s32.totalorder %s21, 0
      %p83 = por %p81, %p82
      %p84 = scmp.ne.s32.totalorder %s76, %s78
      %p85 = scmp.eq.s32.totalorder %s26, 1
      %p86 = por %p84, %p85
      %p87 = scmp.ne.s32.totalorder %s78, %s79
      %p88 = scmp.eq.s32.totalorder %s26, 0
      %p89 = por %p87, %p88
      %p90 = scmp.ne.s32.totalorder %s78, %s79
      %p91 = scmp.eq.s32.totalorder %s27, 1
      %p92 = por %p90, %p91
      %p94 = scmp.ne.s32.totalorder %s79, %s93
      %p95 = scmp.eq.s32.totalorder %s27, 0
      %p96 = por %p94, %p95
      %s98 = sadd.s32 %s97, 1
      %p101 = scmp.eq.s32.totalorder %s21, 1
      %p102 = scmp.ne.s32.totalorder %s97, %s99
      %p103 = scmp.eq.s32.totalorder %s21, 0
      %p104 = por %p102, %p103
      %p105 = scmp.ne.s32.totalorder %s97, %s99
      %p106 = scmp.eq.s32.totalorder %s26, 1
      %p107 = por %p105, %p106
      %p108 = scmp.ne.s32.totalorder %s99, %s100
      %p109 = scmp.eq.s32.totalorder %s26, 0
      %p110 = por %p108, %p109
      %p111 = scmp.ne.s32.totalorder %s99, %s100
      %p112 = scmp.eq.s32.totalorder %s27, 1
      %p113 = por %p111, %p112
      %p115 = scmp.ne.s32.totalorder %s100, %s114
      %p116 = scmp.eq.s32.totalorder %s27, 0
      %p117 = por %p115, %p116
      %s119 = sadd.s32 %s118, 1
      %p122 = scmp.eq.s32.totalorder %s21, 1
      %p123 = scmp.ne.s32.totalorder %s118, %s120
      %p124 = scmp.eq.s32.totalorder %s21, 0
      %p125 = por %p123, %p124
      %p126 = scmp.ne.s32.totalorder %s118, %s120
      %p127 = scmp.eq.s32.totalorder %s26, 1
      %p128 = por %p126, %p127
      %p129 = scmp.ne.s32.totalorder %s120, %s121
      %p130 = scmp.eq.s32.totalorder %s26, 0
      %p131 = por %p129, %p130
      %p132 = scmp.ne.s32.totalorder %s120, %s121
      %p133 = scmp.eq.s32.totalorder %s27, 1
      %p134 = por %p132, %p133
      %p136 = scmp.ne.s32.totalorder %s121, %s135
      %p137 = scmp.eq.s32.totalorder %s27, 0
      %p138 = por %p136, %p137
      %s140 = sadd.s32 %s139, 1
      %p143 = scmp.eq.s32.totalorder %s21, 1
      %p144 = scmp.ne.s32.totalorder %s139, %s141
      %p145 = scmp.eq.s32.totalorder %s21, 0
      %p146 = por %p144, %p145
      %p147 = scmp.ne.s32.totalorder %s139, %s141
      %p148 = scmp.eq.s32.totalorder %s26, 1
      %p149 = por %p147, %p148
      %p150 = scmp.ne.s32.totalorder %s141, %s142
      %p151 = scmp.eq.s32.totalorder %s26, 0
      %p152 = por %p150, %p151
      %p153 = scmp.ne.s32.totalorder %s141, %s142
      %p154 = scmp.eq.s32.totalorder %s27, 1
      %p155 = por %p153, %p154
      %p157 = scmp.ne.s32.totalorder %s142, %s156
      %p158 = scmp.eq.s32.totalorder %s27, 0
      %p159 = por %p157, %p158
      %s161 = sadd.s32 %s160, 1
      %p164 = scmp.eq.s32.totalorder %s21, 1
      %p165 = scmp.ne.s32.totalorder %s160, %s162
      %p166 = scmp.eq.s32.totalorder %s21, 0
      %p167 = por %p165, %p166
      %p168 = scmp.ne.s32.totalorder %s160, %s162
      %p169 = scmp.eq.s32.totalorder %s26, 1
      %p170 = por %p168, %p169
      %p171 = scmp.ne.s32.totalorder %s162, %s163
      %p172 = scmp.eq.s32.totalorder %s26, 0
      %p173 = por %p171, %p172
      %p174 = scmp.ne.s32.totalorder %s162, %s163
      %p175 = scmp.eq.s32.totalorder %s27, 1
      %p176 = por %p174, %p175
      %p178 = scmp.ne.s32.totalorder %s163, %s177
      %p179 = scmp.eq.s32.totalorder %s27, 0
      %p180 = por %p178, %p179
      %s182 = sadd.s32 %s181, 1
      %p185 = scmp.eq.s32.totalorder %s21, 1
      %p186 = scmp.ne.s32.totalorder %s181, %s183
      %p187 = scmp.eq.s32.totalorder %s21, 0
      %p188 = por %p186, %p187
      %p189 = scmp.ne.s32.totalorder %s181, %s183
      %p190 = scmp.eq.s32.totalorder %s26, 1
      %p191 = por %p189, %p190
      %p192 = scmp.ne.s32.totalorder %s183, %s184
      %p193 = scmp.eq.s32.totalorder %s26, 0
      %p194 = por %p192, %p193
      %p195 = scmp.ne.s32.totalorder %s183, %s184
      %p196 = scmp.eq.s32.totalorder %s27, 1
      %p197 = por %p195, %p196
      %p199 = scmp.ne.s32.totalorder %s184, %s198
      %p200 = scmp.eq.s32.totalorder %s27, 0
      %p201 = por %p199, %p200
      %s203 = sadd.s32 %s202, 1
      %p206 = scmp.eq.s32.totalorder %s21, 1
      %p207 = scmp.ne.s32.totalorder %s202, %s204
      %p208 = scmp.eq.s32.totalorder %s21, 0
      %p209 = por %p207, %p208
      %p210 = scmp.ne.s32.totalorder %s202, %s204
      %p211 = scmp.eq.s32.totalorder %s26, 1
      %p212 = por %p210, %p211
      %p213 = scmp.ne.s32.totalorder %s204, %s205
      %p214 = scmp.eq.s32.totalorder %s26, 0
      %p215 = por %p213, %p214
      %p216 = scmp.ne.s32.totalorder %s204, %s205
      %p217 = scmp.eq.s32.totalorder %s27, 1
      %p218 = por %p216, %p217
      %p220 = scmp.ne.s32.totalorder %s205, %s219
      %p221 = scmp.eq.s32.totalorder %s27, 0
      %p222 = por %p220, %p221
      %s223 = ssub.s32 %s21, %s28
      %p224 = scmp.eq.s32.totalorder %s223, 0
      %s226 = sadd.s32 %s225, 1
      %s227 = scalar_select %p224, %s225, %s226
      %p230 = pneg %p224
      %p231 = scmp.eq.s32.totalorder %s21, 1
      %p232 = por %p230, %p231
      %p233 = scmp.ne.s32.totalorder %s225, %s228
      %p234 = scmp.eq.s32.totalorder %s21, 0
      %p235 = por %p233, %p234
      %p236 = scmp.ne.s32.totalorder %s225, %s228
      %p237 = scmp.eq.s32.totalorder %s26, 1
      %p238 = por %p236, %p237
      %p239 = scmp.ne.s32.totalorder %s228, %s229
      %p240 = scmp.eq.s32.totalorder %s26, 0
      %p241 = por %p239, %p240
      %p242 = scmp.ne.s32.totalorder %s228, %s229
      %p243 = scmp.eq.s32.totalorder %s27, 1
      %p244 = por %p242, %p243
      %p246 = scmp.ne.s32.totalorder %s229, %s245
      %p247 = scmp.eq.s32.totalorder %s27, 0
      %p248 = por %p246, %p247
      %p249 = scmp.le.s32.totalorder 1, %s21
      %p250 = scmp.lt.s32.totalorder %s21, 3
      %p251 = pnand %p249, %p250
      %p252 = pneg %p251
      // Predicated region
      $region9: #{tpu_custom_call.1} parent=5 // pred_check
        _
      $region10: #{tpu_custom_call.1} parent=5 // pred_check_branch
        %254 = sbr.rel (%p251) target = $region12
      $region11: #{tpu_custom_call.1} parent=5 // pred_region
        %s255 = ssub.s32 %s21, 1
        // Predicated region
        $region13: #{tpu_custom_call.1} parent=11 // pred_check
          %p256 = pneg %p68
        $region14: #{tpu_custom_call.1} parent=11 // pred_check_branch
          %258 = sbr.rel (%p256) target = $region16
        $region15: #{tpu_custom_call.1} parent=11 // pred_region
          %s260 = ssub.s32 128, 128
          %261 = vsyncadd [#allocation3], %s260
          %s263 = sshll.u32 [#allocation2], 4
          %s264 = int_to_ptr.vmem [resolvable:$true] %s263
          %266 = dma.hbm_to_vmem [thread:$0]  %s1, 128, %s264, [#allocation3]
        $region16: #{tpu_custom_call.1} parent=11 // pred_fallthru
          _
        // Predicated region
        $region17: #{tpu_custom_call.1} parent=11 // pred_check
          %p267 = pneg %p89
        $region18: #{tpu_custom_call.1} parent=11 // pred_check_branch
          %269 = sbr.rel (%p267) target = $region20
        $region19: #{tpu_custom_call.1} parent=11 // pred_region
          %s271 = ssub.s32 128, 128
          %272 = vsyncadd [#allocation6], %s271
          %s274 = sshll.u32 [#allocation5], 4
          %s275 = int_to_ptr.vmem [resolvable:$true] %s274
          %277 = dma.hbm_to_vmem [thread:$0]  %s2, 128, %s275, [#allocation6]
        $region20: #{tpu_custom_call.1} parent=11 // pred_fallthru
          _
        // Predicated region
        $region21: #{tpu_custom_call.1} parent=11 // pred_check
          %p278 = pneg %p110
        $region22: #{tpu_custom_call.1} parent=11 // pred_check_branch
          %280 = sbr.rel (%p278) target = $region24
        $region23: #{tpu_custom_call.1} parent=11 // pred_region
          _
        $region24: #{tpu_custom_call.1} parent=11 // pred_fallthru
          _
        // Predicated region
        $region25: #{tpu_custom_call.1} parent=11 // pred_check
          %p281 = pneg %p131
        $region26: #{tpu_custom_call.1} parent=11 // pred_check_branch
          %283 = sbr.rel (%p281) target = $region28
        $region27: #{tpu_custom_call.1} parent=11 // pred_region
          _
        $region28: #{tpu_custom_call.1} parent=11 // pred_fallthru
          _
        // Predicated region
        $region29: #{tpu_custom_call.1} parent=11 // pred_check
          %p284 = pneg %p152
        $region30: #{tpu_custom_call.1} parent=11 // pred_check_branch
          %286 = sbr.rel (%p284) target = $region32
        $region31: #{tpu_custom_call.1} parent=11 // pred_region
          _
        $region32: #{tpu_custom_call.1} parent=11 // pred_fallthru
          _
        // Predicated region
        $region33: #{tpu_custom_call.1} parent=11 // pred_check
          %p287 = pneg %p173
        $region34: #{tpu_custom_call.1} parent=11 // pred_check_branch
          %289 = sbr.rel (%p287) target = $region36
        $region35: #{tpu_custom_call.1} parent=11 // pred_region
          _
        $region36: #{tpu_custom_call.1} parent=11 // pred_fallthru
          _
        // Predicated region
        $region37: #{tpu_custom_call.1} parent=11 // pred_check
          %p290 = pneg %p194
        $region38: #{tpu_custom_call.1} parent=11 // pred_check_branch
          %292 = sbr.rel (%p290) target = $region40
        $region39: #{tpu_custom_call.1} parent=11 // pred_region
          %s294 = ssub.s32 256, 256
          %295 = vsyncadd [#allocation6], %s294
          %s296 = sshll.u32 [#allocation7], 4
          %s297 = int_to_ptr.vmem [resolvable:$true] %s296
          %302 = dma.hbm_to_vmem [thread:$0]  %s7, 256, %s297, [#allocation6], 128, 128, 8
        $region40: #{tpu_custom_call.1} parent=11 // pred_fallthru
          _
        // Predicated region
        $region41: #{tpu_custom_call.1} parent=11 // pred_check
          %p303 = pneg %p215
        $region42: #{tpu_custom_call.1} parent=11 // pred_check_branch
          %305 = sbr.rel (%p303) target = $region44
        $region43: #{tpu_custom_call.1} parent=11 // pred_region
          %s307 = ssub.s32 256, 256
          %308 = vsyncadd [#allocation9], %s307
          %s309 = sshll.u32 [#allocation8], 4
          %s310 = int_to_ptr.vmem [resolvable:$true] %s309
          %315 = dma.hbm_to_vmem [thread:$0]  %s8, 256, %s310, [#allocation9], 128, 128, 8
        $region44: #{tpu_custom_call.1} parent=11 // pred_fallthru
          _
      $region12: #{tpu_custom_call.1} parent=5 // pred_fallthru
        _
      %p316 = scmp.lt.s32.totalorder %s21, 2
      // Predicated region
      $region45: #{tpu_custom_call.1} parent=5 // pred_check
        %p317 = pneg %p316
      $region46: #{tpu_custom_call.1} parent=5 // pred_check_branch
        %319 = sbr.rel (%p317) target = $region48
      $region47: #{tpu_custom_call.1} parent=5 // pred_region
        // Predicated region
        $region49: #{tpu_custom_call.1} parent=47 // pred_check
          %p320 = pneg %p41
        $region50: #{tpu_custom_call.1} parent=47 // pred_check_branch
          %322 = sbr.rel (%p320) target = $region52
        $region51: #{tpu_custom_call.1} parent=47 // pred_region
          %p323 = scmp.lt.s32.totalorder %s21, 1
          %s324 = scalar_select %p323, %s21, 1
          %s325 = smul.addr %s324, 2
          %s326 = smul.addr %s325, 8
          %s327 = scalar_lea.vmem %s0, %s326
        $region52: #{tpu_custom_call.1} parent=47 // pred_fallthru
          _
      $region48: #{tpu_custom_call.1} parent=5 // pred_fallthru
        _
      %p328 = scmp.le.s32.totalorder 1, %s21
      %p329 = scmp.lt.s32.totalorder %s21, 3
      %p330 = pnand %p328, %p329
      %p331 = pneg %p330
      // Predicated region
      $region53: #{tpu_custom_call.1} parent=5 // pred_check
        _
      $region54: #{tpu_custom_call.1} parent=5 // pred_check_branch
        %333 = sbr.rel (%p330) target = $region56
      $region55: #{tpu_custom_call.1} parent=5 // pred_region
        %s334 = ssub.s32 %s21, 1
        // Predicated region
        $region57: #{tpu_custom_call.1} parent=55 // pred_check
          %p335 = pneg %p68
        $region58: #{tpu_custom_call.1} parent=55 // pred_check_branch
          %337 = sbr.rel (%p335) target = $region60
        $region59: #{tpu_custom_call.1} parent=55 // pred_region
          %338 = dma.done [#allocation3], 128
        $region60: #{tpu_custom_call.1} parent=55 // pred_fallthru
          _
        // Predicated region
        $region61: #{tpu_custom_call.1} parent=55 // pred_check
          %p339 = pneg %p89
        $region62: #{tpu_custom_call.1} parent=55 // pred_check_branch
          %341 = sbr.rel (%p339) target = $region64
        $region63: #{tpu_custom_call.1} parent=55 // pred_region
          %342 = dma.done [#allocation6], 128
        $region64: #{tpu_custom_call.1} parent=55 // pred_fallthru
          _
        // Predicated region
        $region65: #{tpu_custom_call.1} parent=55 // pred_check
          %p343 = pneg %p194
        $region66: #{tpu_custom_call.1} parent=55 // pred_check_branch
          %345 = sbr.rel (%p343) target = $region68
        $region67: #{tpu_custom_call.1} parent=55 // pred_region
          %346 = dma.done [#allocation6], 256
        $region68: #{tpu_custom_call.1} parent=55 // pred_fallthru
          _
        // Predicated region
        $region69: #{tpu_custom_call.1} parent=55 // pred_check
          %p347 = pneg %p215
        $region70: #{tpu_custom_call.1} parent=55 // pred_check_branch
          %349 = sbr.rel (%p347) target = $region72
        $region71: #{tpu_custom_call.1} parent=55 // pred_region
          %350 = dma.done [#allocation9], 256
        $region72: #{tpu_custom_call.1} parent=55 // pred_fallthru
          _
        %p351 = scmp.lt.s32.totalorder %s26, 1
        %s352 = scalar_select %p351, %s26, 1
        %s353 = smul.addr %s352, 2
        %s354 = smul.addr %s353, 8
        %s355 = scalar_lea.vmem %s0, %s354
        %p356 = pneg %p47
        %p357 = pneg %p44
        %p358 = pneg %p68
        %p359 = pneg %p65
        %p360 = pneg %p89
        %p361 = pneg %p86
        %p362 = pneg %p110
        %p363 = pneg %p107
        %p364 = pneg %p131
        %p365 = pneg %p128
        %p366 = pneg %p152
        %p367 = pneg %p149
        %p368 = pneg %p173
        %p369 = pneg %p170
        %p370 = pneg %p194
        %p371 = pneg %p191
        %p372 = pneg %p215
        %p373 = pneg %p212
        %p374 = pneg %p241
        %p375 = pneg %p238
        %s376 = sand.u32 %s228, 1
        %s377 = scalar_lea.sflag [#allocation4], %s376
        %s378 = sand.u32 %s228, 1
        %s379 = smul.addr %s378, 16
        %s380 = scalar_lea.vmem [#allocation10], %s379
        %p381 = scmp.lt.s32.totalorder %s26, 1
        %s382 = scalar_select %p381, %s26, 1
        %s383 = smul.addr %s382, 2
        %s384 = smul.addr %s383, 8
        %s385 = scalar_lea.vmem %s0, %s384
        %v386 = vld [vmem:[#allocation5] sm:$0x1f]
        %v387 = vld [vmem:[%s6] sm:$0xff]
        %v388 = vld [vmem:[%s385] sm:$0xff]
        %v389 = vld [vmem:[%s385 + $0x8] sm:$0xff]
        %v390 = vld [vmem:[#allocation2] sm:$0xff]
        %v391 = vlaneseq
        %v392 = vshrl.u32 %v391, 7
        %v393 = vsub.s32 0, %v392
        %v394 = vrot.slane %v386, %v393
        %vm395 = vcmask 64512
        %v397 = vsel %vm395, %v388, 0
        %v400 = vsel %vm395, %v389, 0
        %402 = vmatprep.subr.mxu0 0.0
        %403 = vmatpush1.msra.mxu0 0.0
        %404 = vmatprep.subr.mxu0 0.0
        %405 = vmatpush1.msra.mxu0 0.0
        %406 = vmatprep.subr.mxu0 0.0
        %407 = vmatpush1.msra.mxu0 0.0
        %408 = vmatprep.subr.mxu0 0.0
        %409 = vmatpush1.msra.mxu0 0.0
        %410 = vmatprep.subr.mxu0 0.0
        %411 = vmatpush1.msra.mxu0 0.0
        %412 = vmatprep.subr.mxu0 0.0
        %413 = vmatpush1.msra.mxu0 0.0
        %414 = vmatprep.subr.mxu0 0.0
        %415 = vmatpush1.msra.mxu0 0.0
        %416 = vmatprep.subr.mxu0 0.0
        %417 = vmatpush1.msra.mxu0 0.0
        %418 = vmatprep.subr.mxu0 0.0
        %419 = vmatpush1.msra.mxu0 0.0
        %420 = vmatprep.subr.mxu0 0.0
        %421 = vmatpush1.msra.mxu0 0.0
        %422 = vmatprep.subr.mxu0 0.0
        %423 = vmatpush1.msra.mxu0 0.0
        %424 = vmatprep.subr.mxu0 0.0
        %425 = vmatpush1.msra.mxu0 0.0
        %426 = vmatprep.subr.mxu0 0.0
        %427 = vmatpush1.msra.mxu0 0.0
        %428 = vmatprep.subr.mxu0 0.0
        %429 = vmatpush1.msra.mxu0 0.0
        %430 = vmatprep.subr.mxu0 0.0
        %431 = vmatpush1.msra.mxu0 0.0
        %432 = vmatprep.subr.mxu0 0.0
        %v433 = vand.u32 %v390, 4294901760
        %434 = vmatpush1.msra.mxu0 %v433
        %435 = vmatprep.subr.mxu0 0.0
        %436 = vmatpush2.msra.mxu0 0.0
        %437 = vmatprep.subr.mxu0 0.0
        %438 = vmatpush2.msra.mxu0 0.0
        %439 = vmatprep.subr.mxu0 0.0
        %440 = vmatpush2.msra.mxu0 0.0
        %441 = vmatprep.subr.mxu0 0.0
        %442 = vmatpush2.msra.mxu0 0.0
        %443 = vmatprep.subr.mxu0 0.0
        %444 = vmatpush2.msra.mxu0 0.0
        %445 = vmatprep.subr.mxu0 0.0
        %446 = vmatpush2.msra.mxu0 0.0
        %447 = vmatprep.subr.mxu0 0.0
        %448 = vmatpush2.msra.mxu0 0.0
        %449 = vmatprep.subr.mxu0 0.0
        %450 = vmatpush2.msra.mxu0 0.0
        %451 = vmatprep.subr.mxu0 0.0
        %452 = vmatpush2.msra.mxu0 0.0
        %453 = vmatprep.subr.mxu0 0.0
        %454 = vmatpush2.msra.mxu0 0.0
        %455 = vmatprep.subr.mxu0 0.0
        %456 = vmatpush2.msra.mxu0 0.0
        %457 = vmatprep.subr.mxu0 0.0
        %458 = vmatpush2.msra.mxu0 0.0
        %459 = vmatprep.subr.mxu0 0.0
        %460 = vmatpush2.msra.mxu0 0.0
        %461 = vmatprep.subr.mxu0 0.0
        %462 = vmatpush2.msra.mxu0 0.0
        %463 = vmatprep.subr.mxu0 0.0
        %464 = vmatpush2.msra.mxu0 0.0
        %465 = vmatprep.subr.mxu0 0.0
        %466 = vmatpush2.msra.mxu0 0.0
        %467 = vmatprep.mubr.f32.mxu0 0.0
        %v468 = vand.u32 %v397, 4294901760
        %v469 = vsub.f32 %v397, %v468
        %v470 = vand.u32 %v469, 4294901760
        %v471 = vsub.f32 %v469, %v470
        %v472 = vand.u32 %v471, 4294901760
        %473 = vmatmul.mubr.f32.gmra.mxu0 %v472
        %v474 = vpop.f32.mrf.mxu0
        %v475 = vadd.f32 %v394, %v474
        %v476 = vpop.f32.mrf.mxu0
        %477 = vmatprep.mubr.f32.mxu0 0.0
        %v478 = vand.u32 %v400, 4294901760
        %v479 = vsub.f32 %v400, %v478
        %v480 = vand.u32 %v479, 4294901760
        %v481 = vsub.f32 %v479, %v480
        %v482 = vand.u32 %v481, 4294901760
        %483 = vmatmul.mubr.f32.gmra.mxu0 %v482
        %v484 = vpop.f32.mrf.mxu0
        %v485 = vadd.f32 %v394, %v484
        %v486 = vpop.f32.mrf.mxu0
        %487 = vdwg.mxu0
        %488 = vmatprep.subr.mxu0 0.0
        %489 = vmatpush1.msra.mxu0 0.0
        %490 = vmatprep.subr.mxu0 0.0
        %491 = vmatpush1.msra.mxu0 0.0
        %492 = vmatprep.subr.mxu0 0.0
        %493 = vmatpush1.msra.mxu0 0.0
        %494 = vmatprep.subr.mxu0 0.0
        %495 = vmatpush1.msra.mxu0 0.0
        %496 = vmatprep.subr.mxu0 0.0
        %497 = vmatpush1.msra.mxu0 0.0
        %498 = vmatprep.subr.mxu0 0.0
        %499 = vmatpush1.msra.mxu0 0.0
        %500 = vmatprep.subr.mxu0 0.0
        %501 = vmatpush1.msra.mxu0 0.0
        %502 = vmatprep.subr.mxu0 0.0
        %503 = vmatpush1.msra.mxu0 0.0
        %504 = vmatprep.subr.mxu0 0.0
        %505 = vmatpush1.msra.mxu0 0.0
        %506 = vmatprep.subr.mxu0 0.0
        %507 = vmatpush1.msra.mxu0 0.0
        %508 = vmatprep.subr.mxu0 0.0
        %509 = vmatpush1.msra.mxu0 0.0
        %510 = vmatprep.subr.mxu0 0.0
        %511 = vmatpush1.msra.mxu0 0.0
        %512 = vmatprep.subr.mxu0 0.0
        %513 = vmatpush1.msra.mxu0 0.0
        %514 = vmatprep.subr.mxu0 0.0
        %515 = vmatpush1.msra.mxu0 0.0
        %516 = vmatprep.subr.mxu0 0.0
        %517 = vmatpush1.msra.mxu0 0.0
        %518 = vmatprep.subr.mxu0 0.0
        %v519 = vand.u32 %v390, 4294901760
        %v520 = vsub.f32 %v390, %v519
        %v521 = vand.u32 %v520, 4294901760
        %v522 = vsub.f32 %v520, %v521
        %v523 = vand.u32 %v522, 4294901760
        %524 = vmatpush1.msra.mxu0 %v523
        %525 = vmatprep.subr.mxu0 0.0
        %526 = vmatpush2.msra.mxu0 0.0
        %527 = vmatprep.subr.mxu0 0.0
        %528 = vmatpush2.msra.mxu0 0.0
        %529 = vmatprep.subr.mxu0 0.0
        %530 = vmatpush2.msra.mxu0 0.0
        %531 = vmatprep.subr.mxu0 0.0
        %532 = vmatpush2.msra.mxu0 0.0
        %533 = vmatprep.subr.mxu0 0.0
        %534 = vmatpush2.msra.mxu0 0.0
        %535 = vmatprep.subr.mxu0 0.0
        %536 = vmatpush2.msra.mxu0 0.0
        %537 = vmatprep.subr.mxu0 0.0
        %538 = vmatpush2.msra.mxu0 0.0
        %539 = vmatprep.subr.mxu0 0.0
        %540 = vmatpush2.msra.mxu0 0.0
        %541 = vmatprep.subr.mxu0 0.0
        %542 = vmatpush2.msra.mxu0 0.0
        %543 = vmatprep.subr.mxu0 0.0
        %544 = vmatpush2.msra.mxu0 0.0
        %545 = vmatprep.subr.mxu0 0.0
        %546 = vmatpush2.msra.mxu0 0.0
        %547 = vmatprep.subr.mxu0 0.0
        %548 = vmatpush2.msra.mxu0 0.0
        %549 = vmatprep.subr.mxu0 0.0
        %550 = vmatpush2.msra.mxu0 0.0
        %551 = vmatprep.subr.mxu0 0.0
        %552 = vmatpush2.msra.mxu0 0.0
        %553 = vmatprep.subr.mxu0 0.0
        %554 = vmatpush2.msra.mxu0 0.0
        %555 = vmatprep.subr.mxu0 0.0
        %556 = vmatpush2.msra.mxu0 0.0
        %557 = vmatprep.mubr.f32.mxu0 0.0
        %v558 = vand.u32 %v397, 4294901760
        %559 = vmatmul.mubr.f32.gmra.mxu0 %v558
        %v560 = vpop.f32.mrf.mxu0
        %v561 = vadd.f32 %v475, %v560
        %v562 = vpop.f32.mrf.mxu0
        %563 = vmatprep.mubr.f32.mxu0 0.0
        %v564 = vand.u32 %v400, 4294901760
        %565 = vmatmul.mubr.f32.gmra.mxu0 %v564
        %v566 = vpop.f32.mrf.mxu0
        %v567 = vadd.f32 %v485, %v566
        %v568 = vpop.f32.mrf.mxu0
        %569 = vdwg.mxu0
        %570 = vmatprep.subr.mxu0 0.0
        %571 = vmatpush1.msra.mxu0 0.0
        %572 = vmatprep.subr.mxu0 0.0
        %573 = vmatpush1.msra.mxu0 0.0
        %574 = vmatprep.subr.mxu0 0.0
        %575 = vmatpush1.msra.mxu0 0.0
        %576 = vmatprep.subr.mxu0 0.0
        %577 = vmatpush1.msra.mxu0 0.0
        %578 = vmatprep.subr.mxu0 0.0
        %579 = vmatpush1.msra.mxu0 0.0
        %580 = vmatprep.subr.mxu0 0.0
        %581 = vmatpush1.msra.mxu0 0.0
        %582 = vmatprep.subr.mxu0 0.0
        %583 = vmatpush1.msra.mxu0 0.0
        %584 = vmatprep.subr.mxu0 0.0
        %585 = vmatpush1.msra.mxu0 0.0
        %586 = vmatprep.subr.mxu0 0.0
        %587 = vmatpush1.msra.mxu0 0.0
        %588 = vmatprep.subr.mxu0 0.0
        %589 = vmatpush1.msra.mxu0 0.0
        %590 = vmatprep.subr.mxu0 0.0
        %591 = vmatpush1.msra.mxu0 0.0
        %592 = vmatprep.subr.mxu0 0.0
        %593 = vmatpush1.msra.mxu0 0.0
        %594 = vmatprep.subr.mxu0 0.0
        %595 = vmatpush1.msra.mxu0 0.0
        %596 = vmatprep.subr.mxu0 0.0
        %597 = vmatpush1.msra.mxu0 0.0
        %598 = vmatprep.subr.mxu0 0.0
        %599 = vmatpush1.msra.mxu0 0.0
        %600 = vmatprep.subr.mxu0 0.0
        %v601 = vand.u32 %v390, 4294901760
        %v602 = vsub.f32 %v390, %v601
        %603 = vmatpush1.msra.mxu0 %v602
        %604 = vmatprep.subr.mxu0 0.0
        %605 = vmatpush2.msra.mxu0 0.0
        %606 = vmatprep.subr.mxu0 0.0
        %607 = vmatpush2.msra.mxu0 0.0
        %608 = vmatprep.subr.mxu0 0.0
        %609 = vmatpush2.msra.mxu0 0.0
        %610 = vmatprep.subr.mxu0 0.0
        %611 = vmatpush2.msra.mxu0 0.0
        %612 = vmatprep.subr.mxu0 0.0
        %613 = vmatpush2.msra.mxu0 0.0
        %614 = vmatprep.subr.mxu0 0.0
        %615 = vmatpush2.msra.mxu0 0.0
        %616 = vmatprep.subr.mxu0 0.0
        %617 = vmatpush2.msra.mxu0 0.0
        %618 = vmatprep.subr.mxu0 0.0
        %619 = vmatpush2.msra.mxu0 0.0
        %620 = vmatprep.subr.mxu0 0.0
        %621 = vmatpush2.msra.mxu0 0.0
        %622 = vmatprep.subr.mxu0 0.0
        %623 = vmatpush2.msra.mxu0 0.0
        %624 = vmatprep.subr.mxu0 0.0
        %625 = vmatpush2.msra.mxu0 0.0
        %626 = vmatprep.subr.mxu0 0.0
        %627 = vmatpush2.msra.mxu0 0.0
        %628 = vmatprep.subr.mxu0 0.0
        %629 = vmatpush2.msra.mxu0 0.0
        %630 = vmatprep.subr.mxu0 0.0
        %631 = vmatpush2.msra.mxu0 0.0
        %632 = vmatprep.subr.mxu0 0.0
        %633 = vmatpush2.msra.mxu0 0.0
        %634 = vmatprep.subr.mxu0 0.0
        %635 = vmatpush2.msra.mxu0 0.0
        %636 = vmatprep.mubr.f32.mxu0 0.0
        %v637 = vand.u32 %v397, 4294901760
        %v638 = vsub.f32 %v397, %v637
        %639 = vmatmul.mubr.f32.gmra.mxu0 %v638
        %v640 = vpop.f32.mrf.mxu0
        %v641 = vadd.f32 %v561, %v640
        %v642 = vpop.f32.mrf.mxu0
        %643 = vmatprep.mubr.f32.mxu0 0.0
        %v644 = vand.u32 %v400, 4294901760
        %v645 = vsub.f32 %v400, %v644
        %646 = vmatmul.mubr.f32.gmra.mxu0 %v645
        %v647 = vpop.f32.mrf.mxu0
        %v648 = vadd.f32 %v567, %v647
        %v649 = vpop.f32.mrf.mxu0
        %650 = vdwg.mxu0
        %651 = vmatprep.subr.mxu0 0.0
        %652 = vmatpush1.msra.mxu0 0.0
        %653 = vmatprep.subr.mxu0 0.0
        %654 = vmatpush1.msra.mxu0 0.0
        %655 = vmatprep.subr.mxu0 0.0
        %656 = vmatpush1.msra.mxu0 0.0
        %657 = vmatprep.subr.mxu0 0.0
        %658 = vmatpush1.msra.mxu0 0.0
        %659 = vmatprep.subr.mxu0 0.0
        %660 = vmatpush1.msra.mxu0 0.0
        %661 = vmatprep.subr.mxu0 0.0
        %662 = vmatpush1.msra.mxu0 0.0
        %663 = vmatprep.subr.mxu0 0.0
        %664 = vmatpush1.msra.mxu0 0.0
        %665 = vmatprep.subr.mxu0 0.0
        %666 = vmatpush1.msra.mxu0 0.0
        %667 = vmatprep.subr.mxu0 0.0
        %668 = vmatpush1.msra.mxu0 0.0
        %669 = vmatprep.subr.mxu0 0.0
        %670 = vmatpush1.msra.mxu0 0.0
        %671 = vmatprep.subr.mxu0 0.0
        %672 = vmatpush1.msra.mxu0 0.0
        %673 = vmatprep.subr.mxu0 0.0
        %674 = vmatpush1.msra.mxu0 0.0
        %675 = vmatprep.subr.mxu0 0.0
        %676 = vmatpush1.msra.mxu0 0.0
        %677 = vmatprep.subr.mxu0 0.0
        %678 = vmatpush1.msra.mxu0 0.0
        %679 = vmatprep.subr.mxu0 0.0
        %680 = vmatpush1.msra.mxu0 0.0
        %681 = vmatprep.subr.mxu0 0.0
        %v682 = vand.u32 %v390, 4294901760
        %683 = vmatpush1.msra.mxu0 %v682
        %684 = vmatprep.subr.mxu0 0.0
        %685 = vmatpush2.msra.mxu0 0.0
        %686 = vmatprep.subr.mxu0 0.0
        %687 = vmatpush2.msra.mxu0 0.0
        %688 = vmatprep.subr.mxu0 0.0
        %689 = vmatpush2.msra.mxu0 0.0
        %690 = vmatprep.subr.mxu0 0.0
        %691 = vmatpush2.msra.mxu0 0.0
        %692 = vmatprep.subr.mxu0 0.0
        %693 = vmatpush2.msra.mxu0 0.0
        %694 = vmatprep.subr.mxu0 0.0
        %695 = vmatpush2.msra.mxu0 0.0
        %696 = vmatprep.subr.mxu0 0.0
        %697 = vmatpush2.msra.mxu0 0.0
        %698 = vmatprep.subr.mxu0 0.0
        %699 = vmatpush2.msra.mxu0 0.0
        %700 = vmatprep.subr.mxu0 0.0
        %701 = vmatpush2.msra.mxu0 0.0
        %702 = vmatprep.subr.mxu0 0.0
        %703 = vmatpush2.msra.mxu0 0.0
        %704 = vmatprep.subr.mxu0 0.0
        %705 = vmatpush2.msra.mxu0 0.0
        %706 = vmatprep.subr.mxu0 0.0
        %707 = vmatpush2.msra.mxu0 0.0
        %708 = vmatprep.subr.mxu0 0.0
        %709 = vmatpush2.msra.mxu0 0.0
        %710 = vmatprep.subr.mxu0 0.0
        %711 = vmatpush2.msra.mxu0 0.0
        %712 = vmatprep.subr.mxu0 0.0
        %713 = vmatpush2.msra.mxu0 0.0
        %714 = vmatprep.subr.mxu0 0.0
        %715 = vmatpush2.msra.mxu0 0.0
        %716 = vmatprep.mubr.f32.mxu0 0.0
        %v717 = vand.u32 %v397, 4294901760
        %v718 = vsub.f32 %v397, %v717
        %v719 = vand.u32 %v718, 4294901760
        %720 = vmatmul.mubr.f32.gmra.mxu0 %v719
        %v721 = vpop.f32.mrf.mxu0
        %v722 = vadd.f32 %v641, %v721
        %v723 = vpop.f32.mrf.mxu0
        %724 = vmatprep.mubr.f32.mxu0 0.0
        %v725 = vand.u32 %v400, 4294901760
        %v726 = vsub.f32 %v400, %v725
        %v727 = vand.u32 %v726, 4294901760
        %728 = vmatmul.mubr.f32.gmra.mxu0 %v727
        %v729 = vpop.f32.mrf.mxu0
        %v730 = vadd.f32 %v648, %v729
        %v731 = vpop.f32.mrf.mxu0
        %732 = vdwg.mxu0
        %733 = vmatprep.subr.mxu0 0.0
        %734 = vmatpush1.msra.mxu0 0.0
        %735 = vmatprep.subr.mxu0 0.0
        %736 = vmatpush1.msra.mxu0 0.0
        %737 = vmatprep.subr.mxu0 0.0
        %738 = vmatpush1.msra.mxu0 0.0
        %739 = vmatprep.subr.mxu0 0.0
        %740 = vmatpush1.msra.mxu0 0.0
        %741 = vmatprep.subr.mxu0 0.0
        %742 = vmatpush1.msra.mxu0 0.0
        %743 = vmatprep.subr.mxu0 0.0
        %744 = vmatpush1.msra.mxu0 0.0
        %745 = vmatprep.subr.mxu0 0.0
        %746 = vmatpush1.msra.mxu0 0.0
        %747 = vmatprep.subr.mxu0 0.0
        %748 = vmatpush1.msra.mxu0 0.0
        %749 = vmatprep.subr.mxu0 0.0
        %750 = vmatpush1.msra.mxu0 0.0
        %751 = vmatprep.subr.mxu0 0.0
        %752 = vmatpush1.msra.mxu0 0.0
        %753 = vmatprep.subr.mxu0 0.0
        %754 = vmatpush1.msra.mxu0 0.0
        %755 = vmatprep.subr.mxu0 0.0
        %756 = vmatpush1.msra.mxu0 0.0
        %757 = vmatprep.subr.mxu0 0.0
        %758 = vmatpush1.msra.mxu0 0.0
        %759 = vmatprep.subr.mxu0 0.0
        %760 = vmatpush1.msra.mxu0 0.0
        %761 = vmatprep.subr.mxu0 0.0
        %762 = vmatpush1.msra.mxu0 0.0
        %763 = vmatprep.subr.mxu0 0.0
        %v764 = vand.u32 %v390, 4294901760
        %v765 = vsub.f32 %v390, %v764
        %v766 = vand.u32 %v765, 4294901760
        %767 = vmatpush1.msra.mxu0 %v766
        %768 = vmatprep.subr.mxu0 0.0
        %769 = vmatpush2.msra.mxu0 0.0
        %770 = vmatprep.subr.mxu0 0.0
        %771 = vmatpush2.msra.mxu0 0.0
        %772 = vmatprep.subr.mxu0 0.0
        %773 = vmatpush2.msra.mxu0 0.0
        %774 = vmatprep.subr.mxu0 0.0
        %775 = vmatpush2.msra.mxu0 0.0
        %776 = vmatprep.subr.mxu0 0.0
        %777 = vmatpush2.msra.mxu0 0.0
        %778 = vmatprep.subr.mxu0 0.0
        %779 = vmatpush2.msra.mxu0 0.0
        %780 = vmatprep.subr.mxu0 0.0
        %781 = vmatpush2.msra.mxu0 0.0
        %782 = vmatprep.subr.mxu0 0.0
        %783 = vmatpush2.msra.mxu0 0.0
        %784 = vmatprep.subr.mxu0 0.0
        %785 = vmatpush2.msra.mxu0 0.0
        %786 = vmatprep.subr.mxu0 0.0
        %787 = vmatpush2.msra.mxu0 0.0
        %788 = vmatprep.subr.mxu0 0.0
        %789 = vmatpush2.msra.mxu0 0.0
        %790 = vmatprep.subr.mxu0 0.0
        %791 = vmatpush2.msra.mxu0 0.0
        %792 = vmatprep.subr.mxu0 0.0
        %793 = vmatpush2.msra.mxu0 0.0
        %794 = vmatprep.subr.mxu0 0.0
        %795 = vmatpush2.msra.mxu0 0.0
        %796 = vmatprep.subr.mxu0 0.0
        %797 = vmatpush2.msra.mxu0 0.0
        %798 = vmatprep.subr.mxu0 0.0
        %799 = vmatpush2.msra.mxu0 0.0
        %800 = vmatprep.mubr.f32.mxu0 0.0
        %v801 = vand.u32 %v397, 4294901760
        %802 = vmatmul.mubr.f32.gmra.mxu0 %v801
        %v803 = vpop.f32.mrf.mxu0
        %v804 = vadd.f32 %v722, %v803
        %v805 = vpop.f32.mrf.mxu0
        %806 = vmatprep.mubr.f32.mxu0 0.0
        %v807 = vand.u32 %v400, 4294901760
        %808 = vmatmul.mubr.f32.gmra.mxu0 %v807
        %v809 = vpop.f32.mrf.mxu0
        %v810 = vadd.f32 %v730, %v809
        %v811 = vpop.f32.mrf.mxu0
        %812 = vdwg.mxu0
        %813 = vmatprep.subr.mxu0 0.0
        %814 = vmatpush1.msra.mxu0 0.0
        %815 = vmatprep.subr.mxu0 0.0
        %816 = vmatpush1.msra.mxu0 0.0
        %817 = vmatprep.subr.mxu0 0.0
        %818 = vmatpush1.msra.mxu0 0.0
        %819 = vmatprep.subr.mxu0 0.0
        %820 = vmatpush1.msra.mxu0 0.0
        %821 = vmatprep.subr.mxu0 0.0
        %822 = vmatpush1.msra.mxu0 0.0
        %823 = vmatprep.subr.mxu0 0.0
        %824 = vmatpush1.msra.mxu0 0.0
        %825 = vmatprep.subr.mxu0 0.0
        %826 = vmatpush1.msra.mxu0 0.0
        %827 = vmatprep.subr.mxu0 0.0
        %828 = vmatpush1.msra.mxu0 0.0
        %829 = vmatprep.subr.mxu0 0.0
        %830 = vmatpush1.msra.mxu0 0.0
        %831 = vmatprep.subr.mxu0 0.0
        %832 = vmatpush1.msra.mxu0 0.0
        %833 = vmatprep.subr.mxu0 0.0
        %834 = vmatpush1.msra.mxu0 0.0
        %835 = vmatprep.subr.mxu0 0.0
        %836 = vmatpush1.msra.mxu0 0.0
        %837 = vmatprep.subr.mxu0 0.0
        %838 = vmatpush1.msra.mxu0 0.0
        %839 = vmatprep.subr.mxu0 0.0
        %840 = vmatpush1.msra.mxu0 0.0
        %841 = vmatprep.subr.mxu0 0.0
        %842 = vmatpush1.msra.mxu0 0.0
        %843 = vmatprep.subr.mxu0 0.0
        %v844 = vand.u32 %v390, 4294901760
        %845 = vmatpush1.msra.mxu0 %v844
        %846 = vmatprep.subr.mxu0 0.0
        %847 = vmatpush2.msra.mxu0 0.0
        %848 = vmatprep.subr.mxu0 0.0
        %849 = vmatpush2.msra.mxu0 0.0
        %850 = vmatprep.subr.mxu0 0.0
        %851 = vmatpush2.msra.mxu0 0.0
        %852 = vmatprep.subr.mxu0 0.0
        %853 = vmatpush2.msra.mxu0 0.0
        %854 = vmatprep.subr.mxu0 0.0
        %855 = vmatpush2.msra.mxu0 0.0
        %856 = vmatprep.subr.mxu0 0.0
        %857 = vmatpush2.msra.mxu0 0.0
        %858 = vmatprep.subr.mxu0 0.0
        %859 = vmatpush2.msra.mxu0 0.0
        %860 = vmatprep.subr.mxu0 0.0
        %861 = vmatpush2.msra.mxu0 0.0
        %862 = vmatprep.subr.mxu0 0.0
        %863 = vmatpush2.msra.mxu0 0.0
        %864 = vmatprep.subr.mxu0 0.0
        %865 = vmatpush2.msra.mxu0 0.0
        %866 = vmatprep.subr.mxu0 0.0
        %867 = vmatpush2.msra.mxu0 0.0
        %868 = vmatprep.subr.mxu0 0.0
        %869 = vmatpush2.msra.mxu0 0.0
        %870 = vmatprep.subr.mxu0 0.0
        %871 = vmatpush2.msra.mxu0 0.0
        %872 = vmatprep.subr.mxu0 0.0
        %873 = vmatpush2.msra.mxu0 0.0
        %874 = vmatprep.subr.mxu0 0.0
        %875 = vmatpush2.msra.mxu0 0.0
        %876 = vmatprep.subr.mxu0 0.0
        %877 = vmatpush2.msra.mxu0 0.0
        %878 = vmatprep.mubr.f32.mxu0 0.0
        %v879 = vand.u32 %v397, 4294901760
        %880 = vmatmul.mubr.f32.gmra.mxu0 %v879
        %v881 = vpop.f32.mrf.mxu0
        %v882 = vadd.f32 %v804, %v881
        %v883 = vpop.f32.mrf.mxu0
        %884 = vmatprep.mubr.f32.mxu0 0.0
        %v885 = vand.u32 %v400, 4294901760
        %886 = vmatmul.mubr.f32.gmra.mxu0 %v885
        %v887 = vpop.f32.mrf.mxu0
        %v888 = vadd.f32 %v810, %v887
        %v889 = vpop.f32.mrf.mxu0
        %890 = vdwg.mxu0
        %vm891 = vcmask 261120
        %v892 = vsel %vm891, %v882, 0.0
        %893 = vadd.xlane.f32.xlu0 %v892
        %v894 = vpop.xlane.xlu0 %893
        %v895 = vsel %vm891, %v888, 0.0
        %896 = vadd.xlane.f32.xlu0 %v895
        %v897 = vpop.xlane.xlu0 %896
        %v898 = vrcp.pop 32.0
        %v899 = vmul.f32 %v894, %v898
        %v900 = vmul.f32 %v897, %v898
        %v901 = vsub.f32 %v882, %v899
        %v902 = vsub.f32 %v888, %v900
        %v903 = vmul.f32 %v901, %v901
        %v904 = vmul.f32 %v902, %v902
        %v905 = vsel %vm891, %v903, 0.0
        %906 = vadd.xlane.f32.xlu0 %v905
        %v907 = vpop.xlane.xlu0 %906
        %v908 = vsel %vm891, %v904, 0.0
        %909 = vadd.xlane.f32.xlu0 %v908
        %v910 = vpop.xlane.xlu0 %909
        %v911 = vmul.f32 %v907, %v898
        %v912 = vmul.f32 %v910, %v898
        %v913 = vadd.f32 %v911, 1e-05
        %v914 = vadd.f32 %v912, 1e-05
        %v915 = vrsqrt.pop %v913
        %v916 = vrsqrt.pop %v914
        %v917 = vmul.f32 %v901, %v915
        %v918 = vmul.f32 %v902, %v916
        %v919 = vlaneseq
        %v920 = vshrl.u32 %v919, 7
        %v921 = vsub.s32 1, %v920
        %v922 = vrot.slane %v386, %v921
        %v923 = vmul.f32 %v917, %v922
        %v924 = vmul.f32 %v918, %v922
        %v925 = vlaneseq
        %v926 = vshrl.u32 %v925, 7
        %v927 = vsub.s32 2, %v926
        %v928 = vrot.slane %v386, %v927
        %v929 = vadd.f32 %v923, %v928
        %v930 = vadd.f32 %v924, %v928
        %v931 = vsel %vm891, %v929, 0.0
        %932 = vadd.xlane.f32.xlu0 %v931
        %v933 = vpop.xlane.xlu0 %932
        %v934 = vsel %vm891, %v930, 0.0
        %935 = vadd.xlane.f32.xlu0 %v934
        %v936 = vpop.xlane.xlu0 %935
        %v937 = vmul.f32 %v933, %v898
        %v938 = vmul.f32 %v936, %v898
        %v939 = vsub.f32 %v929, %v937
        %v940 = vsub.f32 %v930, %v938
        %v941 = vmul.f32 %v939, %v939
        %v942 = vmul.f32 %v940, %v940
        %v943 = vsel %vm891, %v941, 0.0
        %944 = vadd.xlane.f32.xlu0 %v943
        %v945 = vpop.xlane.xlu0 %944
        %v946 = vsel %vm891, %v942, 0.0
        %947 = vadd.xlane.f32.xlu0 %v946
        %v948 = vpop.xlane.xlu0 %947
        %v949 = vmul.f32 %v945, %v898
        %v950 = vmul.f32 %v948, %v898
        %v951 = vadd.f32 %v949, 1e-05
        %v952 = vadd.f32 %v950, 1e-05
        %v953 = vrsqrt.pop %v951
        %v954 = vrsqrt.pop %v952
        %v955 = vmul.f32 %v939, %v953
        %v956 = vmul.f32 %v940, %v954
        %v957 = vlaneseq
        %v958 = vshrl.u32 %v957, 7
        %v959 = vsub.s32 3, %v958
        %v960 = vrot.slane %v386, %v959
        %v961 = vmul.f32 %v955, %v960
        %v962 = vmul.f32 %v956, %v960
        %v963 = vlaneseq
        %v964 = vshrl.u32 %v963, 7
        %v965 = vsub.s32 4, %v964
        %v966 = vrot.slane %v386, %v965
        %v967 = vadd.f32 %v961, %v966
        %v968 = vadd.f32 %v962, %v966
        %v969 = vsel %vm891, %v967, 0.0
        %970 = vadd.xlane.f32.xlu0 %v969
        %v971 = vpop.xlane.xlu0 %970
        %v972 = vsel %vm891, %v968, 0.0
        %973 = vadd.xlane.f32.xlu0 %v972
        %v974 = vpop.xlane.xlu0 %973
        %v975 = vld [vmem:[%s3] sm:$0xff]
        %v976 = vld [vmem:[%s3 + $0x8] sm:$0xff]
        %v977 = vmul.f32 %v971, %v975
        %v978 = vmul.f32 %v974, %v976
        %v979 = vadd.f32 %v977, %v967
        %v980 = vadd.f32 %v978, %v968
        %v982 = vsel %vm891, %v979, 0
        %v985 = vsel %vm891, %v980, 0
        %987 = vmatprep.subr.mxu0 0.0
        %988 = vmatpush1.xpose.msra.mxu0 0.0
        %989 = vmatprep.subr.mxu0 0.0
        %990 = vmatpush1.xpose.msra.mxu0 0.0
        %991 = vmatprep.subr.mxu0 0.0
        %992 = vmatpush1.xpose.msra.mxu0 0.0
        %993 = vmatprep.subr.mxu0 0.0
        %994 = vmatpush1.xpose.msra.mxu0 0.0
        %995 = vmatprep.subr.mxu0 0.0
        %996 = vmatpush1.xpose.msra.mxu0 0.0
        %997 = vmatprep.subr.mxu0 0.0
        %998 = vmatpush1.xpose.msra.mxu0 0.0
        %999 = vmatprep.subr.mxu0 0.0
        %1000 = vmatpush1.xpose.msra.mxu0 0.0
        %1001 = vmatprep.subr.mxu0 0.0
        %1002 = vmatpush1.xpose.msra.mxu0 0.0
        %1003 = vmatprep.subr.mxu0 0.0
        %1004 = vmatpush1.xpose.msra.mxu0 0.0
        %1005 = vmatprep.subr.mxu0 0.0
        %1006 = vmatpush1.xpose.msra.mxu0 0.0
        %1007 = vmatprep.subr.mxu0 0.0
        %1008 = vmatpush1.xpose.msra.mxu0 0.0
        %1009 = vmatprep.subr.mxu0 0.0
        %1010 = vmatpush1.xpose.msra.mxu0 0.0
        %1011 = vmatprep.subr.mxu0 0.0
        %1012 = vmatpush1.xpose.msra.mxu0 0.0
        %1013 = vmatprep.subr.mxu0 0.0
        %1014 = vmatpush1.xpose.msra.mxu0 0.0
        %1015 = vmatprep.subr.mxu0 0.0
        %v1016 = vand.u32 %v985, 4294901760
        %1017 = vmatpush1.xpose.msra.mxu0 %v1016
        %1018 = vmatprep.subr.mxu0 0.0
        %v1019 = vand.u32 %v982, 4294901760
        %1020 = vmatpush1.xpose.msra.mxu0 %v1019
        %1021 = vmatprep.subr.mxu0 0.0
        %1022 = vmatpush2.xpose.msra.mxu0 0.0
        %1023 = vmatprep.subr.mxu0 0.0
        %1024 = vmatpush2.xpose.msra.mxu0 0.0
        %1025 = vmatprep.subr.mxu0 0.0
        %1026 = vmatpush2.xpose.msra.mxu0 0.0
        %1027 = vmatprep.subr.mxu0 0.0
        %1028 = vmatpush2.xpose.msra.mxu0 0.0
        %1029 = vmatprep.subr.mxu0 0.0
        %1030 = vmatpush2.xpose.msra.mxu0 0.0
        %1031 = vmatprep.subr.mxu0 0.0
        %1032 = vmatpush2.xpose.msra.mxu0 0.0
        %1033 = vmatprep.subr.mxu0 0.0
        %1034 = vmatpush2.xpose.msra.mxu0 0.0
        %1035 = vmatprep.subr.mxu0 0.0
        %1036 = vmatpush2.xpose.msra.mxu0 0.0
        %1037 = vmatprep.subr.mxu0 0.0
        %1038 = vmatpush2.xpose.msra.mxu0 0.0
        %1039 = vmatprep.subr.mxu0 0.0
        %1040 = vmatpush2.xpose.msra.mxu0 0.0
        %1041 = vmatprep.subr.mxu0 0.0
        %1042 = vmatpush2.xpose.msra.mxu0 0.0
        %1043 = vmatprep.subr.mxu0 0.0
        %1044 = vmatpush2.xpose.msra.mxu0 0.0
        %1045 = vmatprep.subr.mxu0 0.0
        %1046 = vmatpush2.xpose.msra.mxu0 0.0
        %1047 = vmatprep.subr.mxu0 0.0
        %1048 = vmatpush2.xpose.msra.mxu0 0.0
        %1049 = vmatprep.subr.mxu0 0.0
        %1050 = vmatpush2.xpose.msra.mxu0 0.0
        %1051 = vmatprep.subr.mxu0 0.0
        %1052 = vmatpush2.xpose.msra.mxu0 0.0
        %1053 = vmatprep.mubr.f32.mxu0 0.0
        %v1054 = vand.u32 %v982, 4294901760
        %v1055 = vsub.f32 %v982, %v1054
        %v1056 = vand.u32 %v1055, 4294901760
        %v1057 = vsub.f32 %v1055, %v1056
        %v1058 = vand.u32 %v1057, 4294901760
        %1059 = vmatmul.mubr.f32.gmra.mxu0 %v1058
        %v1060 = vpop.f32.mrf.mxu0
        %v1061 = vadd.f32 0.0, %v1060
        %v1062 = vpop.f32.mrf.mxu0
        %1063 = vmatprep.mubr.f32.mxu0 0.0
        %v1064 = vand.u32 %v985, 4294901760
        %v1065 = vsub.f32 %v985, %v1064
        %v1066 = vand.u32 %v1065, 4294901760
        %v1067 = vsub.f32 %v1065, %v1066
        %v1068 = vand.u32 %v1067, 4294901760
        %1069 = vmatmul.mubr.f32.gmra.mxu0 %v1068
        %v1070 = vpop.f32.mrf.mxu0
        %v1071 = vadd.f32 0.0, %v1070
        %v1072 = vpop.f32.mrf.mxu0
        %1073 = vdwg.mxu0
        %1074 = vmatprep.subr.mxu0 0.0
        %1075 = vmatpush1.xpose.msra.mxu0 0.0
        %1076 = vmatprep.subr.mxu0 0.0
        %1077 = vmatpush1.xpose.msra.mxu0 0.0
        %1078 = vmatprep.subr.mxu0 0.0
        %1079 = vmatpush1.xpose.msra.mxu0 0.0
        %1080 = vmatprep.subr.mxu0 0.0
        %1081 = vmatpush1.xpose.msra.mxu0 0.0
        %1082 = vmatprep.subr.mxu0 0.0
        %1083 = vmatpush1.xpose.msra.mxu0 0.0
        %1084 = vmatprep.subr.mxu0 0.0
        %1085 = vmatpush1.xpose.msra.mxu0 0.0
        %1086 = vmatprep.subr.mxu0 0.0
        %1087 = vmatpush1.xpose.msra.mxu0 0.0
        %1088 = vmatprep.subr.mxu0 0.0
        %1089 = vmatpush1.xpose.msra.mxu0 0.0
        %1090 = vmatprep.subr.mxu0 0.0
        %1091 = vmatpush1.xpose.msra.mxu0 0.0
        %1092 = vmatprep.subr.mxu0 0.0
        %1093 = vmatpush1.xpose.msra.mxu0 0.0
        %1094 = vmatprep.subr.mxu0 0.0
        %1095 = vmatpush1.xpose.msra.mxu0 0.0
        %1096 = vmatprep.subr.mxu0 0.0
        %1097 = vmatpush1.xpose.msra.mxu0 0.0
        %1098 = vmatprep.subr.mxu0 0.0
        %1099 = vmatpush1.xpose.msra.mxu0 0.0
        %1100 = vmatprep.subr.mxu0 0.0
        %1101 = vmatpush1.xpose.msra.mxu0 0.0
        %1102 = vmatprep.subr.mxu0 0.0
        %v1103 = vand.u32 %v985, 4294901760
        %v1104 = vsub.f32 %v985, %v1103
        %v1105 = vand.u32 %v1104, 4294901760
        %v1106 = vsub.f32 %v1104, %v1105
        %v1107 = vand.u32 %v1106, 4294901760
        %1108 = vmatpush1.xpose.msra.mxu0 %v1107
        %1109 = vmatprep.subr.mxu0 0.0
        %v1110 = vand.u32 %v982, 4294901760
        %v1111 = vsub.f32 %v982, %v1110
        %v1112 = vand.u32 %v1111, 4294901760
        %v1113 = vsub.f32 %v1111, %v1112
        %v1114 = vand.u32 %v1113, 4294901760
        %1115 = vmatpush1.xpose.msra.mxu0 %v1114
        %1116 = vmatprep.subr.mxu0 0.0
        %1117 = vmatpush2.xpose.msra.mxu0 0.0
        %1118 = vmatprep.subr.mxu0 0.0
        %1119 = vmatpush2.xpose.msra.mxu0 0.0
        %1120 = vmatprep.subr.mxu0 0.0
        %1121 = vmatpush2.xpose.msra.mxu0 0.0
        %1122 = vmatprep.subr.mxu0 0.0
        %1123 = vmatpush2.xpose.msra.mxu0 0.0
        %1124 = vmatprep.subr.mxu0 0.0
        %1125 = vmatpush2.xpose.msra.mxu0 0.0
        %1126 = vmatprep.subr.mxu0 0.0
        %1127 = vmatpush2.xpose.msra.mxu0 0.0
        %1128 = vmatprep.subr.mxu0 0.0
        %1129 = vmatpush2.xpose.msra.mxu0 0.0
        %1130 = vmatprep.subr.mxu0 0.0
        %1131 = vmatpush2.xpose.msra.mxu0 0.0
        %1132 = vmatprep.subr.mxu0 0.0
        %1133 = vmatpush2.xpose.msra.mxu0 0.0
        %1134 = vmatprep.subr.mxu0 0.0
        %1135 = vmatpush2.xpose.msra.mxu0 0.0
        %1136 = vmatprep.subr.mxu0 0.0
        %1137 = vmatpush2.xpose.msra.mxu0 0.0
        %1138 = vmatprep.subr.mxu0 0.0
        %1139 = vmatpush2.xpose.msra.mxu0 0.0
        %1140 = vmatprep.subr.mxu0 0.0
        %1141 = vmatpush2.xpose.msra.mxu0 0.0
        %1142 = vmatprep.subr.mxu0 0.0
        %1143 = vmatpush2.xpose.msra.mxu0 0.0
        %1144 = vmatprep.subr.mxu0 0.0
        %1145 = vmatpush2.xpose.msra.mxu0 0.0
        %1146 = vmatprep.subr.mxu0 0.0
        %1147 = vmatpush2.xpose.msra.mxu0 0.0
        %1148 = vmatprep.mubr.f32.mxu0 0.0
        %v1149 = vand.u32 %v982, 4294901760
        %1150 = vmatmul.mubr.f32.gmra.mxu0 %v1149
        %v1151 = vpop.f32.mrf.mxu0
        %v1152 = vadd.f32 %v1061, %v1151
        %v1153 = vpop.f32.mrf.mxu0
        %1154 = vmatprep.mubr.f32.mxu0 0.0
        %v1155 = vand.u32 %v985, 4294901760
        %1156 = vmatmul.mubr.f32.gmra.mxu0 %v1155
        %v1157 = vpop.f32.mrf.mxu0
        %v1158 = vadd.f32 %v1071, %v1157
        %v1159 = vpop.f32.mrf.mxu0
        %1160 = vdwg.mxu0
        %1161 = vmatprep.subr.mxu0 0.0
        %1162 = vmatpush1.xpose.msra.mxu0 0.0
        %1163 = vmatprep.subr.mxu0 0.0
        %1164 = vmatpush1.xpose.msra.mxu0 0.0
        %1165 = vmatprep.subr.mxu0 0.0
        %1166 = vmatpush1.xpose.msra.mxu0 0.0
        %1167 = vmatprep.subr.mxu0 0.0
        %1168 = vmatpush1.xpose.msra.mxu0 0.0
        %1169 = vmatprep.subr.mxu0 0.0
        %1170 = vmatpush1.xpose.msra.mxu0 0.0
        %1171 = vmatprep.subr.mxu0 0.0
        %1172 = vmatpush1.xpose.msra.mxu0 0.0
        %1173 = vmatprep.subr.mxu0 0.0
        %1174 = vmatpush1.xpose.msra.mxu0 0.0
        %1175 = vmatprep.subr.mxu0 0.0
        %1176 = vmatpush1.xpose.msra.mxu0 0.0
        %1177 = vmatprep.subr.mxu0 0.0
        %1178 = vmatpush1.xpose.msra.mxu0 0.0
        %1179 = vmatprep.subr.mxu0 0.0
        %1180 = vmatpush1.xpose.msra.mxu0 0.0
        %1181 = vmatprep.subr.mxu0 0.0
        %1182 = vmatpush1.xpose.msra.mxu0 0.0
        %1183 = vmatprep.subr.mxu0 0.0
        %1184 = vmatpush1.xpose.msra.mxu0 0.0
        %1185 = vmatprep.subr.mxu0 0.0
        %1186 = vmatpush1.xpose.msra.mxu0 0.0
        %1187 = vmatprep.subr.mxu0 0.0
        %1188 = vmatpush1.xpose.msra.mxu0 0.0
        %1189 = vmatprep.subr.mxu0 0.0
        %v1190 = vand.u32 %v985, 4294901760
        %v1191 = vsub.f32 %v985, %v1190
        %1192 = vmatpush1.xpose.msra.mxu0 %v1191
        %1193 = vmatprep.subr.mxu0 0.0
        %v1194 = vand.u32 %v982, 4294901760
        %v1195 = vsub.f32 %v982, %v1194
        %1196 = vmatpush1.xpose.msra.mxu0 %v1195
        %1197 = vmatprep.subr.mxu0 0.0
        %1198 = vmatpush2.xpose.msra.mxu0 0.0
        %1199 = vmatprep.subr.mxu0 0.0
        %1200 = vmatpush2.xpose.msra.mxu0 0.0
        %1201 = vmatprep.subr.mxu0 0.0
        %1202 = vmatpush2.xpose.msra.mxu0 0.0
        %1203 = vmatprep.subr.mxu0 0.0
        %1204 = vmatpush2.xpose.msra.mxu0 0.0
        %1205 = vmatprep.subr.mxu0 0.0
        %1206 = vmatpush2.xpose.msra.mxu0 0.0
        %1207 = vmatprep.subr.mxu0 0.0
        %1208 = vmatpush2.xpose.msra.mxu0 0.0
        %1209 = vmatprep.subr.mxu0 0.0
        %1210 = vmatpush2.xpose.msra.mxu0 0.0
        %1211 = vmatprep.subr.mxu0 0.0
        %1212 = vmatpush2.xpose.msra.mxu0 0.0
        %1213 = vmatprep.subr.mxu0 0.0
        %1214 = vmatpush2.xpose.msra.mxu0 0.0
        %1215 = vmatprep.subr.mxu0 0.0
        %1216 = vmatpush2.xpose.msra.mxu0 0.0
        %1217 = vmatprep.subr.mxu0 0.0
        %1218 = vmatpush2.xpose.msra.mxu0 0.0
        %1219 = vmatprep.subr.mxu0 0.0
        %1220 = vmatpush2.xpose.msra.mxu0 0.0
        %1221 = vmatprep.subr.mxu0 0.0
        %1222 = vmatpush2.xpose.msra.mxu0 0.0
        %1223 = vmatprep.subr.mxu0 0.0
        %1224 = vmatpush2.xpose.msra.mxu0 0.0
        %1225 = vmatprep.subr.mxu0 0.0
        %1226 = vmatpush2.xpose.msra.mxu0 0.0
        %1227 = vmatprep.subr.mxu0 0.0
        %1228 = vmatpush2.xpose.msra.mxu0 0.0
        %1229 = vmatprep.mubr.f32.mxu0 0.0
        %v1230 = vand.u32 %v982, 4294901760
        %v1231 = vsub.f32 %v982, %v1230
        %1232 = vmatmul.mubr.f32.gmra.mxu0 %v1231
        %v1233 = vpop.f32.mrf.mxu0
        %v1234 = vadd.f32 %v1152, %v1233
        %v1235 = vpop.f32.mrf.mxu0
        %1236 = vmatprep.mubr.f32.mxu0 0.0
        %v1237 = vand.u32 %v985, 4294901760
        %v1238 = vsub.f32 %v985, %v1237
        %1239 = vmatmul.mubr.f32.gmra.mxu0 %v1238
        %v1240 = vpop.f32.mrf.mxu0
        %v1241 = vadd.f32 %v1158, %v1240
        %v1242 = vpop.f32.mrf.mxu0
        %1243 = vdwg.mxu0
        %1244 = vmatprep.subr.mxu0 0.0
        %1245 = vmatpush1.xpose.msra.mxu0 0.0
        %1246 = vmatprep.subr.mxu0 0.0
        %1247 = vmatpush1.xpose.msra.mxu0 0.0
        %1248 = vmatprep.subr.mxu0 0.0
        %1249 = vmatpush1.xpose.msra.mxu0 0.0
        %1250 = vmatprep.subr.mxu0 0.0
        %1251 = vmatpush1.xpose.msra.mxu0 0.0
        %1252 = vmatprep.subr.mxu0 0.0
        %1253 = vmatpush1.xpose.msra.mxu0 0.0
        %1254 = vmatprep.subr.mxu0 0.0
        %1255 = vmatpush1.xpose.msra.mxu0 0.0
        %1256 = vmatprep.subr.mxu0 0.0
        %1257 = vmatpush1.xpose.msra.mxu0 0.0
        %1258 = vmatprep.subr.mxu0 0.0
        %1259 = vmatpush1.xpose.msra.mxu0 0.0
        %1260 = vmatprep.subr.mxu0 0.0
        %1261 = vmatpush1.xpose.msra.mxu0 0.0
        %1262 = vmatprep.subr.mxu0 0.0
        %1263 = vmatpush1.xpose.msra.mxu0 0.0
        %1264 = vmatprep.subr.mxu0 0.0
        %1265 = vmatpush1.xpose.msra.mxu0 0.0
        %1266 = vmatprep.subr.mxu0 0.0
        %1267 = vmatpush1.xpose.msra.mxu0 0.0
        %1268 = vmatprep.subr.mxu0 0.0
        %1269 = vmatpush1.xpose.msra.mxu0 0.0
        %1270 = vmatprep.subr.mxu0 0.0
        %1271 = vmatpush1.xpose.msra.mxu0 0.0
        %1272 = vmatprep.subr.mxu0 0.0
        %v1273 = vand.u32 %v985, 4294901760
        %1274 = vmatpush1.xpose.msra.mxu0 %v1273
        %1275 = vmatprep.subr.mxu0 0.0
        %v1276 = vand.u32 %v982, 4294901760
        %1277 = vmatpush1.xpose.msra.mxu0 %v1276
        %1278 = vmatprep.subr.mxu0 0.0
        %1279 = vmatpush2.xpose.msra.mxu0 0.0
        %1280 = vmatprep.subr.mxu0 0.0
        %1281 = vmatpush2.xpose.msra.mxu0 0.0
        %1282 = vmatprep.subr.mxu0 0.0
        %1283 = vmatpush2.xpose.msra.mxu0 0.0
        %1284 = vmatprep.subr.mxu0 0.0
        %1285 = vmatpush2.xpose.msra.mxu0 0.0
        %1286 = vmatprep.subr.mxu0 0.0
        %1287 = vmatpush2.xpose.msra.mxu0 0.0
        %1288 = vmatprep.subr.mxu0 0.0
        %1289 = vmatpush2.xpose.msra.mxu0 0.0
        %1290 = vmatprep.subr.mxu0 0.0
        %1291 = vmatpush2.xpose.msra.mxu0 0.0
        %1292 = vmatprep.subr.mxu0 0.0
        %1293 = vmatpush2.xpose.msra.mxu0 0.0
        %1294 = vmatprep.subr.mxu0 0.0
        %1295 = vmatpush2.xpose.msra.mxu0 0.0
        %1296 = vmatprep.subr.mxu0 0.0
        %1297 = vmatpush2.xpose.msra.mxu0 0.0
        %1298 = vmatprep.subr.mxu0 0.0
        %1299 = vmatpush2.xpose.msra.mxu0 0.0
        %1300 = vmatprep.subr.mxu0 0.0
        %1301 = vmatpush2.xpose.msra.mxu0 0.0
        %1302 = vmatprep.subr.mxu0 0.0
        %1303 = vmatpush2.xpose.msra.mxu0 0.0
        %1304 = vmatprep.subr.mxu0 0.0
        %1305 = vmatpush2.xpose.msra.mxu0 0.0
        %1306 = vmatprep.subr.mxu0 0.0
        %1307 = vmatpush2.xpose.msra.mxu0 0.0
        %1308 = vmatprep.subr.mxu0 0.0
        %1309 = vmatpush2.xpose.msra.mxu0 0.0
        %1310 = vmatprep.mubr.f32.mxu0 0.0
        %v1311 = vand.u32 %v982, 4294901760
        %v1312 = vsub.f32 %v982, %v1311
        %v1313 = vand.u32 %v1312, 4294901760
        %1314 = vmatmul.mubr.f32.gmra.mxu0 %v1313
        %v1315 = vpop.f32.mrf.mxu0
        %v1316 = vadd.f32 %v1234, %v1315
        %v1317 = vpop.f32.mrf.mxu0
        %1318 = vmatprep.mubr.f32.mxu0 0.0
        %v1319 = vand.u32 %v985, 4294901760
        %v1320 = vsub.f32 %v985, %v1319
        %v1321 = vand.u32 %v1320, 4294901760
        %1322 = vmatmul.mubr.f32.gmra.mxu0 %v1321
        %v1323 = vpop.f32.mrf.mxu0
        %v1324 = vadd.f32 %v1241, %v1323
        %v1325 = vpop.f32.mrf.mxu0
        %1326 = vdwg.mxu0
        %1327 = vmatprep.subr.mxu0 0.0
        %1328 = vmatpush1.xpose.msra.mxu0 0.0
        %1329 = vmatprep.subr.mxu0 0.0
        %1330 = vmatpush1.xpose.msra.mxu0 0.0
        %1331 = vmatprep.subr.mxu0 0.0
        %1332 = vmatpush1.xpose.msra.mxu0 0.0
        %1333 = vmatprep.subr.mxu0 0.0
        %1334 = vmatpush1.xpose.msra.mxu0 0.0
        %1335 = vmatprep.subr.mxu0 0.0
        %1336 = vmatpush1.xpose.msra.mxu0 0.0
        %1337 = vmatprep.subr.mxu0 0.0
        %1338 = vmatpush1.xpose.msra.mxu0 0.0
        %1339 = vmatprep.subr.mxu0 0.0
        %1340 = vmatpush1.xpose.msra.mxu0 0.0
        %1341 = vmatprep.subr.mxu0 0.0
        %1342 = vmatpush1.xpose.msra.mxu0 0.0
        %1343 = vmatprep.subr.mxu0 0.0
        %1344 = vmatpush1.xpose.msra.mxu0 0.0
        %1345 = vmatprep.subr.mxu0 0.0
        %1346 = vmatpush1.xpose.msra.mxu0 0.0
        %1347 = vmatprep.subr.mxu0 0.0
        %1348 = vmatpush1.xpose.msra.mxu0 0.0
        %1349 = vmatprep.subr.mxu0 0.0
        %1350 = vmatpush1.xpose.msra.mxu0 0.0
        %1351 = vmatprep.subr.mxu0 0.0
        %1352 = vmatpush1.xpose.msra.mxu0 0.0
        %1353 = vmatprep.subr.mxu0 0.0
        %1354 = vmatpush1.xpose.msra.mxu0 0.0
        %1355 = vmatprep.subr.mxu0 0.0
        %v1356 = vand.u32 %v985, 4294901760
        %v1357 = vsub.f32 %v985, %v1356
        %v1358 = vand.u32 %v1357, 4294901760
        %1359 = vmatpush1.xpose.msra.mxu0 %v1358
        %1360 = vmatprep.subr.mxu0 0.0
        %v1361 = vand.u32 %v982, 4294901760
        %v1362 = vsub.f32 %v982, %v1361
        %v1363 = vand.u32 %v1362, 4294901760
        %1364 = vmatpush1.xpose.msra.mxu0 %v1363
        %1365 = vmatprep.subr.mxu0 0.0
        %1366 = vmatpush2.xpose.msra.mxu0 0.0
        %1367 = vmatprep.subr.mxu0 0.0
        %1368 = vmatpush2.xpose.msra.mxu0 0.0
        %1369 = vmatprep.subr.mxu0 0.0
        %1370 = vmatpush2.xpose.msra.mxu0 0.0
        %1371 = vmatprep.subr.mxu0 0.0
        %1372 = vmatpush2.xpose.msra.mxu0 0.0
        %1373 = vmatprep.subr.mxu0 0.0
        %1374 = vmatpush2.xpose.msra.mxu0 0.0
        %1375 = vmatprep.subr.mxu0 0.0
        %1376 = vmatpush2.xpose.msra.mxu0 0.0
        %1377 = vmatprep.subr.mxu0 0.0
        %1378 = vmatpush2.xpose.msra.mxu0 0.0
        %1379 = vmatprep.subr.mxu0 0.0
        %1380 = vmatpush2.xpose.msra.mxu0 0.0
        %1381 = vmatprep.subr.mxu0 0.0
        %1382 = vmatpush2.xpose.msra.mxu0 0.0
        %1383 = vmatprep.subr.mxu0 0.0
        %1384 = vmatpush2.xpose.msra.mxu0 0.0
        %1385 = vmatprep.subr.mxu0 0.0
        %1386 = vmatpush2.xpose.msra.mxu0 0.0
        %1387 = vmatprep.subr.mxu0 0.0
        %1388 = vmatpush2.xpose.msra.mxu0 0.0
        %1389 = vmatprep.subr.mxu0 0.0
        %1390 = vmatpush2.xpose.msra.mxu0 0.0
        %1391 = vmatprep.subr.mxu0 0.0
        %1392 = vmatpush2.xpose.msra.mxu0 0.0
        %1393 = vmatprep.subr.mxu0 0.0
        %1394 = vmatpush2.xpose.msra.mxu0 0.0
        %1395 = vmatprep.subr.mxu0 0.0
        %1396 = vmatpush2.xpose.msra.mxu0 0.0
        %1397 = vmatprep.mubr.f32.mxu0 0.0
        %v1398 = vand.u32 %v982, 4294901760
        %1399 = vmatmul.mubr.f32.gmra.mxu0 %v1398
        %v1400 = vpop.f32.mrf.mxu0
        %v1401 = vadd.f32 %v1316, %v1400
        %v1402 = vpop.f32.mrf.mxu0
        %1403 = vmatprep.mubr.f32.mxu0 0.0
        %v1404 = vand.u32 %v985, 4294901760
        %1405 = vmatmul.mubr.f32.gmra.mxu0 %v1404
        %v1406 = vpop.f32.mrf.mxu0
        %v1407 = vadd.f32 %v1324, %v1406
        %v1408 = vpop.f32.mrf.mxu0
        %1409 = vdwg.mxu0
        %1410 = vmatprep.subr.mxu0 0.0
        %1411 = vmatpush1.xpose.msra.mxu0 0.0
        %1412 = vmatprep.subr.mxu0 0.0
        %1413 = vmatpush1.xpose.msra.mxu0 0.0
        %1414 = vmatprep.subr.mxu0 0.0
        %1415 = vmatpush1.xpose.msra.mxu0 0.0
        %1416 = vmatprep.subr.mxu0 0.0
        %1417 = vmatpush1.xpose.msra.mxu0 0.0
        %1418 = vmatprep.subr.mxu0 0.0
        %1419 = vmatpush1.xpose.msra.mxu0 0.0
        %1420 = vmatprep.subr.mxu0 0.0
        %1421 = vmatpush1.xpose.msra.mxu0 0.0
        %1422 = vmatprep.subr.mxu0 0.0
        %1423 = vmatpush1.xpose.msra.mxu0 0.0
        %1424 = vmatprep.subr.mxu0 0.0
        %1425 = vmatpush1.xpose.msra.mxu0 0.0
        %1426 = vmatprep.subr.mxu0 0.0
        %1427 = vmatpush1.xpose.msra.mxu0 0.0
        %1428 = vmatprep.subr.mxu0 0.0
        %1429 = vmatpush1.xpose.msra.mxu0 0.0
        %1430 = vmatprep.subr.mxu0 0.0
        %1431 = vmatpush1.xpose.msra.mxu0 0.0
        %1432 = vmatprep.subr.mxu0 0.0
        %1433 = vmatpush1.xpose.msra.mxu0 0.0
        %1434 = vmatprep.subr.mxu0 0.0
        %1435 = vmatpush1.xpose.msra.mxu0 0.0
        %1436 = vmatprep.subr.mxu0 0.0
        %1437 = vmatpush1.xpose.msra.mxu0 0.0
        %1438 = vmatprep.subr.mxu0 0.0
        %v1439 = vand.u32 %v985, 4294901760
        %1440 = vmatpush1.xpose.msra.mxu0 %v1439
        %1441 = vmatprep.subr.mxu0 0.0
        %v1442 = vand.u32 %v982, 4294901760
        %1443 = vmatpush1.xpose.msra.mxu0 %v1442
        %1444 = vmatprep.subr.mxu0 0.0
        %1445 = vmatpush2.xpose.msra.mxu0 0.0
        %1446 = vmatprep.subr.mxu0 0.0
        %1447 = vmatpush2.xpose.msra.mxu0 0.0
        %1448 = vmatprep.subr.mxu0 0.0
        %1449 = vmatpush2.xpose.msra.mxu0 0.0
        %1450 = vmatprep.subr.mxu0 0.0
        %1451 = vmatpush2.xpose.msra.mxu0 0.0
        %1452 = vmatprep.subr.mxu0 0.0
        %1453 = vmatpush2.xpose.msra.mxu0 0.0
        %1454 = vmatprep.subr.mxu0 0.0
        %1455 = vmatpush2.xpose.msra.mxu0 0.0
        %1456 = vmatprep.subr.mxu0 0.0
        %1457 = vmatpush2.xpose.msra.mxu0 0.0
        %1458 = vmatprep.subr.mxu0 0.0
        %1459 = vmatpush2.xpose.msra.mxu0 0.0
        %1460 = vmatprep.subr.mxu0 0.0
        %1461 = vmatpush2.xpose.msra.mxu0 0.0
        %1462 = vmatprep.subr.mxu0 0.0
        %1463 = vmatpush2.xpose.msra.mxu0 0.0
        %1464 = vmatprep.subr.mxu0 0.0
        %1465 = vmatpush2.xpose.msra.mxu0 0.0
        %1466 = vmatprep.subr.mxu0 0.0
        %1467 = vmatpush2.xpose.msra.mxu0 0.0
        %1468 = vmatprep.subr.mxu0 0.0
        %1469 = vmatpush2.xpose.msra.mxu0 0.0
        %1470 = vmatprep.subr.mxu0 0.0
        %1471 = vmatpush2.xpose.msra.mxu0 0.0
        %1472 = vmatprep.subr.mxu0 0.0
        %1473 = vmatpush2.xpose.msra.mxu0 0.0
        %1474 = vmatprep.subr.mxu0 0.0
        %1475 = vmatpush2.xpose.msra.mxu0 0.0
        %1476 = vmatprep.mubr.f32.mxu0 0.0
        %v1477 = vand.u32 %v982, 4294901760
        %1478 = vmatmul.mubr.f32.gmra.mxu0 %v1477
        %v1479 = vpop.f32.mrf.mxu0
        %v1480 = vadd.f32 %v1401, %v1479
        %v1481 = vpop.f32.mrf.mxu0
        %1482 = vmatprep.mubr.f32.mxu0 0.0
        %v1483 = vand.u32 %v985, 4294901760
        %1484 = vmatmul.mubr.f32.gmra.mxu0 %v1483
        %v1485 = vpop.f32.mrf.mxu0
        %v1486 = vadd.f32 %v1407, %v1485
        %v1487 = vpop.f32.mrf.mxu0
        %1488 = vdwg.mxu0
        %vm1489 = vcmask 130048
        %v1490 = vsel %vm1489, %v1480, 0.0
        %1491 = vadd.xlane.f32.xlu0 %v1490
        %v1492 = vpop.xlane.xlu0 %1491
        %v1493 = vsel %vm1489, %v1486, 0.0
        %1494 = vadd.xlane.f32.xlu0 %v1493
        %v1495 = vpop.xlane.xlu0 %1494
        %v1496 = vrcp.pop 16.0
        %v1497 = vmul.f32 %v1492, %v1496
        %v1498 = vmul.f32 %v1495, %v1496
        %v1499 = vsub.f32 %v1480, %v1497
        %v1500 = vsub.f32 %v1486, %v1498
        %v1501 = vmul.f32 %v1499, %v1499
        %v1502 = vmul.f32 %v1500, %v1500
        %v1503 = vsel %vm1489, %v1501, 0.0
        %1504 = vadd.xlane.f32.xlu0 %v1503
        %v1505 = vpop.xlane.xlu0 %1504
        %v1506 = vsel %vm1489, %v1502, 0.0
        %1507 = vadd.xlane.f32.xlu0 %v1506
        %v1508 = vpop.xlane.xlu0 %1507
        %v1509 = vmul.f32 %v1505, %v1496
        %v1510 = vmul.f32 %v1508, %v1496
        %v1511 = vadd.f32 %v1509, 1e-05
        %v1512 = vadd.f32 %v1510, 1e-05
        %v1513 = vrsqrt.pop %v1511
        %v1514 = vrsqrt.pop %v1512
        %v1515 = vmul.f32 %v1499, %v1513
        %v1516 = vmul.f32 %v1500, %v1514
        %v1517 = vlaneseq
        %v1518 = vshrl.u32 %v1517, 7
        %v1519 = vsub.s32 0, %v1518
        %v1520 = vrot.slane %v387, %v1519
        %v1521 = vmul.f32 %v1515, %v1520
        %v1522 = vmul.f32 %v1516, %v1520
        %v1523 = vlaneseq
        %v1524 = vshrl.u32 %v1523, 7
        %v1525 = vsub.s32 1, %v1524
        %v1526 = vrot.slane %v387, %v1525
        %v1527 = vadd.f32 %v1521, %v1526
        %v1528 = vadd.f32 %v1522, %v1526
        %v1529 = vld [vmem:[%s4] sm:$0xff]
        %v1530 = vld [vmem:[%s4 + $0x8] sm:$0xff]
        %v1531 = vld [vmem:[%s4 + $0x10] sm:$0xff]
        %v1532 = vld [vmem:[%s4 + $0x18] sm:$0xff]
        %v1533 = vld [vmem:[%s5] sm:$0x1]
        %v1535 = vlaneseq
        %v1536 = vshrl.u32 %v1535, 7
        %v1537 = vsub.s32 0, %v1536
        %v1538 = vrot.slane %v1533, %v1537
        %v1541 = vsel %vm891, %v967, 0
        %v1544 = vsel %vm891, %v968, 0
        %v1547 = vsel %vm891, %v1529, 0
        %v1550 = vsel %vm891, %v1530, 0
        %v1553 = vsel %vm891, %v1531, 0
        %v1556 = vsel %vm891, %v1532, 0
        %1558 = vmatprep.subr.mxu0 0.0
        %1559 = vmatpush1.xpose.msra.mxu0 0.0
        %1560 = vmatprep.subr.mxu0 0.0
        %1561 = vmatpush1.xpose.msra.mxu0 0.0
        %1562 = vmatprep.subr.mxu0 0.0
        %1563 = vmatpush1.xpose.msra.mxu0 0.0
        %1564 = vmatprep.subr.mxu0 0.0
        %1565 = vmatpush1.xpose.msra.mxu0 0.0
        %1566 = vmatprep.subr.mxu0 0.0
        %1567 = vmatpush1.xpose.msra.mxu0 0.0
        %1568 = vmatprep.subr.mxu0 0.0
        %1569 = vmatpush1.xpose.msra.mxu0 0.0
        %1570 = vmatprep.subr.mxu0 0.0
        %1571 = vmatpush1.xpose.msra.mxu0 0.0
        %1572 = vmatprep.subr.mxu0 0.0
        %1573 = vmatpush1.xpose.msra.mxu0 0.0
        %1574 = vmatprep.subr.mxu0 0.0
        %1575 = vmatpush1.xpose.msra.mxu0 0.0
        %1576 = vmatprep.subr.mxu0 0.0
        %1577 = vmatpush1.xpose.msra.mxu0 0.0
        %1578 = vmatprep.subr.mxu0 0.0
        %1579 = vmatpush1.xpose.msra.mxu0 0.0
        %1580 = vmatprep.subr.mxu0 0.0
        %1581 = vmatpush1.xpose.msra.mxu0 0.0
        %1582 = vmatprep.subr.mxu0 0.0
        %v1583 = vand.u32 %v1556, 4294901760
        %1584 = vmatpush1.xpose.msra.mxu0 %v1583
        %1585 = vmatprep.subr.mxu0 0.0
        %v1586 = vand.u32 %v1553, 4294901760
        %1587 = vmatpush1.xpose.msra.mxu0 %v1586
        %1588 = vmatprep.subr.mxu0 0.0
        %v1589 = vand.u32 %v1550, 4294901760
        %1590 = vmatpush1.xpose.msra.mxu0 %v1589
        %1591 = vmatprep.subr.mxu0 0.0
        %v1592 = vand.u32 %v1547, 4294901760
        %1593 = vmatpush1.xpose.msra.mxu0 %v1592
        %1594 = vmatprep.subr.mxu0 0.0
        %1595 = vmatpush2.xpose.msra.mxu0 0.0
        %1596 = vmatprep.subr.mxu0 0.0
        %1597 = vmatpush2.xpose.msra.mxu0 0.0
        %1598 = vmatprep.subr.mxu0 0.0
        %1599 = vmatpush2.xpose.msra.mxu0 0.0
        %1600 = vmatprep.subr.mxu0 0.0
        %1601 = vmatpush2.xpose.msra.mxu0 0.0
        %1602 = vmatprep.subr.mxu0 0.0
        %1603 = vmatpush2.xpose.msra.mxu0 0.0
        %1604 = vmatprep.subr.mxu0 0.0
        %1605 = vmatpush2.xpose.msra.mxu0 0.0
        %1606 = vmatprep.subr.mxu0 0.0
        %1607 = vmatpush2.xpose.msra.mxu0 0.0
        %1608 = vmatprep.subr.mxu0 0.0
        %1609 = vmatpush2.xpose.msra.mxu0 0.0
        %1610 = vmatprep.subr.mxu0 0.0
        %1611 = vmatpush2.xpose.msra.mxu0 0.0
        %1612 = vmatprep.subr.mxu0 0.0
        %1613 = vmatpush2.xpose.msra.mxu0 0.0
        %1614 = vmatprep.subr.mxu0 0.0
        %1615 = vmatpush2.xpose.msra.mxu0 0.0
        %1616 = vmatprep.subr.mxu0 0.0
        %1617 = vmatpush2.xpose.msra.mxu0 0.0
        %1618 = vmatprep.subr.mxu0 0.0
        %1619 = vmatpush2.xpose.msra.mxu0 0.0
        %1620 = vmatprep.subr.mxu0 0.0
        %1621 = vmatpush2.xpose.msra.mxu0 0.0
        %1622 = vmatprep.subr.mxu0 0.0
        %1623 = vmatpush2.xpose.msra.mxu0 0.0
        %1624 = vmatprep.subr.mxu0 0.0
        %1625 = vmatpush2.xpose.msra.mxu0 0.0
        %1626 = vmatprep.mubr.f32.mxu0 0.0
        %v1627 = vand.u32 %v1541, 4294901760
        %v1628 = vsub.f32 %v1541, %v1627
        %v1629 = vand.u32 %v1628, 4294901760
        %v1630 = vsub.f32 %v1628, %v1629
        %v1631 = vand.u32 %v1630, 4294901760
        %1632 = vmatmul.mubr.f32.gmra.mxu0 %v1631
        %v1633 = vpop.f32.mrf.mxu0
        %v1634 = vadd.f32 %v1538, %v1633
        %v1635 = vpop.f32.mrf.mxu0
        %1636 = vmatprep.mubr.f32.mxu0 0.0
        %v1637 = vand.u32 %v1544, 4294901760
        %v1638 = vsub.f32 %v1544, %v1637
        %v1639 = vand.u32 %v1638, 4294901760
        %v1640 = vsub.f32 %v1638, %v1639
        %v1641 = vand.u32 %v1640, 4294901760
        %1642 = vmatmul.mubr.f32.gmra.mxu0 %v1641
        %v1643 = vpop.f32.mrf.mxu0
        %v1644 = vadd.f32 %v1538, %v1643
        %v1645 = vpop.f32.mrf.mxu0
        %1646 = vdwg.mxu0
        %1647 = vmatprep.subr.mxu0 0.0
        %1648 = vmatpush1.xpose.msra.mxu0 0.0
        %1649 = vmatprep.subr.mxu0 0.0
        %1650 = vmatpush1.xpose.msra.mxu0 0.0
        %1651 = vmatprep.subr.mxu0 0.0
        %1652 = vmatpush1.xpose.msra.mxu0 0.0
        %1653 = vmatprep.subr.mxu0 0.0
        %1654 = vmatpush1.xpose.msra.mxu0 0.0
        %1655 = vmatprep.subr.mxu0 0.0
        %1656 = vmatpush1.xpose.msra.mxu0 0.0
        %1657 = vmatprep.subr.mxu0 0.0
        %1658 = vmatpush1.xpose.msra.mxu0 0.0
        %1659 = vmatprep.subr.mxu0 0.0
        %1660 = vmatpush1.xpose.msra.mxu0 0.0
        %1661 = vmatprep.subr.mxu0 0.0
        %1662 = vmatpush1.xpose.msra.mxu0 0.0
        %1663 = vmatprep.subr.mxu0 0.0
        %1664 = vmatpush1.xpose.msra.mxu0 0.0
        %1665 = vmatprep.subr.mxu0 0.0
        %1666 = vmatpush1.xpose.msra.mxu0 0.0
        %1667 = vmatprep.subr.mxu0 0.0
        %1668 = vmatpush1.xpose.msra.mxu0 0.0
        %1669 = vmatprep.subr.mxu0 0.0
        %1670 = vmatpush1.xpose.msra.mxu0 0.0
        %1671 = vmatprep.subr.mxu0 0.0
        %v1672 = vand.u32 %v1556, 4294901760
        %v1673 = vsub.f32 %v1556, %v1672
        %v1674 = vand.u32 %v1673, 4294901760
        %v1675 = vsub.f32 %v1673, %v1674
        %v1676 = vand.u32 %v1675, 4294901760
        %1677 = vmatpush1.xpose.msra.mxu0 %v1676
        %1678 = vmatprep.subr.mxu0 0.0
        %v1679 = vand.u32 %v1553, 4294901760
        %v1680 = vsub.f32 %v1553, %v1679
        %v1681 = vand.u32 %v1680, 4294901760
        %v1682 = vsub.f32 %v1680, %v1681
        %v1683 = vand.u32 %v1682, 4294901760
        %1684 = vmatpush1.xpose.msra.mxu0 %v1683
        %1685 = vmatprep.subr.mxu0 0.0
        %v1686 = vand.u32 %v1550, 4294901760
        %v1687 = vsub.f32 %v1550, %v1686
        %v1688 = vand.u32 %v1687, 4294901760
        %v1689 = vsub.f32 %v1687, %v1688
        %v1690 = vand.u32 %v1689, 4294901760
        %1691 = vmatpush1.xpose.msra.mxu0 %v1690
        %1692 = vmatprep.subr.mxu0 0.0
        %v1693 = vand.u32 %v1547, 4294901760
        %v1694 = vsub.f32 %v1547, %v1693
        %v1695 = vand.u32 %v1694, 4294901760
        %v1696 = vsub.f32 %v1694, %v1695
        %v1697 = vand.u32 %v1696, 4294901760
        %1698 = vmatpush1.xpose.msra.mxu0 %v1697
        %1699 = vmatprep.subr.mxu0 0.0
        %1700 = vmatpush2.xpose.msra.mxu0 0.0
        %1701 = vmatprep.subr.mxu0 0.0
        %1702 = vmatpush2.xpose.msra.mxu0 0.0
        %1703 = vmatprep.subr.mxu0 0.0
        %1704 = vmatpush2.xpose.msra.mxu0 0.0
        %1705 = vmatprep.subr.mxu0 0.0
        %1706 = vmatpush2.xpose.msra.mxu0 0.0
        %1707 = vmatprep.subr.mxu0 0.0
        %1708 = vmatpush2.xpose.msra.mxu0 0.0
        %1709 = vmatprep.subr.mxu0 0.0
        %1710 = vmatpush2.xpose.msra.mxu0 0.0
        %1711 = vmatprep.subr.mxu0 0.0
        %1712 = vmatpush2.xpose.msra.mxu0 0.0
        %1713 = vmatprep.subr.mxu0 0.0
        %1714 = vmatpush2.xpose.msra.mxu0 0.0
        %1715 = vmatprep.subr.mxu0 0.0
        %1716 = vmatpush2.xpose.msra.mxu0 0.0
        %1717 = vmatprep.subr.mxu0 0.0
        %1718 = vmatpush2.xpose.msra.mxu0 0.0
        %1719 = vmatprep.subr.mxu0 0.0
        %1720 = vmatpush2.xpose.msra.mxu0 0.0
        %1721 = vmatprep.subr.mxu0 0.0
        %1722 = vmatpush2.xpose.msra.mxu0 0.0
        %1723 = vmatprep.subr.mxu0 0.0
        %1724 = vmatpush2.xpose.msra.mxu0 0.0
        %1725 = vmatprep.subr.mxu0 0.0
        %1726 = vmatpush2.xpose.msra.mxu0 0.0
        %1727 = vmatprep.subr.mxu0 0.0
        %1728 = vmatpush2.xpose.msra.mxu0 0.0
        %1729 = vmatprep.subr.mxu0 0.0
        %1730 = vmatpush2.xpose.msra.mxu0 0.0
        %1731 = vmatprep.mubr.f32.mxu0 0.0
        %v1732 = vand.u32 %v1541, 4294901760
        %1733 = vmatmul.mubr.f32.gmra.mxu0 %v1732
        %v1734 = vpop.f32.mrf.mxu0
        %v1735 = vadd.f32 %v1634, %v1734
        %v1736 = vpop.f32.mrf.mxu0
        %1737 = vmatprep.mubr.f32.mxu0 0.0
        %v1738 = vand.u32 %v1544, 4294901760
        %1739 = vmatmul.mubr.f32.gmra.mxu0 %v1738
        %v1740 = vpop.f32.mrf.mxu0
        %v1741 = vadd.f32 %v1644, %v1740
        %v1742 = vpop.f32.mrf.mxu0
        %1743 = vdwg.mxu0
        %1744 = vmatprep.subr.mxu0 0.0
        %1745 = vmatpush1.xpose.msra.mxu0 0.0
        %1746 = vmatprep.subr.mxu0 0.0
        %1747 = vmatpush1.xpose.msra.mxu0 0.0
        %1748 = vmatprep.subr.mxu0 0.0
        %1749 = vmatpush1.xpose.msra.mxu0 0.0
        %1750 = vmatprep.subr.mxu0 0.0
        %1751 = vmatpush1.xpose.msra.mxu0 0.0
        %1752 = vmatprep.subr.mxu0 0.0
        %1753 = vmatpush1.xpose.msra.mxu0 0.0
        %1754 = vmatprep.subr.mxu0 0.0
        %1755 = vmatpush1.xpose.msra.mxu0 0.0
        %1756 = vmatprep.subr.mxu0 0.0
        %1757 = vmatpush1.xpose.msra.mxu0 0.0
        %1758 = vmatprep.subr.mxu0 0.0
        %1759 = vmatpush1.xpose.msra.mxu0 0.0
        %1760 = vmatprep.subr.mxu0 0.0
        %1761 = vmatpush1.xpose.msra.mxu0 0.0
        %1762 = vmatprep.subr.mxu0 0.0
        %1763 = vmatpush1.xpose.msra.mxu0 0.0
        %1764 = vmatprep.subr.mxu0 0.0
        %1765 = vmatpush1.xpose.msra.mxu0 0.0
        %1766 = vmatprep.subr.mxu0 0.0
        %1767 = vmatpush1.xpose.msra.mxu0 0.0
        %1768 = vmatprep.subr.mxu0 0.0
        %v1769 = vand.u32 %v1556, 4294901760
        %v1770 = vsub.f32 %v1556, %v1769
        %1771 = vmatpush1.xpose.msra.mxu0 %v1770
        %1772 = vmatprep.subr.mxu0 0.0
        %v1773 = vand.u32 %v1553, 4294901760
        %v1774 = vsub.f32 %v1553, %v1773
        %1775 = vmatpush1.xpose.msra.mxu0 %v1774
        %1776 = vmatprep.subr.mxu0 0.0
        %v1777 = vand.u32 %v1550, 4294901760
        %v1778 = vsub.f32 %v1550, %v1777
        %1779 = vmatpush1.xpose.msra.mxu0 %v1778
        %1780 = vmatprep.subr.mxu0 0.0
        %v1781 = vand.u32 %v1547, 4294901760
        %v1782 = vsub.f32 %v1547, %v1781
        %1783 = vmatpush1.xpose.msra.mxu0 %v1782
        %1784 = vmatprep.subr.mxu0 0.0
        %1785 = vmatpush2.xpose.msra.mxu0 0.0
        %1786 = vmatprep.subr.mxu0 0.0
        %1787 = vmatpush2.xpose.msra.mxu0 0.0
        %1788 = vmatprep.subr.mxu0 0.0
        %1789 = vmatpush2.xpose.msra.mxu0 0.0
        %1790 = vmatprep.subr.mxu0 0.0
        %1791 = vmatpush2.xpose.msra.mxu0 0.0
        %1792 = vmatprep.subr.mxu0 0.0
        %1793 = vmatpush2.xpose.msra.mxu0 0.0
        %1794 = vmatprep.subr.mxu0 0.0
        %1795 = vmatpush2.xpose.msra.mxu0 0.0
        %1796 = vmatprep.subr.mxu0 0.0
        %1797 = vmatpush2.xpose.msra.mxu0 0.0
        %1798 = vmatprep.subr.mxu0 0.0
        %1799 = vmatpush2.xpose.msra.mxu0 0.0
        %1800 = vmatprep.subr.mxu0 0.0
        %1801 = vmatpush2.xpose.msra.mxu0 0.0
        %1802 = vmatprep.subr.mxu0 0.0
        %1803 = vmatpush2.xpose.msra.mxu0 0.0
        %1804 = vmatprep.subr.mxu0 0.0
        %1805 = vmatpush2.xpose.msra.mxu0 0.0
        %1806 = vmatprep.subr.mxu0 0.0
        %1807 = vmatpush2.xpose.msra.mxu0 0.0
        %1808 = vmatprep.subr.mxu0 0.0
        %1809 = vmatpush2.xpose.msra.mxu0 0.0
        %1810 = vmatprep.subr.mxu0 0.0
        %1811 = vmatpush2.xpose.msra.mxu0 0.0
        %1812 = vmatprep.subr.mxu0 0.0
        %1813 = vmatpush2.xpose.msra.mxu0 0.0
        %1814 = vmatprep.subr.mxu0 0.0
        %1815 = vmatpush2.xpose.msra.mxu0 0.0
        %1816 = vmatprep.mubr.f32.mxu0 0.0
        %v1817 = vand.u32 %v1541, 4294901760
        %v1818 = vsub.f32 %v1541, %v1817
        %1819 = vmatmul.mubr.f32.gmra.mxu0 %v1818
        %v1820 = vpop.f32.mrf.mxu0
        %v1821 = vadd.f32 %v1735, %v1820
        %v1822 = vpop.f32.mrf.mxu0
        %1823 = vmatprep.mubr.f32.mxu0 0.0
        %v1824 = vand.u32 %v1544, 4294901760
        %v1825 = vsub.f32 %v1544, %v1824
        %1826 = vmatmul.mubr.f32.gmra.mxu0 %v1825
        %v1827 = vpop.f32.mrf.mxu0
        %v1828 = vadd.f32 %v1741, %v1827
        %v1829 = vpop.f32.mrf.mxu0
        %1830 = vdwg.mxu0
        %1831 = vmatprep.subr.mxu0 0.0
        %1832 = vmatpush1.xpose.msra.mxu0 0.0
        %1833 = vmatprep.subr.mxu0 0.0
        %1834 = vmatpush1.xpose.msra.mxu0 0.0
        %1835 = vmatprep.subr.mxu0 0.0
        %1836 = vmatpush1.xpose.msra.mxu0 0.0
        %1837 = vmatprep.subr.mxu0 0.0
        %1838 = vmatpush1.xpose.msra.mxu0 0.0
        %1839 = vmatprep.subr.mxu0 0.0
        %1840 = vmatpush1.xpose.msra.mxu0 0.0
        %1841 = vmatprep.subr.mxu0 0.0
        %1842 = vmatpush1.xpose.msra.mxu0 0.0
        %1843 = vmatprep.subr.mxu0 0.0
        %1844 = vmatpush1.xpose.msra.mxu0 0.0
        %1845 = vmatprep.subr.mxu0 0.0
        %1846 = vmatpush1.xpose.msra.mxu0 0.0
        %1847 = vmatprep.subr.mxu0 0.0
        %1848 = vmatpush1.xpose.msra.mxu0 0.0
        %1849 = vmatprep.subr.mxu0 0.0
        %1850 = vmatpush1.xpose.msra.mxu0 0.0
        %1851 = vmatprep.subr.mxu0 0.0
        %1852 = vmatpush1.xpose.msra.mxu0 0.0
        %1853 = vmatprep.subr.mxu0 0.0
        %1854 = vmatpush1.xpose.msra.mxu0 0.0
        %1855 = vmatprep.subr.mxu0 0.0
        %v1856 = vand.u32 %v1556, 4294901760
        %1857 = vmatpush1.xpose.msra.mxu0 %v1856
        %1858 = vmatprep.subr.mxu0 0.0
        %v1859 = vand.u32 %v1553, 4294901760
        %1860 = vmatpush1.xpose.msra.mxu0 %v1859
        %1861 = vmatprep.subr.mxu0 0.0
        %v1862 = vand.u32 %v1550, 4294901760
        %1863 = vmatpush1.xpose.msra.mxu0 %v1862
        %1864 = vmatprep.subr.mxu0 0.0
        %v1865 = vand.u32 %v1547, 4294901760
        %1866 = vmatpush1.xpose.msra.mxu0 %v1865
        %1867 = vmatprep.subr.mxu0 0.0
        %1868 = vmatpush2.xpose.msra.mxu0 0.0
        %1869 = vmatprep.subr.mxu0 0.0
        %1870 = vmatpush2.xpose.msra.mxu0 0.0
        %1871 = vmatprep.subr.mxu0 0.0
        %1872 = vmatpush2.xpose.msra.mxu0 0.0
        %1873 = vmatprep.subr.mxu0 0.0
        %1874 = vmatpush2.xpose.msra.mxu0 0.0
        %1875 = vmatprep.subr.mxu0 0.0
        %1876 = vmatpush2.xpose.msra.mxu0 0.0
        %1877 = vmatprep.subr.mxu0 0.0
        %1878 = vmatpush2.xpose.msra.mxu0 0.0
        %1879 = vmatprep.subr.mxu0 0.0
        %1880 = vmatpush2.xpose.msra.mxu0 0.0
        %1881 = vmatprep.subr.mxu0 0.0
        %1882 = vmatpush2.xpose.msra.mxu0 0.0
        %1883 = vmatprep.subr.mxu0 0.0
        %1884 = vmatpush2.xpose.msra.mxu0 0.0
        %1885 = vmatprep.subr.mxu0 0.0
        %1886 = vmatpush2.xpose.msra.mxu0 0.0
        %1887 = vmatprep.subr.mxu0 0.0
        %1888 = vmatpush2.xpose.msra.mxu0 0.0
        %1889 = vmatprep.subr.mxu0 0.0
        %1890 = vmatpush2.xpose.msra.mxu0 0.0
        %1891 = vmatprep.subr.mxu0 0.0
        %1892 = vmatpush2.xpose.msra.mxu0 0.0
        %1893 = vmatprep.subr.mxu0 0.0
        %1894 = vmatpush2.xpose.msra.mxu0 0.0
        %1895 = vmatprep.subr.mxu0 0.0
        %1896 = vmatpush2.xpose.msra.mxu0 0.0
        %1897 = vmatprep.subr.mxu0 0.0
        %1898 = vmatpush2.xpose.msra.mxu0 0.0
        %1899 = vmatprep.mubr.f32.mxu0 0.0
        %v1900 = vand.u32 %v1541, 4294901760
        %v1901 = vsub.f32 %v1541, %v1900
        %v1902 = vand.u32 %v1901, 4294901760
        %1903 = vmatmul.mubr.f32.gmra.mxu0 %v1902
        %v1904 = vpop.f32.mrf.mxu0
        %v1905 = vadd.f32 %v1821, %v1904
        %v1906 = vpop.f32.mrf.mxu0
        %1907 = vmatprep.mubr.f32.mxu0 0.0
        %v1908 = vand.u32 %v1544, 4294901760
        %v1909 = vsub.f32 %v1544, %v1908
        %v1910 = vand.u32 %v1909, 4294901760
        %1911 = vmatmul.mubr.f32.gmra.mxu0 %v1910
        %v1912 = vpop.f32.mrf.mxu0
        %v1913 = vadd.f32 %v1828, %v1912
        %v1914 = vpop.f32.mrf.mxu0
        %1915 = vdwg.mxu0
        %1916 = vmatprep.subr.mxu0 0.0
        %1917 = vmatpush1.xpose.msra.mxu0 0.0
        %1918 = vmatprep.subr.mxu0 0.0
        %1919 = vmatpush1.xpose.msra.mxu0 0.0
        %1920 = vmatprep.subr.mxu0 0.0
        %1921 = vmatpush1.xpose.msra.mxu0 0.0
        %1922 = vmatprep.subr.mxu0 0.0
        %1923 = vmatpush1.xpose.msra.mxu0 0.0
        %1924 = vmatprep.subr.mxu0 0.0
        %1925 = vmatpush1.xpose.msra.mxu0 0.0
        %1926 = vmatprep.subr.mxu0 0.0
        %1927 = vmatpush1.xpose.msra.mxu0 0.0
        %1928 = vmatprep.subr.mxu0 0.0
        %1929 = vmatpush1.xpose.msra.mxu0 0.0
        %1930 = vmatprep.subr.mxu0 0.0
        %1931 = vmatpush1.xpose.msra.mxu0 0.0
        %1932 = vmatprep.subr.mxu0 0.0
        %1933 = vmatpush1.xpose.msra.mxu0 0.0
        %1934 = vmatprep.subr.mxu0 0.0
        %1935 = vmatpush1.xpose.msra.mxu0 0.0
        %1936 = vmatprep.subr.mxu0 0.0
        %1937 = vmatpush1.xpose.msra.mxu0 0.0
        %1938 = vmatprep.subr.mxu0 0.0
        %1939 = vmatpush1.xpose.msra.mxu0 0.0
        %1940 = vmatprep.subr.mxu0 0.0
        %v1941 = vand.u32 %v1556, 4294901760
        %v1942 = vsub.f32 %v1556, %v1941
        %v1943 = vand.u32 %v1942, 4294901760
        %1944 = vmatpush1.xpose.msra.mxu0 %v1943
        %1945 = vmatprep.subr.mxu0 0.0
        %v1946 = vand.u32 %v1553, 4294901760
        %v1947 = vsub.f32 %v1553, %v1946
        %v1948 = vand.u32 %v1947, 4294901760
        %1949 = vmatpush1.xpose.msra.mxu0 %v1948
        %1950 = vmatprep.subr.mxu0 0.0
        %v1951 = vand.u32 %v1550, 4294901760
        %v1952 = vsub.f32 %v1550, %v1951
        %v1953 = vand.u32 %v1952, 4294901760
        %1954 = vmatpush1.xpose.msra.mxu0 %v1953
        %1955 = vmatprep.subr.mxu0 0.0
        %v1956 = vand.u32 %v1547, 4294901760
        %v1957 = vsub.f32 %v1547, %v1956
        %v1958 = vand.u32 %v1957, 4294901760
        %1959 = vmatpush1.xpose.msra.mxu0 %v1958
        %1960 = vmatprep.subr.mxu0 0.0
        %1961 = vmatpush2.xpose.msra.mxu0 0.0
        %1962 = vmatprep.subr.mxu0 0.0
        %1963 = vmatpush2.xpose.msra.mxu0 0.0
        %1964 = vmatprep.subr.mxu0 0.0
        %1965 = vmatpush2.xpose.msra.mxu0 0.0
        %1966 = vmatprep.subr.mxu0 0.0
        %1967 = vmatpush2.xpose.msra.mxu0 0.0
        %1968 = vmatprep.subr.mxu0 0.0
        %1969 = vmatpush2.xpose.msra.mxu0 0.0
        %1970 = vmatprep.subr.mxu0 0.0
        %1971 = vmatpush2.xpose.msra.mxu0 0.0
        %1972 = vmatprep.subr.mxu0 0.0
        %1973 = vmatpush2.xpose.msra.mxu0 0.0
        %1974 = vmatprep.subr.mxu0 0.0
        %1975 = vmatpush2.xpose.msra.mxu0 0.0
        %1976 = vmatprep.subr.mxu0 0.0
        %1977 = vmatpush2.xpose.msra.mxu0 0.0
        %1978 = vmatprep.subr.mxu0 0.0
        %1979 = vmatpush2.xpose.msra.mxu0 0.0
        %1980 = vmatprep.subr.mxu0 0.0
        %1981 = vmatpush2.xpose.msra.mxu0 0.0
        %1982 = vmatprep.subr.mxu0 0.0
        %1983 = vmatpush2.xpose.msra.mxu0 0.0
        %1984 = vmatprep.subr.mxu0 0.0
        %1985 = vmatpush2.xpose.msra.mxu0 0.0
        %1986 = vmatprep.subr.mxu0 0.0
        %1987 = vmatpush2.xpose.msra.mxu0 0.0
        %1988 = vmatprep.subr.mxu0 0.0
        %1989 = vmatpush2.xpose.msra.mxu0 0.0
        %1990 = vmatprep.subr.mxu0 0.0
        %1991 = vmatpush2.xpose.msra.mxu0 0.0
        %1992 = vmatprep.mubr.f32.mxu0 0.0
        %v1993 = vand.u32 %v1541, 4294901760
        %1994 = vmatmul.mubr.f32.gmra.mxu0 %v1993
        %v1995 = vpop.f32.mrf.mxu0
        %v1996 = vadd.f32 %v1905, %v1995
        %v1997 = vpop.f32.mrf.mxu0
        %1998 = vmatprep.mubr.f32.mxu0 0.0
        %v1999 = vand.u32 %v1544, 4294901760
        %2000 = vmatmul.mubr.f32.gmra.mxu0 %v1999
        %v2001 = vpop.f32.mrf.mxu0
        %v2002 = vadd.f32 %v1913, %v2001
        %v2003 = vpop.f32.mrf.mxu0
        %2004 = vdwg.mxu0
        %2005 = vmatprep.subr.mxu0 0.0
        %2006 = vmatpush1.xpose.msra.mxu0 0.0
        %2007 = vmatprep.subr.mxu0 0.0
        %2008 = vmatpush1.xpose.msra.mxu0 0.0
        %2009 = vmatprep.subr.mxu0 0.0
        %2010 = vmatpush1.xpose.msra.mxu0 0.0
        %2011 = vmatprep.subr.mxu0 0.0
        %2012 = vmatpush1.xpose.msra.mxu0 0.0
        %2013 = vmatprep.subr.mxu0 0.0
        %2014 = vmatpush1.xpose.msra.mxu0 0.0
        %2015 = vmatprep.subr.mxu0 0.0
        %2016 = vmatpush1.xpose.msra.mxu0 0.0
        %2017 = vmatprep.subr.mxu0 0.0
        %2018 = vmatpush1.xpose.msra.mxu0 0.0
        %2019 = vmatprep.subr.mxu0 0.0
        %2020 = vmatpush1.xpose.msra.mxu0 0.0
        %2021 = vmatprep.subr.mxu0 0.0
        %2022 = vmatpush1.xpose.msra.mxu0 0.0
        %2023 = vmatprep.subr.mxu0 0.0
        %2024 = vmatpush1.xpose.msra.mxu0 0.0
        %2025 = vmatprep.subr.mxu0 0.0
        %2026 = vmatpush1.xpose.msra.mxu0 0.0
        %2027 = vmatprep.subr.mxu0 0.0
        %2028 = vmatpush1.xpose.msra.mxu0 0.0
        %2029 = vmatprep.subr.mxu0 0.0
        %v2030 = vand.u32 %v1556, 4294901760
        %2031 = vmatpush1.xpose.msra.mxu0 %v2030
        %2032 = vmatprep.subr.mxu0 0.0
        %v2033 = vand.u32 %v1553, 4294901760
        %2034 = vmatpush1.xpose.msra.mxu0 %v2033
        %2035 = vmatprep.subr.mxu0 0.0
        %v2036 = vand.u32 %v1550, 4294901760
        %2037 = vmatpush1.xpose.msra.mxu0 %v2036
        %2038 = vmatprep.subr.mxu0 0.0
        %v2039 = vand.u32 %v1547, 4294901760
        %2040 = vmatpush1.xpose.msra.mxu0 %v2039
        %2041 = vmatprep.subr.mxu0 0.0
        %2042 = vmatpush2.xpose.msra.mxu0 0.0
        %2043 = vmatprep.subr.mxu0 0.0
        %2044 = vmatpush2.xpose.msra.mxu0 0.0
        %2045 = vmatprep.subr.mxu0 0.0
        %2046 = vmatpush2.xpose.msra.mxu0 0.0
        %2047 = vmatprep.subr.mxu0 0.0
        %2048 = vmatpush2.xpose.msra.mxu0 0.0
        %2049 = vmatprep.subr.mxu0 0.0
        %2050 = vmatpush2.xpose.msra.mxu0 0.0
        %2051 = vmatprep.subr.mxu0 0.0
        %2052 = vmatpush2.xpose.msra.mxu0 0.0
        %2053 = vmatprep.subr.mxu0 0.0
        %2054 = vmatpush2.xpose.msra.mxu0 0.0
        %2055 = vmatprep.subr.mxu0 0.0
        %2056 = vmatpush2.xpose.msra.mxu0 0.0
        %2057 = vmatprep.subr.mxu0 0.0
        %2058 = vmatpush2.xpose.msra.mxu0 0.0
        %2059 = vmatprep.subr.mxu0 0.0
        %2060 = vmatpush2.xpose.msra.mxu0 0.0
        %2061 = vmatprep.subr.mxu0 0.0
        %2062 = vmatpush2.xpose.msra.mxu0 0.0
        %2063 = vmatprep.subr.mxu0 0.0
        %2064 = vmatpush2.xpose.msra.mxu0 0.0
        %2065 = vmatprep.subr.mxu0 0.0
        %2066 = vmatpush2.xpose.msra.mxu0 0.0
        %2067 = vmatprep.subr.mxu0 0.0
        %2068 = vmatpush2.xpose.msra.mxu0 0.0
        %2069 = vmatprep.subr.mxu0 0.0
        %2070 = vmatpush2.xpose.msra.mxu0 0.0
        %2071 = vmatprep.subr.mxu0 0.0
        %2072 = vmatpush2.xpose.msra.mxu0 0.0
        %2073 = vmatprep.mubr.f32.mxu0 0.0
        %v2074 = vand.u32 %v1541, 4294901760
        %2075 = vmatmul.mubr.f32.gmra.mxu0 %v2074
        %v2076 = vpop.f32.mrf.mxu0
        %v2077 = vadd.f32 %v1996, %v2076
        %v2078 = vpop.f32.mrf.mxu0
        %2079 = vmatprep.mubr.f32.mxu0 0.0
        %v2080 = vand.u32 %v1544, 4294901760
        %2081 = vmatmul.mubr.f32.gmra.mxu0 %v2080
        %v2082 = vpop.f32.mrf.mxu0
        %v2083 = vadd.f32 %v2002, %v2082
        %v2084 = vpop.f32.mrf.mxu0
        %2085 = vdwg.mxu0
        %2088 = vrot.lane.b32.xlu0 %v2077, 112
        %v2089 = vpop.permute.xlu0 %2088
        %2090 = vrot.lane.b32.xlu0 %v2083, 112
        %v2091 = vpop.permute.xlu0 %2090
        %v2092 = vsel %vm1489, %v2077, 0
        %v2094 = vsel %vm1489, %v2083, 0
        %v2096 = vsel %vm1489, %v2089, 0
        %v2098 = vsel %vm1489, %v2091, 0
        %2100 = vmatprep.subr.mxu0 0.0
        %2101 = vmatpush1.xpose.msra.mxu0 0.0
        %2102 = vmatprep.subr.mxu0 0.0
        %2103 = vmatpush1.xpose.msra.mxu0 0.0
        %2104 = vmatprep.subr.mxu0 0.0
        %2105 = vmatpush1.xpose.msra.mxu0 0.0
        %2106 = vmatprep.subr.mxu0 0.0
        %2107 = vmatpush1.xpose.msra.mxu0 0.0
        %2108 = vmatprep.subr.mxu0 0.0
        %2109 = vmatpush1.xpose.msra.mxu0 0.0
        %2110 = vmatprep.subr.mxu0 0.0
        %2111 = vmatpush1.xpose.msra.mxu0 0.0
        %2112 = vmatprep.subr.mxu0 0.0
        %2113 = vmatpush1.xpose.msra.mxu0 0.0
        %2114 = vmatprep.subr.mxu0 0.0
        %2115 = vmatpush1.xpose.msra.mxu0 0.0
        %2116 = vmatprep.subr.mxu0 0.0
        %2117 = vmatpush1.xpose.msra.mxu0 0.0
        %2118 = vmatprep.subr.mxu0 0.0
        %2119 = vmatpush1.xpose.msra.mxu0 0.0
        %2120 = vmatprep.subr.mxu0 0.0
        %2121 = vmatpush1.xpose.msra.mxu0 0.0
        %2122 = vmatprep.subr.mxu0 0.0
        %2123 = vmatpush1.xpose.msra.mxu0 0.0
        %2124 = vmatprep.subr.mxu0 0.0
        %2125 = vmatpush1.xpose.msra.mxu0 0.0
        %2126 = vmatprep.subr.mxu0 0.0
        %2127 = vmatpush1.xpose.msra.mxu0 0.0
        %2128 = vmatprep.subr.mxu0 0.0
        %v2129 = vand.u32 %v2098, 4294901760
        %2130 = vmatpush1.xpose.msra.mxu0 %v2129
        %2131 = vmatprep.subr.mxu0 0.0
        %v2132 = vand.u32 %v2096, 4294901760
        %2133 = vmatpush1.xpose.msra.mxu0 %v2132
        %2134 = vmatprep.subr.mxu0 0.0
        %2135 = vmatpush2.xpose.msra.mxu0 0.0
        %2136 = vmatprep.subr.mxu0 0.0
        %2137 = vmatpush2.xpose.msra.mxu0 0.0
        %2138 = vmatprep.subr.mxu0 0.0
        %2139 = vmatpush2.xpose.msra.mxu0 0.0
        %2140 = vmatprep.subr.mxu0 0.0
        %2141 = vmatpush2.xpose.msra.mxu0 0.0
        %2142 = vmatprep.subr.mxu0 0.0
        %2143 = vmatpush2.xpose.msra.mxu0 0.0
        %2144 = vmatprep.subr.mxu0 0.0
        %2145 = vmatpush2.xpose.msra.mxu0 0.0
        %2146 = vmatprep.subr.mxu0 0.0
        %2147 = vmatpush2.xpose.msra.mxu0 0.0
        %2148 = vmatprep.subr.mxu0 0.0
        %2149 = vmatpush2.xpose.msra.mxu0 0.0
        %2150 = vmatprep.subr.mxu0 0.0
        %2151 = vmatpush2.xpose.msra.mxu0 0.0
        %2152 = vmatprep.subr.mxu0 0.0
        %2153 = vmatpush2.xpose.msra.mxu0 0.0
        %2154 = vmatprep.subr.mxu0 0.0
        %2155 = vmatpush2.xpose.msra.mxu0 0.0
        %2156 = vmatprep.subr.mxu0 0.0
        %2157 = vmatpush2.xpose.msra.mxu0 0.0
        %2158 = vmatprep.subr.mxu0 0.0
        %2159 = vmatpush2.xpose.msra.mxu0 0.0
        %2160 = vmatprep.subr.mxu0 0.0
        %2161 = vmatpush2.xpose.msra.mxu0 0.0
        %2162 = vmatprep.subr.mxu0 0.0
        %2163 = vmatpush2.xpose.msra.mxu0 0.0
        %2164 = vmatprep.subr.mxu0 0.0
        %2165 = vmatpush2.xpose.msra.mxu0 0.0
        %2166 = vmatprep.mubr.f32.mxu0 0.0
        %v2167 = vand.u32 %v2092, 4294901760
        %v2168 = vsub.f32 %v2092, %v2167
        %v2169 = vand.u32 %v2168, 4294901760
        %v2170 = vsub.f32 %v2168, %v2169
        %v2171 = vand.u32 %v2170, 4294901760
        %2172 = vmatmul.mubr.f32.gmra.mxu0 %v2171
        %v2173 = vpop.f32.mrf.mxu0
        %v2174 = vadd.f32 0.0, %v2173
        %v2175 = vpop.f32.mrf.mxu0
        %2176 = vmatprep.mubr.f32.mxu0 0.0
        %v2177 = vand.u32 %v2094, 4294901760
        %v2178 = vsub.f32 %v2094, %v2177
        %v2179 = vand.u32 %v2178, 4294901760
        %v2180 = vsub.f32 %v2178, %v2179
        %v2181 = vand.u32 %v2180, 4294901760
        %2182 = vmatmul.mubr.f32.gmra.mxu0 %v2181
        %v2183 = vpop.f32.mrf.mxu0
        %v2184 = vadd.f32 0.0, %v2183
        %v2185 = vpop.f32.mrf.mxu0
        %2186 = vdwg.mxu0
        %2187 = vmatprep.subr.mxu0 0.0
        %2188 = vmatpush1.xpose.msra.mxu0 0.0
        %2189 = vmatprep.subr.mxu0 0.0
        %2190 = vmatpush1.xpose.msra.mxu0 0.0
        %2191 = vmatprep.subr.mxu0 0.0
        %2192 = vmatpush1.xpose.msra.mxu0 0.0
        %2193 = vmatprep.subr.mxu0 0.0
        %2194 = vmatpush1.xpose.msra.mxu0 0.0
        %2195 = vmatprep.subr.mxu0 0.0
        %2196 = vmatpush1.xpose.msra.mxu0 0.0
        %2197 = vmatprep.subr.mxu0 0.0
        %2198 = vmatpush1.xpose.msra.mxu0 0.0
        %2199 = vmatprep.subr.mxu0 0.0
        %2200 = vmatpush1.xpose.msra.mxu0 0.0
        %2201 = vmatprep.subr.mxu0 0.0
        %2202 = vmatpush1.xpose.msra.mxu0 0.0
        %2203 = vmatprep.subr.mxu0 0.0
        %2204 = vmatpush1.xpose.msra.mxu0 0.0
        %2205 = vmatprep.subr.mxu0 0.0
        %2206 = vmatpush1.xpose.msra.mxu0 0.0
        %2207 = vmatprep.subr.mxu0 0.0
        %2208 = vmatpush1.xpose.msra.mxu0 0.0
        %2209 = vmatprep.subr.mxu0 0.0
        %2210 = vmatpush1.xpose.msra.mxu0 0.0
        %2211 = vmatprep.subr.mxu0 0.0
        %2212 = vmatpush1.xpose.msra.mxu0 0.0
        %2213 = vmatprep.subr.mxu0 0.0
        %2214 = vmatpush1.xpose.msra.mxu0 0.0
        %2215 = vmatprep.subr.mxu0 0.0
        %v2216 = vand.u32 %v2098, 4294901760
        %v2217 = vsub.f32 %v2098, %v2216
        %v2218 = vand.u32 %v2217, 4294901760
        %v2219 = vsub.f32 %v2217, %v2218
        %v2220 = vand.u32 %v2219, 4294901760
        %2221 = vmatpush1.xpose.msra.mxu0 %v2220
        %2222 = vmatprep.subr.mxu0 0.0
        %v2223 = vand.u32 %v2096, 4294901760
        %v2224 = vsub.f32 %v2096, %v2223
        %v2225 = vand.u32 %v2224, 4294901760
        %v2226 = vsub.f32 %v2224, %v2225
        %v2227 = vand.u32 %v2226, 4294901760
        %2228 = vmatpush1.xpose.msra.mxu0 %v2227
        %2229 = vmatprep.subr.mxu0 0.0
        %2230 = vmatpush2.xpose.msra.mxu0 0.0
        %2231 = vmatprep.subr.mxu0 0.0
        %2232 = vmatpush2.xpose.msra.mxu0 0.0
        %2233 = vmatprep.subr.mxu0 0.0
        %2234 = vmatpush2.xpose.msra.mxu0 0.0
        %2235 = vmatprep.subr.mxu0 0.0
        %2236 = vmatpush2.xpose.msra.mxu0 0.0
        %2237 = vmatprep.subr.mxu0 0.0
        %2238 = vmatpush2.xpose.msra.mxu0 0.0
        %2239 = vmatprep.subr.mxu0 0.0
        %2240 = vmatpush2.xpose.msra.mxu0 0.0
        %2241 = vmatprep.subr.mxu0 0.0
        %2242 = vmatpush2.xpose.msra.mxu0 0.0
        %2243 = vmatprep.subr.mxu0 0.0
        %2244 = vmatpush2.xpose.msra.mxu0 0.0
        %2245 = vmatprep.subr.mxu0 0.0
        %2246 = vmatpush2.xpose.msra.mxu0 0.0
        %2247 = vmatprep.subr.mxu0 0.0
        %2248 = vmatpush2.xpose.msra.mxu0 0.0
        %2249 = vmatprep.subr.mxu0 0.0
        %2250 = vmatpush2.xpose.msra.mxu0 0.0
        %2251 = vmatprep.subr.mxu0 0.0
        %2252 = vmatpush2.xpose.msra.mxu0 0.0
        %2253 = vmatprep.subr.mxu0 0.0
        %2254 = vmatpush2.xpose.msra.mxu0 0.0
        %2255 = vmatprep.subr.mxu0 0.0
        %2256 = vmatpush2.xpose.msra.mxu0 0.0
        %2257 = vmatprep.subr.mxu0 0.0
        %2258 = vmatpush2.xpose.msra.mxu0 0.0
        %2259 = vmatprep.subr.mxu0 0.0
        %2260 = vmatpush2.xpose.msra.mxu0 0.0
        %2261 = vmatprep.mubr.f32.mxu0 0.0
        %v2262 = vand.u32 %v2092, 4294901760
        %2263 = vmatmul.mubr.f32.gmra.mxu0 %v2262
        %v2264 = vpop.f32.mrf.mxu0
        %v2265 = vadd.f32 %v2174, %v2264
        %v2266 = vpop.f32.mrf.mxu0
        %2267 = vmatprep.mubr.f32.mxu0 0.0
        %v2268 = vand.u32 %v2094, 4294901760
        %2269 = vmatmul.mubr.f32.gmra.mxu0 %v2268
        %v2270 = vpop.f32.mrf.mxu0
        %v2271 = vadd.f32 %v2184, %v2270
        %v2272 = vpop.f32.mrf.mxu0
        %2273 = vdwg.mxu0
        %2274 = vmatprep.subr.mxu0 0.0
        %2275 = vmatpush1.xpose.msra.mxu0 0.0
        %2276 = vmatprep.subr.mxu0 0.0
        %2277 = vmatpush1.xpose.msra.mxu0 0.0
        %2278 = vmatprep.subr.mxu0 0.0
        %2279 = vmatpush1.xpose.msra.mxu0 0.0
        %2280 = vmatprep.subr.mxu0 0.0
        %2281 = vmatpush1.xpose.msra.mxu0 0.0
        %2282 = vmatprep.subr.mxu0 0.0
        %2283 = vmatpush1.xpose.msra.mxu0 0.0
        %2284 = vmatprep.subr.mxu0 0.0
        %2285 = vmatpush1.xpose.msra.mxu0 0.0
        %2286 = vmatprep.subr.mxu0 0.0
        %2287 = vmatpush1.xpose.msra.mxu0 0.0
        %2288 = vmatprep.subr.mxu0 0.0
        %2289 = vmatpush1.xpose.msra.mxu0 0.0
        %2290 = vmatprep.subr.mxu0 0.0
        %2291 = vmatpush1.xpose.msra.mxu0 0.0
        %2292 = vmatprep.subr.mxu0 0.0
        %2293 = vmatpush1.xpose.msra.mxu0 0.0
        %2294 = vmatprep.subr.mxu0 0.0
        %2295 = vmatpush1.xpose.msra.mxu0 0.0
        %2296 = vmatprep.subr.mxu0 0.0
        %2297 = vmatpush1.xpose.msra.mxu0 0.0
        %2298 = vmatprep.subr.mxu0 0.0
        %2299 = vmatpush1.xpose.msra.mxu0 0.0
        %2300 = vmatprep.subr.mxu0 0.0
        %2301 = vmatpush1.xpose.msra.mxu0 0.0
        %2302 = vmatprep.subr.mxu0 0.0
        %v2303 = vand.u32 %v2098, 4294901760
        %v2304 = vsub.f32 %v2098, %v2303
        %2305 = vmatpush1.xpose.msra.mxu0 %v2304
        %2306 = vmatprep.subr.mxu0 0.0
        %v2307 = vand.u32 %v2096, 4294901760
        %v2308 = vsub.f32 %v2096, %v2307
        %2309 = vmatpush1.xpose.msra.mxu0 %v2308
        %2310 = vmatprep.subr.mxu0 0.0
        %2311 = vmatpush2.xpose.msra.mxu0 0.0
        %2312 = vmatprep.subr.mxu0 0.0
        %2313 = vmatpush2.xpose.msra.mxu0 0.0
        %2314 = vmatprep.subr.mxu0 0.0
        %2315 = vmatpush2.xpose.msra.mxu0 0.0
        %2316 = vmatprep.subr.mxu0 0.0
        %2317 = vmatpush2.xpose.msra.mxu0 0.0
        %2318 = vmatprep.subr.mxu0 0.0
        %2319 = vmatpush2.xpose.msra.mxu0 0.0
        %2320 = vmatprep.subr.mxu0 0.0
        %2321 = vmatpush2.xpose.msra.mxu0 0.0
        %2322 = vmatprep.subr.mxu0 0.0
        %2323 = vmatpush2.xpose.msra.mxu0 0.0
        %2324 = vmatprep.subr.mxu0 0.0
        %2325 = vmatpush2.xpose.msra.mxu0 0.0
        %2326 = vmatprep.subr.mxu0 0.0
        %2327 = vmatpush2.xpose.msra.mxu0 0.0
        %2328 = vmatprep.subr.mxu0 0.0
        %2329 = vmatpush2.xpose.msra.mxu0 0.0
        %2330 = vmatprep.subr.mxu0 0.0
        %2331 = vmatpush2.xpose.msra.mxu0 0.0
        %2332 = vmatprep.subr.mxu0 0.0
        %2333 = vmatpush2.xpose.msra.mxu0 0.0
        %2334 = vmatprep.subr.mxu0 0.0
        %2335 = vmatpush2.xpose.msra.mxu0 0.0
        %2336 = vmatprep.subr.mxu0 0.0
        %2337 = vmatpush2.xpose.msra.mxu0 0.0
        %2338 = vmatprep.subr.mxu0 0.0
        %2339 = vmatpush2.xpose.msra.mxu0 0.0
        %2340 = vmatprep.subr.mxu0 0.0
        %2341 = vmatpush2.xpose.msra.mxu0 0.0
        %2342 = vmatprep.mubr.f32.mxu0 0.0
        %v2343 = vand.u32 %v2092, 4294901760
        %v2344 = vsub.f32 %v2092, %v2343
        %2345 = vmatmul.mubr.f32.gmra.mxu0 %v2344
        %v2346 = vpop.f32.mrf.mxu0
        %v2347 = vadd.f32 %v2265, %v2346
        %v2348 = vpop.f32.mrf.mxu0
        %2349 = vmatprep.mubr.f32.mxu0 0.0
        %v2350 = vand.u32 %v2094, 4294901760
        %v2351 = vsub.f32 %v2094, %v2350
        %2352 = vmatmul.mubr.f32.gmra.mxu0 %v2351
        %v2353 = vpop.f32.mrf.mxu0
        %v2354 = vadd.f32 %v2271, %v2353
        %v2355 = vpop.f32.mrf.mxu0
        %2356 = vdwg.mxu0
        %2357 = vmatprep.subr.mxu0 0.0
        %2358 = vmatpush1.xpose.msra.mxu0 0.0
        %2359 = vmatprep.subr.mxu0 0.0
        %2360 = vmatpush1.xpose.msra.mxu0 0.0
        %2361 = vmatprep.subr.mxu0 0.0
        %2362 = vmatpush1.xpose.msra.mxu0 0.0
        %2363 = vmatprep.subr.mxu0 0.0
        %2364 = vmatpush1.xpose.msra.mxu0 0.0
        %2365 = vmatprep.subr.mxu0 0.0
        %2366 = vmatpush1.xpose.msra.mxu0 0.0
        %2367 = vmatprep.subr.mxu0 0.0
        %2368 = vmatpush1.xpose.msra.mxu0 0.0
        %2369 = vmatprep.subr.mxu0 0.0
        %2370 = vmatpush1.xpose.msra.mxu0 0.0
        %2371 = vmatprep.subr.mxu0 0.0
        %2372 = vmatpush1.xpose.msra.mxu0 0.0
        %2373 = vmatprep.subr.mxu0 0.0
        %2374 = vmatpush1.xpose.msra.mxu0 0.0
        %2375 = vmatprep.subr.mxu0 0.0
        %2376 = vmatpush1.xpose.msra.mxu0 0.0
        %2377 = vmatprep.subr.mxu0 0.0
        %2378 = vmatpush1.xpose.msra.mxu0 0.0
        %2379 = vmatprep.subr.mxu0 0.0
        %2380 = vmatpush1.xpose.msra.mxu0 0.0
        %2381 = vmatprep.subr.mxu0 0.0
        %2382 = vmatpush1.xpose.msra.mxu0 0.0
        %2383 = vmatprep.subr.mxu0 0.0
        %2384 = vmatpush1.xpose.msra.mxu0 0.0
        %2385 = vmatprep.subr.mxu0 0.0
        %v2386 = vand.u32 %v2098, 4294901760
        %2387 = vmatpush1.xpose.msra.mxu0 %v2386
        %2388 = vmatprep.subr.mxu0 0.0
        %v2389 = vand.u32 %v2096, 4294901760
        %2390 = vmatpush1.xpose.msra.mxu0 %v2389
        %2391 = vmatprep.subr.mxu0 0.0
        %2392 = vmatpush2.xpose.msra.mxu0 0.0
        %2393 = vmatprep.subr.mxu0 0.0
        %2394 = vmatpush2.xpose.msra.mxu0 0.0
        %2395 = vmatprep.subr.mxu0 0.0
        %2396 = vmatpush2.xpose.msra.mxu0 0.0
        %2397 = vmatprep.subr.mxu0 0.0
        %2398 = vmatpush2.xpose.msra.mxu0 0.0
        %2399 = vmatprep.subr.mxu0 0.0
        %2400 = vmatpush2.xpose.msra.mxu0 0.0
        %2401 = vmatprep.subr.mxu0 0.0
        %2402 = vmatpush2.xpose.msra.mxu0 0.0
        %2403 = vmatprep.subr.mxu0 0.0
        %2404 = vmatpush2.xpose.msra.mxu0 0.0
        %2405 = vmatprep.subr.mxu0 0.0
        %2406 = vmatpush2.xpose.msra.mxu0 0.0
        %2407 = vmatprep.subr.mxu0 0.0
        %2408 = vmatpush2.xpose.msra.mxu0 0.0
        %2409 = vmatprep.subr.mxu0 0.0
        %2410 = vmatpush2.xpose.msra.mxu0 0.0
        %2411 = vmatprep.subr.mxu0 0.0
        %2412 = vmatpush2.xpose.msra.mxu0 0.0
        %2413 = vmatprep.subr.mxu0 0.0
        %2414 = vmatpush2.xpose.msra.mxu0 0.0
        %2415 = vmatprep.subr.mxu0 0.0
        %2416 = vmatpush2.xpose.msra.mxu0 0.0
        %2417 = vmatprep.subr.mxu0 0.0
        %2418 = vmatpush2.xpose.msra.mxu0 0.0
        %2419 = vmatprep.subr.mxu0 0.0
        %2420 = vmatpush2.xpose.msra.mxu0 0.0
        %2421 = vmatprep.subr.mxu0 0.0
        %2422 = vmatpush2.xpose.msra.mxu0 0.0
        %2423 = vmatprep.mubr.f32.mxu0 0.0
        %v2424 = vand.u32 %v2092, 4294901760
        %v2425 = vsub.f32 %v2092, %v2424
        %v2426 = vand.u32 %v2425, 4294901760
        %2427 = vmatmul.mubr.f32.gmra.mxu0 %v2426
        %v2428 = vpop.f32.mrf.mxu0
        %v2429 = vadd.f32 %v2347, %v2428
        %v2430 = vpop.f32.mrf.mxu0
        %2431 = vmatprep.mubr.f32.mxu0 0.0
        %v2432 = vand.u32 %v2094, 4294901760
        %v2433 = vsub.f32 %v2094, %v2432
        %v2434 = vand.u32 %v2433, 4294901760
        %2435 = vmatmul.mubr.f32.gmra.mxu0 %v2434
        %v2436 = vpop.f32.mrf.mxu0
        %v2437 = vadd.f32 %v2354, %v2436
        %v2438 = vpop.f32.mrf.mxu0
        %2439 = vdwg.mxu0
        %2440 = vmatprep.subr.mxu0 0.0
        %2441 = vmatpush1.xpose.msra.mxu0 0.0
        %2442 = vmatprep.subr.mxu0 0.0
        %2443 = vmatpush1.xpose.msra.mxu0 0.0
        %2444 = vmatprep.subr.mxu0 0.0
        %2445 = vmatpush1.xpose.msra.mxu0 0.0
        %2446 = vmatprep.subr.mxu0 0.0
        %2447 = vmatpush1.xpose.msra.mxu0 0.0
        %2448 = vmatprep.subr.mxu0 0.0
        %2449 = vmatpush1.xpose.msra.mxu0 0.0
        %2450 = vmatprep.subr.mxu0 0.0
        %2451 = vmatpush1.xpose.msra.mxu0 0.0
        %2452 = vmatprep.subr.mxu0 0.0
        %2453 = vmatpush1.xpose.msra.mxu0 0.0
        %2454 = vmatprep.subr.mxu0 0.0
        %2455 = vmatpush1.xpose.msra.mxu0 0.0
        %2456 = vmatprep.subr.mxu0 0.0
        %2457 = vmatpush1.xpose.msra.mxu0 0.0
        %2458 = vmatprep.subr.mxu0 0.0
        %2459 = vmatpush1.xpose.msra.mxu0 0.0
        %2460 = vmatprep.subr.mxu0 0.0
        %2461 = vmatpush1.xpose.msra.mxu0 0.0
        %2462 = vmatprep.subr.mxu0 0.0
        %2463 = vmatpush1.xpose.msra.mxu0 0.0
        %2464 = vmatprep.subr.mxu0 0.0
        %2465 = vmatpush1.xpose.msra.mxu0 0.0
        %2466 = vmatprep.subr.mxu0 0.0
        %2467 = vmatpush1.xpose.msra.mxu0 0.0
        %2468 = vmatprep.subr.mxu0 0.0
        %v2469 = vand.u32 %v2098, 4294901760
        %v2470 = vsub.f32 %v2098, %v2469
        %v2471 = vand.u32 %v2470, 4294901760
        %2472 = vmatpush1.xpose.msra.mxu0 %v2471
        %2473 = vmatprep.subr.mxu0 0.0
        %v2474 = vand.u32 %v2096, 4294901760
        %v2475 = vsub.f32 %v2096, %v2474
        %v2476 = vand.u32 %v2475, 4294901760
        %2477 = vmatpush1.xpose.msra.mxu0 %v2476
        %2478 = vmatprep.subr.mxu0 0.0
        %2479 = vmatpush2.xpose.msra.mxu0 0.0
        %2480 = vmatprep.subr.mxu0 0.0
        %2481 = vmatpush2.xpose.msra.mxu0 0.0
        %2482 = vmatprep.subr.mxu0 0.0
        %2483 = vmatpush2.xpose.msra.mxu0 0.0
        %2484 = vmatprep.subr.mxu0 0.0
        %2485 = vmatpush2.xpose.msra.mxu0 0.0
        %2486 = vmatprep.subr.mxu0 0.0
        %2487 = vmatpush2.xpose.msra.mxu0 0.0
        %2488 = vmatprep.subr.mxu0 0.0
        %2489 = vmatpush2.xpose.msra.mxu0 0.0
        %2490 = vmatprep.subr.mxu0 0.0
        %2491 = vmatpush2.xpose.msra.mxu0 0.0
        %2492 = vmatprep.subr.mxu0 0.0
        %2493 = vmatpush2.xpose.msra.mxu0 0.0
        %2494 = vmatprep.subr.mxu0 0.0
        %2495 = vmatpush2.xpose.msra.mxu0 0.0
        %2496 = vmatprep.subr.mxu0 0.0
        %2497 = vmatpush2.xpose.msra.mxu0 0.0
        %2498 = vmatprep.subr.mxu0 0.0
        %2499 = vmatpush2.xpose.msra.mxu0 0.0
        %2500 = vmatprep.subr.mxu0 0.0
        %2501 = vmatpush2.xpose.msra.mxu0 0.0
        %2502 = vmatprep.subr.mxu0 0.0
        %2503 = vmatpush2.xpose.msra.mxu0 0.0
        %2504 = vmatprep.subr.mxu0 0.0
        %2505 = vmatpush2.xpose.msra.mxu0 0.0
        %2506 = vmatprep.subr.mxu0 0.0
        %2507 = vmatpush2.xpose.msra.mxu0 0.0
        %2508 = vmatprep.subr.mxu0 0.0
        %2509 = vmatpush2.xpose.msra.mxu0 0.0
        %2510 = vmatprep.mubr.f32.mxu0 0.0
        %v2511 = vand.u32 %v2092, 4294901760
        %2512 = vmatmul.mubr.f32.gmra.mxu0 %v2511
        %v2513 = vpop.f32.mrf.mxu0
        %v2514 = vadd.f32 %v2429, %v2513
        %v2515 = vpop.f32.mrf.mxu0
        %2516 = vmatprep.mubr.f32.mxu0 0.0
        %v2517 = vand.u32 %v2094, 4294901760
        %2518 = vmatmul.mubr.f32.gmra.mxu0 %v2517
        %v2519 = vpop.f32.mrf.mxu0
        %v2520 = vadd.f32 %v2437, %v2519
        %v2521 = vpop.f32.mrf.mxu0
        %2522 = vdwg.mxu0
        %2523 = vmatprep.subr.mxu0 0.0
        %2524 = vmatpush1.xpose.msra.mxu0 0.0
        %2525 = vmatprep.subr.mxu0 0.0
        %2526 = vmatpush1.xpose.msra.mxu0 0.0
        %2527 = vmatprep.subr.mxu0 0.0
        %2528 = vmatpush1.xpose.msra.mxu0 0.0
        %2529 = vmatprep.subr.mxu0 0.0
        %2530 = vmatpush1.xpose.msra.mxu0 0.0
        %2531 = vmatprep.subr.mxu0 0.0
        %2532 = vmatpush1.xpose.msra.mxu0 0.0
        %2533 = vmatprep.subr.mxu0 0.0
        %2534 = vmatpush1.xpose.msra.mxu0 0.0
        %2535 = vmatprep.subr.mxu0 0.0
        %2536 = vmatpush1.xpose.msra.mxu0 0.0
        %2537 = vmatprep.subr.mxu0 0.0
        %2538 = vmatpush1.xpose.msra.mxu0 0.0
        %2539 = vmatprep.subr.mxu0 0.0
        %2540 = vmatpush1.xpose.msra.mxu0 0.0
        %2541 = vmatprep.subr.mxu0 0.0
        %2542 = vmatpush1.xpose.msra.mxu0 0.0
        %2543 = vmatprep.subr.mxu0 0.0
        %2544 = vmatpush1.xpose.msra.mxu0 0.0
        %2545 = vmatprep.subr.mxu0 0.0
        %2546 = vmatpush1.xpose.msra.mxu0 0.0
        %2547 = vmatprep.subr.mxu0 0.0
        %2548 = vmatpush1.xpose.msra.mxu0 0.0
        %2549 = vmatprep.subr.mxu0 0.0
        %2550 = vmatpush1.xpose.msra.mxu0 0.0
        %2551 = vmatprep.subr.mxu0 0.0
        %v2552 = vand.u32 %v2098, 4294901760
        %2553 = vmatpush1.xpose.msra.mxu0 %v2552
        %2554 = vmatprep.subr.mxu0 0.0
        %v2555 = vand.u32 %v2096, 4294901760
        %2556 = vmatpush1.xpose.msra.mxu0 %v2555
        %2557 = vmatprep.subr.mxu0 0.0
        %2558 = vmatpush2.xpose.msra.mxu0 0.0
        %2559 = vmatprep.subr.mxu0 0.0
        %2560 = vmatpush2.xpose.msra.mxu0 0.0
        %2561 = vmatprep.subr.mxu0 0.0
        %2562 = vmatpush2.xpose.msra.mxu0 0.0
        %2563 = vmatprep.subr.mxu0 0.0
        %2564 = vmatpush2.xpose.msra.mxu0 0.0
        %2565 = vmatprep.subr.mxu0 0.0
        %2566 = vmatpush2.xpose.msra.mxu0 0.0
        %2567 = vmatprep.subr.mxu0 0.0
        %2568 = vmatpush2.xpose.msra.mxu0 0.0
        %2569 = vmatprep.subr.mxu0 0.0
        %2570 = vmatpush2.xpose.msra.mxu0 0.0
        %2571 = vmatprep.subr.mxu0 0.0
        %2572 = vmatpush2.xpose.msra.mxu0 0.0
        %2573 = vmatprep.subr.mxu0 0.0
        %2574 = vmatpush2.xpose.msra.mxu0 0.0
        %2575 = vmatprep.subr.mxu0 0.0
        %2576 = vmatpush2.xpose.msra.mxu0 0.0
        %2577 = vmatprep.subr.mxu0 0.0
        %2578 = vmatpush2.xpose.msra.mxu0 0.0
        %2579 = vmatprep.subr.mxu0 0.0
        %2580 = vmatpush2.xpose.msra.mxu0 0.0
        %2581 = vmatprep.subr.mxu0 0.0
        %2582 = vmatpush2.xpose.msra.mxu0 0.0
        %2583 = vmatprep.subr.mxu0 0.0
        %2584 = vmatpush2.xpose.msra.mxu0 0.0
        %2585 = vmatprep.subr.mxu0 0.0
        %2586 = vmatpush2.xpose.msra.mxu0 0.0
        %2587 = vmatprep.subr.mxu0 0.0
        %2588 = vmatpush2.xpose.msra.mxu0 0.0
        %2589 = vmatprep.mubr.f32.mxu0 0.0
        %v2590 = vand.u32 %v2092, 4294901760
        %2591 = vmatmul.mubr.f32.gmra.mxu0 %v2590
        %v2592 = vpop.f32.mrf.mxu0
        %v2593 = vadd.f32 %v2514, %v2592
        %v2594 = vpop.f32.mrf.mxu0
        %2595 = vmatprep.mubr.f32.mxu0 0.0
        %v2596 = vand.u32 %v2094, 4294901760
        %2597 = vmatmul.mubr.f32.gmra.mxu0 %v2596
        %v2598 = vpop.f32.mrf.mxu0
        %v2599 = vadd.f32 %v2520, %v2598
        %v2600 = vpop.f32.mrf.mxu0
        %2601 = vdwg.mxu0
        %v2602 = vsel %vm1489, %v2593, 0.0
        %2603 = vadd.xlane.f32.xlu0 %v2602
        %v2604 = vpop.xlane.xlu0 %2603
        %v2605 = vsel %vm1489, %v2599, 0.0
        %2606 = vadd.xlane.f32.xlu0 %v2605
        %v2607 = vpop.xlane.xlu0 %2606
        %v2608 = vmul.f32 %v2604, %v1496
        %v2609 = vmul.f32 %v2607, %v1496
        %v2610 = vsub.f32 %v2593, %v2608
        %v2611 = vsub.f32 %v2599, %v2609
        %v2612 = vmul.f32 %v2610, %v2610
        %v2613 = vmul.f32 %v2611, %v2611
        %v2614 = vsel %vm1489, %v2612, 0.0
        %2615 = vadd.xlane.f32.xlu0 %v2614
        %v2616 = vpop.xlane.xlu0 %2615
        %v2617 = vsel %vm1489, %v2613, 0.0
        %2618 = vadd.xlane.f32.xlu0 %v2617
        %v2619 = vpop.xlane.xlu0 %2618
        %v2620 = vmul.f32 %v2616, %v1496
        %v2621 = vmul.f32 %v2619, %v1496
        %v2622 = vadd.f32 %v2620, 1e-05
        %v2623 = vadd.f32 %v2621, 1e-05
        %v2624 = vrsqrt.pop %v2622
        %v2625 = vrsqrt.pop %v2623
        %v2626 = vmul.f32 %v2610, %v2624
        %v2627 = vmul.f32 %v2611, %v2625
        %v2628 = vlaneseq
        %v2629 = vshrl.u32 %v2628, 7
        %v2630 = vsub.s32 2, %v2629
        %v2631 = vrot.slane %v387, %v2630
        %v2632 = vmul.f32 %v2626, %v2631
        %v2633 = vmul.f32 %v2627, %v2631
        %v2634 = vlaneseq
        %v2635 = vshrl.u32 %v2634, 7
        %v2636 = vsub.s32 3, %v2635
        %v2637 = vrot.slane %v387, %v2636
        %v2638 = vadd.f32 %v2632, %v2637
        %v2639 = vadd.f32 %v2633, %v2637
        %v2640 = vadd.f32 %v2638, %v1527
        %v2641 = vadd.f32 %v2639, %v1528
        %v2642 = vsel %vm1489, %v2640, 0.0
        %2643 = vadd.xlane.f32.xlu0 %v2642
        %v2644 = vpop.xlane.xlu0 %2643
        %v2645 = vsel %vm1489, %v2641, 0.0
        %2646 = vadd.xlane.f32.xlu0 %v2645
        %v2647 = vpop.xlane.xlu0 %2646
        %v2648 = vmul.f32 %v2644, %v1496
        %v2649 = vmul.f32 %v2647, %v1496
        %v2650 = vsub.f32 %v2640, %v2648
        %v2651 = vsub.f32 %v2641, %v2649
        %v2652 = vmul.f32 %v2650, %v2650
        %v2653 = vmul.f32 %v2651, %v2651
        %v2654 = vsel %vm1489, %v2652, 0.0
        %2655 = vadd.xlane.f32.xlu0 %v2654
        %v2656 = vpop.xlane.xlu0 %2655
        %v2657 = vsel %vm1489, %v2653, 0.0
        %2658 = vadd.xlane.f32.xlu0 %v2657
        %v2659 = vpop.xlane.xlu0 %2658
        %v2660 = vmul.f32 %v2656, %v1496
        %v2661 = vmul.f32 %v2659, %v1496
        %v2662 = vadd.f32 %v2660, 1e-05
        %v2663 = vadd.f32 %v2661, 1e-05
        %v2664 = vrsqrt.pop %v2662
        %v2665 = vrsqrt.pop %v2663
        %v2666 = vmul.f32 %v2650, %v2664
        %v2667 = vmul.f32 %v2651, %v2665
        %v2668 = vlaneseq
        %v2669 = vshrl.u32 %v2668, 7
        %v2670 = vsub.s32 4, %v2669
        %v2671 = vrot.slane %v387, %v2670
        %v2672 = vmul.f32 %v2666, %v2671
        %v2673 = vmul.f32 %v2667, %v2671
        %v2674 = vlaneseq
        %v2675 = vshrl.u32 %v2674, 7
        %v2676 = vsub.s32 5, %v2675
        %v2677 = vrot.slane %v387, %v2676
        %v2678 = vadd.f32 %v2672, %v2677
        %v2679 = vadd.f32 %v2673, %v2677
        %v2680 = vld [vmem:[#allocation7] sm:$0xff]
        %v2681 = vld [vmem:[#allocation7 + $0x8] sm:$0xff]
        %v2683 = vsel %vm1489, %v2678, 0
        %v2686 = vsel %vm1489, %v2679, 0
        %2688 = vmatprep.subr.mxu0 0.0
        %2689 = vmatpush1.msra.mxu0 0.0
        %2690 = vmatprep.subr.mxu0 0.0
        %2691 = vmatpush1.msra.mxu0 0.0
        %2692 = vmatprep.subr.mxu0 0.0
        %2693 = vmatpush1.msra.mxu0 0.0
        %2694 = vmatprep.subr.mxu0 0.0
        %2695 = vmatpush1.msra.mxu0 0.0
        %2696 = vmatprep.subr.mxu0 0.0
        %2697 = vmatpush1.msra.mxu0 0.0
        %2698 = vmatprep.subr.mxu0 0.0
        %2699 = vmatpush1.msra.mxu0 0.0
        %2700 = vmatprep.subr.mxu0 0.0
        %2701 = vmatpush1.msra.mxu0 0.0
        %2702 = vmatprep.subr.mxu0 0.0
        %2703 = vmatpush1.msra.mxu0 0.0
        %2704 = vmatprep.subr.mxu0 0.0
        %2705 = vmatpush1.msra.mxu0 0.0
        %2706 = vmatprep.subr.mxu0 0.0
        %2707 = vmatpush1.msra.mxu0 0.0
        %2708 = vmatprep.subr.mxu0 0.0
        %2709 = vmatpush1.msra.mxu0 0.0
        %2710 = vmatprep.subr.mxu0 0.0
        %2711 = vmatpush1.msra.mxu0 0.0
        %2712 = vmatprep.subr.mxu0 0.0
        %2713 = vmatpush1.msra.mxu0 0.0
        %2714 = vmatprep.subr.mxu0 0.0
        %2715 = vmatpush1.msra.mxu0 0.0
        %2716 = vmatprep.subr.mxu0 0.0
        %v2717 = vand.u32 %v2681, 4294901760
        %2718 = vmatpush1.msra.mxu0 %v2717
        %2719 = vmatprep.subr.mxu0 0.0
        %v2720 = vand.u32 %v2680, 4294901760
        %2721 = vmatpush1.msra.mxu0 %v2720
        %2722 = vmatprep.subr.mxu0 0.0
        %2723 = vmatpush2.msra.mxu0 0.0
        %2724 = vmatprep.subr.mxu0 0.0
        %2725 = vmatpush2.msra.mxu0 0.0
        %2726 = vmatprep.subr.mxu0 0.0
        %2727 = vmatpush2.msra.mxu0 0.0
        %2728 = vmatprep.subr.mxu0 0.0
        %2729 = vmatpush2.msra.mxu0 0.0
        %2730 = vmatprep.subr.mxu0 0.0
        %2731 = vmatpush2.msra.mxu0 0.0
        %2732 = vmatprep.subr.mxu0 0.0
        %2733 = vmatpush2.msra.mxu0 0.0
        %2734 = vmatprep.subr.mxu0 0.0
        %2735 = vmatpush2.msra.mxu0 0.0
        %2736 = vmatprep.subr.mxu0 0.0
        %2737 = vmatpush2.msra.mxu0 0.0
        %2738 = vmatprep.subr.mxu0 0.0
        %2739 = vmatpush2.msra.mxu0 0.0
        %2740 = vmatprep.subr.mxu0 0.0
        %2741 = vmatpush2.msra.mxu0 0.0
        %2742 = vmatprep.subr.mxu0 0.0
        %2743 = vmatpush2.msra.mxu0 0.0
        %2744 = vmatprep.subr.mxu0 0.0
        %2745 = vmatpush2.msra.mxu0 0.0
        %2746 = vmatprep.subr.mxu0 0.0
        %2747 = vmatpush2.msra.mxu0 0.0
        %2748 = vmatprep.subr.mxu0 0.0
        %2749 = vmatpush2.msra.mxu0 0.0
        %2750 = vmatprep.subr.mxu0 0.0
        %2751 = vmatpush2.msra.mxu0 0.0
        %2752 = vmatprep.subr.mxu0 0.0
        %2753 = vmatpush2.msra.mxu0 0.0
        %2754 = vmatprep.mubr.f32.mxu0 0.0
        %v2755 = vand.u32 %v2683, 4294901760
        %v2756 = vsub.f32 %v2683, %v2755
        %v2757 = vand.u32 %v2756, 4294901760
        %v2758 = vsub.f32 %v2756, %v2757
        %v2759 = vand.u32 %v2758, 4294901760
        %2760 = vmatmul.mubr.f32.gmra.mxu0 %v2759
        %v2761 = vpop.f32.mrf.mxu0
        %v2762 = vadd.f32 0.0, %v2761
        %v2763 = vpop.f32.mrf.mxu0
        %2764 = vmatprep.mubr.f32.mxu0 0.0
        %v2765 = vand.u32 %v2686, 4294901760
        %v2766 = vsub.f32 %v2686, %v2765
        %v2767 = vand.u32 %v2766, 4294901760
        %v2768 = vsub.f32 %v2766, %v2767
        %v2769 = vand.u32 %v2768, 4294901760
        %2770 = vmatmul.mubr.f32.gmra.mxu0 %v2769
        %v2771 = vpop.f32.mrf.mxu0
        %v2772 = vadd.f32 0.0, %v2771
        %v2773 = vpop.f32.mrf.mxu0
        %2774 = vdwg.mxu0
        %2775 = vmatprep.subr.mxu0 0.0
        %2776 = vmatpush1.msra.mxu0 0.0
        %2777 = vmatprep.subr.mxu0 0.0
        %2778 = vmatpush1.msra.mxu0 0.0
        %2779 = vmatprep.subr.mxu0 0.0
        %2780 = vmatpush1.msra.mxu0 0.0
        %2781 = vmatprep.subr.mxu0 0.0
        %2782 = vmatpush1.msra.mxu0 0.0
        %2783 = vmatprep.subr.mxu0 0.0
        %2784 = vmatpush1.msra.mxu0 0.0
        %2785 = vmatprep.subr.mxu0 0.0
        %2786 = vmatpush1.msra.mxu0 0.0
        %2787 = vmatprep.subr.mxu0 0.0
        %2788 = vmatpush1.msra.mxu0 0.0
        %2789 = vmatprep.subr.mxu0 0.0
        %2790 = vmatpush1.msra.mxu0 0.0
        %2791 = vmatprep.subr.mxu0 0.0
        %2792 = vmatpush1.msra.mxu0 0.0
        %2793 = vmatprep.subr.mxu0 0.0
        %2794 = vmatpush1.msra.mxu0 0.0
        %2795 = vmatprep.subr.mxu0 0.0
        %2796 = vmatpush1.msra.mxu0 0.0
        %2797 = vmatprep.subr.mxu0 0.0
        %2798 = vmatpush1.msra.mxu0 0.0
        %2799 = vmatprep.subr.mxu0 0.0
        %2800 = vmatpush1.msra.mxu0 0.0
        %2801 = vmatprep.subr.mxu0 0.0
        %2802 = vmatpush1.msra.mxu0 0.0
        %2803 = vmatprep.subr.mxu0 0.0
        %v2804 = vand.u32 %v2681, 4294901760
        %v2805 = vsub.f32 %v2681, %v2804
        %v2806 = vand.u32 %v2805, 4294901760
        %v2807 = vsub.f32 %v2805, %v2806
        %v2808 = vand.u32 %v2807, 4294901760
        %2809 = vmatpush1.msra.mxu0 %v2808
        %2810 = vmatprep.subr.mxu0 0.0
        %v2811 = vand.u32 %v2680, 4294901760
        %v2812 = vsub.f32 %v2680, %v2811
        %v2813 = vand.u32 %v2812, 4294901760
        %v2814 = vsub.f32 %v2812, %v2813
        %v2815 = vand.u32 %v2814, 4294901760
        %2816 = vmatpush1.msra.mxu0 %v2815
        %2817 = vmatprep.subr.mxu0 0.0
        %2818 = vmatpush2.msra.mxu0 0.0
        %2819 = vmatprep.subr.mxu0 0.0
        %2820 = vmatpush2.msra.mxu0 0.0
        %2821 = vmatprep.subr.mxu0 0.0
        %2822 = vmatpush2.msra.mxu0 0.0
        %2823 = vmatprep.subr.mxu0 0.0
        %2824 = vmatpush2.msra.mxu0 0.0
        %2825 = vmatprep.subr.mxu0 0.0
        %2826 = vmatpush2.msra.mxu0 0.0
        %2827 = vmatprep.subr.mxu0 0.0
        %2828 = vmatpush2.msra.mxu0 0.0
        %2829 = vmatprep.subr.mxu0 0.0
        %2830 = vmatpush2.msra.mxu0 0.0
        %2831 = vmatprep.subr.mxu0 0.0
        %2832 = vmatpush2.msra.mxu0 0.0
        %2833 = vmatprep.subr.mxu0 0.0
        %2834 = vmatpush2.msra.mxu0 0.0
        %2835 = vmatprep.subr.mxu0 0.0
        %2836 = vmatpush2.msra.mxu0 0.0
        %2837 = vmatprep.subr.mxu0 0.0
        %2838 = vmatpush2.msra.mxu0 0.0
        %2839 = vmatprep.subr.mxu0 0.0
        %2840 = vmatpush2.msra.mxu0 0.0
        %2841 = vmatprep.subr.mxu0 0.0
        %2842 = vmatpush2.msra.mxu0 0.0
        %2843 = vmatprep.subr.mxu0 0.0
        %2844 = vmatpush2.msra.mxu0 0.0
        %2845 = vmatprep.subr.mxu0 0.0
        %2846 = vmatpush2.msra.mxu0 0.0
        %2847 = vmatprep.subr.mxu0 0.0
        %2848 = vmatpush2.msra.mxu0 0.0
        %2849 = vmatprep.mubr.f32.mxu0 0.0
        %v2850 = vand.u32 %v2683, 4294901760
        %2851 = vmatmul.mubr.f32.gmra.mxu0 %v2850
        %v2852 = vpop.f32.mrf.mxu0
        %v2853 = vadd.f32 %v2762, %v2852
        %v2854 = vpop.f32.mrf.mxu0
        %2855 = vmatprep.mubr.f32.mxu0 0.0
        %v2856 = vand.u32 %v2686, 4294901760
        %2857 = vmatmul.mubr.f32.gmra.mxu0 %v2856
        %v2858 = vpop.f32.mrf.mxu0
        %v2859 = vadd.f32 %v2772, %v2858
        %v2860 = vpop.f32.mrf.mxu0
        %2861 = vdwg.mxu0
        %2862 = vmatprep.subr.mxu0 0.0
        %2863 = vmatpush1.msra.mxu0 0.0
        %2864 = vmatprep.subr.mxu0 0.0
        %2865 = vmatpush1.msra.mxu0 0.0
        %2866 = vmatprep.subr.mxu0 0.0
        %2867 = vmatpush1.msra.mxu0 0.0
        %2868 = vmatprep.subr.mxu0 0.0
        %2869 = vmatpush1.msra.mxu0 0.0
        %2870 = vmatprep.subr.mxu0 0.0
        %2871 = vmatpush1.msra.mxu0 0.0
        %2872 = vmatprep.subr.mxu0 0.0
        %2873 = vmatpush1.msra.mxu0 0.0
        %2874 = vmatprep.subr.mxu0 0.0
        %2875 = vmatpush1.msra.mxu0 0.0
        %2876 = vmatprep.subr.mxu0 0.0
        %2877 = vmatpush1.msra.mxu0 0.0
        %2878 = vmatprep.subr.mxu0 0.0
        %2879 = vmatpush1.msra.mxu0 0.0
        %2880 = vmatprep.subr.mxu0 0.0
        %2881 = vmatpush1.msra.mxu0 0.0
        %2882 = vmatprep.subr.mxu0 0.0
        %2883 = vmatpush1.msra.mxu0 0.0
        %2884 = vmatprep.subr.mxu0 0.0
        %2885 = vmatpush1.msra.mxu0 0.0
        %2886 = vmatprep.subr.mxu0 0.0
        %2887 = vmatpush1.msra.mxu0 0.0
        %2888 = vmatprep.subr.mxu0 0.0
        %2889 = vmatpush1.msra.mxu0 0.0
        %2890 = vmatprep.subr.mxu0 0.0
        %v2891 = vand.u32 %v2681, 4294901760
        %v2892 = vsub.f32 %v2681, %v2891
        %2893 = vmatpush1.msra.mxu0 %v2892
        %2894 = vmatprep.subr.mxu0 0.0
        %v2895 = vand.u32 %v2680, 4294901760
        %v2896 = vsub.f32 %v2680, %v2895
        %2897 = vmatpush1.msra.mxu0 %v2896
        %2898 = vmatprep.subr.mxu0 0.0
        %2899 = vmatpush2.msra.mxu0 0.0
        %2900 = vmatprep.subr.mxu0 0.0
        %2901 = vmatpush2.msra.mxu0 0.0
        %2902 = vmatprep.subr.mxu0 0.0
        %2903 = vmatpush2.msra.mxu0 0.0
        %2904 = vmatprep.subr.mxu0 0.0
        %2905 = vmatpush2.msra.mxu0 0.0
        %2906 = vmatprep.subr.mxu0 0.0
        %2907 = vmatpush2.msra.mxu0 0.0
        %2908 = vmatprep.subr.mxu0 0.0
        %2909 = vmatpush2.msra.mxu0 0.0
        %2910 = vmatprep.subr.mxu0 0.0
        %2911 = vmatpush2.msra.mxu0 0.0
        %2912 = vmatprep.subr.mxu0 0.0
        %2913 = vmatpush2.msra.mxu0 0.0
        %2914 = vmatprep.subr.mxu0 0.0
        %2915 = vmatpush2.msra.mxu0 0.0
        %2916 = vmatprep.subr.mxu0 0.0
        %2917 = vmatpush2.msra.mxu0 0.0
        %2918 = vmatprep.subr.mxu0 0.0
        %2919 = vmatpush2.msra.mxu0 0.0
        %2920 = vmatprep.subr.mxu0 0.0
        %2921 = vmatpush2.msra.mxu0 0.0
        %2922 = vmatprep.subr.mxu0 0.0
        %2923 = vmatpush2.msra.mxu0 0.0
        %2924 = vmatprep.subr.mxu0 0.0
        %2925 = vmatpush2.msra.mxu0 0.0
        %2926 = vmatprep.subr.mxu0 0.0
        %2927 = vmatpush2.msra.mxu0 0.0
        %2928 = vmatprep.subr.mxu0 0.0
        %2929 = vmatpush2.msra.mxu0 0.0
        %2930 = vmatprep.mubr.f32.mxu0 0.0
        %v2931 = vand.u32 %v2683, 4294901760
        %v2932 = vsub.f32 %v2683, %v2931
        %2933 = vmatmul.mubr.f32.gmra.mxu0 %v2932
        %v2934 = vpop.f32.mrf.mxu0
        %v2935 = vadd.f32 %v2853, %v2934
        %v2936 = vpop.f32.mrf.mxu0
        %2937 = vmatprep.mubr.f32.mxu0 0.0
        %v2938 = vand.u32 %v2686, 4294901760
        %v2939 = vsub.f32 %v2686, %v2938
        %2940 = vmatmul.mubr.f32.gmra.mxu0 %v2939
        %v2941 = vpop.f32.mrf.mxu0
        %v2942 = vadd.f32 %v2859, %v2941
        %v2943 = vpop.f32.mrf.mxu0
        %2944 = vdwg.mxu0
        %2945 = vmatprep.subr.mxu0 0.0
        %2946 = vmatpush1.msra.mxu0 0.0
        %2947 = vmatprep.subr.mxu0 0.0
        %2948 = vmatpush1.msra.mxu0 0.0
        %2949 = vmatprep.subr.mxu0 0.0
        %2950 = vmatpush1.msra.mxu0 0.0
        %2951 = vmatprep.subr.mxu0 0.0
        %2952 = vmatpush1.msra.mxu0 0.0
        %2953 = vmatprep.subr.mxu0 0.0
        %2954 = vmatpush1.msra.mxu0 0.0
        %2955 = vmatprep.subr.mxu0 0.0
        %2956 = vmatpush1.msra.mxu0 0.0
        %2957 = vmatprep.subr.mxu0 0.0
        %2958 = vmatpush1.msra.mxu0 0.0
        %2959 = vmatprep.subr.mxu0 0.0
        %2960 = vmatpush1.msra.mxu0 0.0
        %2961 = vmatprep.subr.mxu0 0.0
        %2962 = vmatpush1.msra.mxu0 0.0
        %2963 = vmatprep.subr.mxu0 0.0
        %2964 = vmatpush1.msra.mxu0 0.0
        %2965 = vmatprep.subr.mxu0 0.0
        %2966 = vmatpush1.msra.mxu0 0.0
        %2967 = vmatprep.subr.mxu0 0.0
        %2968 = vmatpush1.msra.mxu0 0.0
        %2969 = vmatprep.subr.mxu0 0.0
        %2970 = vmatpush1.msra.mxu0 0.0
        %2971 = vmatprep.subr.mxu0 0.0
        %2972 = vmatpush1.msra.mxu0 0.0
        %2973 = vmatprep.subr.mxu0 0.0
        %v2974 = vand.u32 %v2681, 4294901760
        %2975 = vmatpush1.msra.mxu0 %v2974
        %2976 = vmatprep.subr.mxu0 0.0
        %v2977 = vand.u32 %v2680, 4294901760
        %2978 = vmatpush1.msra.mxu0 %v2977
        %2979 = vmatprep.subr.mxu0 0.0
        %2980 = vmatpush2.msra.mxu0 0.0
        %2981 = vmatprep.subr.mxu0 0.0
        %2982 = vmatpush2.msra.mxu0 0.0
        %2983 = vmatprep.subr.mxu0 0.0
        %2984 = vmatpush2.msra.mxu0 0.0
        %2985 = vmatprep.subr.mxu0 0.0
        %2986 = vmatpush2.msra.mxu0 0.0
        %2987 = vmatprep.subr.mxu0 0.0
        %2988 = vmatpush2.msra.mxu0 0.0
        %2989 = vmatprep.subr.mxu0 0.0
        %2990 = vmatpush2.msra.mxu0 0.0
        %2991 = vmatprep.subr.mxu0 0.0
        %2992 = vmatpush2.msra.mxu0 0.0
        %2993 = vmatprep.subr.mxu0 0.0
        %2994 = vmatpush2.msra.mxu0 0.0
        %2995 = vmatprep.subr.mxu0 0.0
        %2996 = vmatpush2.msra.mxu0 0.0
        %2997 = vmatprep.subr.mxu0 0.0
        %2998 = vmatpush2.msra.mxu0 0.0
        %2999 = vmatprep.subr.mxu0 0.0
        %3000 = vmatpush2.msra.mxu0 0.0
        %3001 = vmatprep.subr.mxu0 0.0
        %3002 = vmatpush2.msra.mxu0 0.0
        %3003 = vmatprep.subr.mxu0 0.0
        %3004 = vmatpush2.msra.mxu0 0.0
        %3005 = vmatprep.subr.mxu0 0.0
        %3006 = vmatpush2.msra.mxu0 0.0
        %3007 = vmatprep.subr.mxu0 0.0
        %3008 = vmatpush2.msra.mxu0 0.0
        %3009 = vmatprep.subr.mxu0 0.0
        %3010 = vmatpush2.msra.mxu0 0.0
        %3011 = vmatprep.mubr.f32.mxu0 0.0
        %v3012 = vand.u32 %v2683, 4294901760
        %v3013 = vsub.f32 %v2683, %v3012
        %v3014 = vand.u32 %v3013, 4294901760
        %3015 = vmatmul.mubr.f32.gmra.mxu0 %v3014
        %v3016 = vpop.f32.mrf.mxu0
        %v3017 = vadd.f32 %v2935, %v3016
        %v3018 = vpop.f32.mrf.mxu0
        %3019 = vmatprep.mubr.f32.mxu0 0.0
        %v3020 = vand.u32 %v2686, 4294901760
        %v3021 = vsub.f32 %v2686, %v3020
        %v3022 = vand.u32 %v3021, 4294901760
        %3023 = vmatmul.mubr.f32.gmra.mxu0 %v3022
        %v3024 = vpop.f32.mrf.mxu0
        %v3025 = vadd.f32 %v2942, %v3024
        %v3026 = vpop.f32.mrf.mxu0
        %3027 = vdwg.mxu0
        %3028 = vmatprep.subr.mxu0 0.0
        %3029 = vmatpush1.msra.mxu0 0.0
        %3030 = vmatprep.subr.mxu0 0.0
        %3031 = vmatpush1.msra.mxu0 0.0
        %3032 = vmatprep.subr.mxu0 0.0
        %3033 = vmatpush1.msra.mxu0 0.0
        %3034 = vmatprep.subr.mxu0 0.0
        %3035 = vmatpush1.msra.mxu0 0.0
        %3036 = vmatprep.subr.mxu0 0.0
        %3037 = vmatpush1.msra.mxu0 0.0
        %3038 = vmatprep.subr.mxu0 0.0
        %3039 = vmatpush1.msra.mxu0 0.0
        %3040 = vmatprep.subr.mxu0 0.0
        %3041 = vmatpush1.msra.mxu0 0.0
        %3042 = vmatprep.subr.mxu0 0.0
        %3043 = vmatpush1.msra.mxu0 0.0
        %3044 = vmatprep.subr.mxu0 0.0
        %3045 = vmatpush1.msra.mxu0 0.0
        %3046 = vmatprep.subr.mxu0 0.0
        %3047 = vmatpush1.msra.mxu0 0.0
        %3048 = vmatprep.subr.mxu0 0.0
        %3049 = vmatpush1.msra.mxu0 0.0
        %3050 = vmatprep.subr.mxu0 0.0
        %3051 = vmatpush1.msra.mxu0 0.0
        %3052 = vmatprep.subr.mxu0 0.0
        %3053 = vmatpush1.msra.mxu0 0.0
        %3054 = vmatprep.subr.mxu0 0.0
        %3055 = vmatpush1.msra.mxu0 0.0
        %3056 = vmatprep.subr.mxu0 0.0
        %v3057 = vand.u32 %v2681, 4294901760
        %v3058 = vsub.f32 %v2681, %v3057
        %v3059 = vand.u32 %v3058, 4294901760
        %3060 = vmatpush1.msra.mxu0 %v3059
        %3061 = vmatprep.subr.mxu0 0.0
        %v3062 = vand.u32 %v2680, 4294901760
        %v3063 = vsub.f32 %v2680, %v3062
        %v3064 = vand.u32 %v3063, 4294901760
        %3065 = vmatpush1.msra.mxu0 %v3064
        %3066 = vmatprep.subr.mxu0 0.0
        %3067 = vmatpush2.msra.mxu0 0.0
        %3068 = vmatprep.subr.mxu0 0.0
        %3069 = vmatpush2.msra.mxu0 0.0
        %3070 = vmatprep.subr.mxu0 0.0
        %3071 = vmatpush2.msra.mxu0 0.0
        %3072 = vmatprep.subr.mxu0 0.0
        %3073 = vmatpush2.msra.mxu0 0.0
        %3074 = vmatprep.subr.mxu0 0.0
        %3075 = vmatpush2.msra.mxu0 0.0
        %3076 = vmatprep.subr.mxu0 0.0
        %3077 = vmatpush2.msra.mxu0 0.0
        %3078 = vmatprep.subr.mxu0 0.0
        %3079 = vmatpush2.msra.mxu0 0.0
        %3080 = vmatprep.subr.mxu0 0.0
        %3081 = vmatpush2.msra.mxu0 0.0
        %3082 = vmatprep.subr.mxu0 0.0
        %3083 = vmatpush2.msra.mxu0 0.0
        %3084 = vmatprep.subr.mxu0 0.0
        %3085 = vmatpush2.msra.mxu0 0.0
        %3086 = vmatprep.subr.mxu0 0.0
        %3087 = vmatpush2.msra.mxu0 0.0
        %3088 = vmatprep.subr.mxu0 0.0
        %3089 = vmatpush2.msra.mxu0 0.0
        %3090 = vmatprep.subr.mxu0 0.0
        %3091 = vmatpush2.msra.mxu0 0.0
        %3092 = vmatprep.subr.mxu0 0.0
        %3093 = vmatpush2.msra.mxu0 0.0
        %3094 = vmatprep.subr.mxu0 0.0
        %3095 = vmatpush2.msra.mxu0 0.0
        %3096 = vmatprep.subr.mxu0 0.0
        %3097 = vmatpush2.msra.mxu0 0.0
        %3098 = vmatprep.mubr.f32.mxu0 0.0
        %v3099 = vand.u32 %v2683, 4294901760
        %3100 = vmatmul.mubr.f32.gmra.mxu0 %v3099
        %v3101 = vpop.f32.mrf.mxu0
        %v3102 = vadd.f32 %v3017, %v3101
        %v3103 = vpop.f32.mrf.mxu0
        %3104 = vmatprep.mubr.f32.mxu0 0.0
        %v3105 = vand.u32 %v2686, 4294901760
        %3106 = vmatmul.mubr.f32.gmra.mxu0 %v3105
        %v3107 = vpop.f32.mrf.mxu0
        %v3108 = vadd.f32 %v3025, %v3107
        %v3109 = vpop.f32.mrf.mxu0
        %3110 = vdwg.mxu0
        %3111 = vmatprep.subr.mxu0 0.0
        %3112 = vmatpush1.msra.mxu0 0.0
        %3113 = vmatprep.subr.mxu0 0.0
        %3114 = vmatpush1.msra.mxu0 0.0
        %3115 = vmatprep.subr.mxu0 0.0
        %3116 = vmatpush1.msra.mxu0 0.0
        %3117 = vmatprep.subr.mxu0 0.0
        %3118 = vmatpush1.msra.mxu0 0.0
        %3119 = vmatprep.subr.mxu0 0.0
        %3120 = vmatpush1.msra.mxu0 0.0
        %3121 = vmatprep.subr.mxu0 0.0
        %3122 = vmatpush1.msra.mxu0 0.0
        %3123 = vmatprep.subr.mxu0 0.0
        %3124 = vmatpush1.msra.mxu0 0.0
        %3125 = vmatprep.subr.mxu0 0.0
        %3126 = vmatpush1.msra.mxu0 0.0
        %3127 = vmatprep.subr.mxu0 0.0
        %3128 = vmatpush1.msra.mxu0 0.0
        %3129 = vmatprep.subr.mxu0 0.0
        %3130 = vmatpush1.msra.mxu0 0.0
        %3131 = vmatprep.subr.mxu0 0.0
        %3132 = vmatpush1.msra.mxu0 0.0
        %3133 = vmatprep.subr.mxu0 0.0
        %3134 = vmatpush1.msra.mxu0 0.0
        %3135 = vmatprep.subr.mxu0 0.0
        %3136 = vmatpush1.msra.mxu0 0.0
        %3137 = vmatprep.subr.mxu0 0.0
        %3138 = vmatpush1.msra.mxu0 0.0
        %3139 = vmatprep.subr.mxu0 0.0
        %v3140 = vand.u32 %v2681, 4294901760
        %3141 = vmatpush1.msra.mxu0 %v3140
        %3142 = vmatprep.subr.mxu0 0.0
        %v3143 = vand.u32 %v2680, 4294901760
        %3144 = vmatpush1.msra.mxu0 %v3143
        %3145 = vmatprep.subr.mxu0 0.0
        %3146 = vmatpush2.msra.mxu0 0.0
        %3147 = vmatprep.subr.mxu0 0.0
        %3148 = vmatpush2.msra.mxu0 0.0
        %3149 = vmatprep.subr.mxu0 0.0
        %3150 = vmatpush2.msra.mxu0 0.0
        %3151 = vmatprep.subr.mxu0 0.0
        %3152 = vmatpush2.msra.mxu0 0.0
        %3153 = vmatprep.subr.mxu0 0.0
        %3154 = vmatpush2.msra.mxu0 0.0
        %3155 = vmatprep.subr.mxu0 0.0
        %3156 = vmatpush2.msra.mxu0 0.0
        %3157 = vmatprep.subr.mxu0 0.0
        %3158 = vmatpush2.msra.mxu0 0.0
        %3159 = vmatprep.subr.mxu0 0.0
        %3160 = vmatpush2.msra.mxu0 0.0
        %3161 = vmatprep.subr.mxu0 0.0
        %3162 = vmatpush2.msra.mxu0 0.0
        %3163 = vmatprep.subr.mxu0 0.0
        %3164 = vmatpush2.msra.mxu0 0.0
        %3165 = vmatprep.subr.mxu0 0.0
        %3166 = vmatpush2.msra.mxu0 0.0
        %3167 = vmatprep.subr.mxu0 0.0
        %3168 = vmatpush2.msra.mxu0 0.0
        %3169 = vmatprep.subr.mxu0 0.0
        %3170 = vmatpush2.msra.mxu0 0.0
        %3171 = vmatprep.subr.mxu0 0.0
        %3172 = vmatpush2.msra.mxu0 0.0
        %3173 = vmatprep.subr.mxu0 0.0
        %3174 = vmatpush2.msra.mxu0 0.0
        %3175 = vmatprep.subr.mxu0 0.0
        %3176 = vmatpush2.msra.mxu0 0.0
        %3177 = vmatprep.mubr.f32.mxu0 0.0
        %v3178 = vand.u32 %v2683, 4294901760
        %3179 = vmatmul.mubr.f32.gmra.mxu0 %v3178
        %v3180 = vpop.f32.mrf.mxu0
        %v3181 = vadd.f32 %v3102, %v3180
        %v3182 = vpop.f32.mrf.mxu0
        %3183 = vmatprep.mubr.f32.mxu0 0.0
        %v3184 = vand.u32 %v2686, 4294901760
        %3185 = vmatmul.mubr.f32.gmra.mxu0 %v3184
        %v3186 = vpop.f32.mrf.mxu0
        %v3187 = vadd.f32 %v3108, %v3186
        %v3188 = vpop.f32.mrf.mxu0
        %3189 = vdwg.mxu0
        %v3190 = vmax.f32 %v3181, 0.0
        %v3191 = vmax.f32 %v3187, 0.0
        %v3192 = vld [vmem:[#allocation8] sm:$0xff]
        %v3193 = vld [vmem:[#allocation8 + $0x8] sm:$0xff]
        %v3195 = vsel %vm1489, %v3190, 0
        %v3198 = vsel %vm1489, %v3191, 0
        %3200 = vmatprep.subr.mxu0 0.0
        %3201 = vmatpush1.msra.mxu0 0.0
        %3202 = vmatprep.subr.mxu0 0.0
        %3203 = vmatpush1.msra.mxu0 0.0
        %3204 = vmatprep.subr.mxu0 0.0
        %3205 = vmatpush1.msra.mxu0 0.0
        %3206 = vmatprep.subr.mxu0 0.0
        %3207 = vmatpush1.msra.mxu0 0.0
        %3208 = vmatprep.subr.mxu0 0.0
        %3209 = vmatpush1.msra.mxu0 0.0
        %3210 = vmatprep.subr.mxu0 0.0
        %3211 = vmatpush1.msra.mxu0 0.0
        %3212 = vmatprep.subr.mxu0 0.0
        %3213 = vmatpush1.msra.mxu0 0.0
        %3214 = vmatprep.subr.mxu0 0.0
        %3215 = vmatpush1.msra.mxu0 0.0
        %3216 = vmatprep.subr.mxu0 0.0
        %3217 = vmatpush1.msra.mxu0 0.0
        %3218 = vmatprep.subr.mxu0 0.0
        %3219 = vmatpush1.msra.mxu0 0.0
        %3220 = vmatprep.subr.mxu0 0.0
        %3221 = vmatpush1.msra.mxu0 0.0
        %3222 = vmatprep.subr.mxu0 0.0
        %3223 = vmatpush1.msra.mxu0 0.0
        %3224 = vmatprep.subr.mxu0 0.0
        %3225 = vmatpush1.msra.mxu0 0.0
        %3226 = vmatprep.subr.mxu0 0.0
        %3227 = vmatpush1.msra.mxu0 0.0
        %3228 = vmatprep.subr.mxu0 0.0
        %v3229 = vand.u32 %v3193, 4294901760
        %3230 = vmatpush1.msra.mxu0 %v3229
        %3231 = vmatprep.subr.mxu0 0.0
        %v3232 = vand.u32 %v3192, 4294901760
        %3233 = vmatpush1.msra.mxu0 %v3232
        %3234 = vmatprep.subr.mxu0 0.0
        %3235 = vmatpush2.msra.mxu0 0.0
        %3236 = vmatprep.subr.mxu0 0.0
        %3237 = vmatpush2.msra.mxu0 0.0
        %3238 = vmatprep.subr.mxu0 0.0
        %3239 = vmatpush2.msra.mxu0 0.0
        %3240 = vmatprep.subr.mxu0 0.0
        %3241 = vmatpush2.msra.mxu0 0.0
        %3242 = vmatprep.subr.mxu0 0.0
        %3243 = vmatpush2.msra.mxu0 0.0
        %3244 = vmatprep.subr.mxu0 0.0
        %3245 = vmatpush2.msra.mxu0 0.0
        %3246 = vmatprep.subr.mxu0 0.0
        %3247 = vmatpush2.msra.mxu0 0.0
        %3248 = vmatprep.subr.mxu0 0.0
        %3249 = vmatpush2.msra.mxu0 0.0
        %3250 = vmatprep.subr.mxu0 0.0
        %3251 = vmatpush2.msra.mxu0 0.0
        %3252 = vmatprep.subr.mxu0 0.0
        %3253 = vmatpush2.msra.mxu0 0.0
        %3254 = vmatprep.subr.mxu0 0.0
        %3255 = vmatpush2.msra.mxu0 0.0
        %3256 = vmatprep.subr.mxu0 0.0
        %3257 = vmatpush2.msra.mxu0 0.0
        %3258 = vmatprep.subr.mxu0 0.0
        %3259 = vmatpush2.msra.mxu0 0.0
        %3260 = vmatprep.subr.mxu0 0.0
        %3261 = vmatpush2.msra.mxu0 0.0
        %3262 = vmatprep.subr.mxu0 0.0
        %3263 = vmatpush2.msra.mxu0 0.0
        %3264 = vmatprep.subr.mxu0 0.0
        %3265 = vmatpush2.msra.mxu0 0.0
        %3266 = vmatprep.mubr.f32.mxu0 0.0
        %v3267 = vand.u32 %v3195, 4294901760
        %v3268 = vsub.f32 %v3195, %v3267
        %v3269 = vand.u32 %v3268, 4294901760
        %v3270 = vsub.f32 %v3268, %v3269
        %v3271 = vand.u32 %v3270, 4294901760
        %3272 = vmatmul.mubr.f32.gmra.mxu0 %v3271
        %v3273 = vpop.f32.mrf.mxu0
        %v3274 = vadd.f32 %v2640, %v3273
        %v3275 = vpop.f32.mrf.mxu0
        %3276 = vmatprep.mubr.f32.mxu0 0.0
        %v3277 = vand.u32 %v3198, 4294901760
        %v3278 = vsub.f32 %v3198, %v3277
        %v3279 = vand.u32 %v3278, 4294901760
        %v3280 = vsub.f32 %v3278, %v3279
        %v3281 = vand.u32 %v3280, 4294901760
        %3282 = vmatmul.mubr.f32.gmra.mxu0 %v3281
        %v3283 = vpop.f32.mrf.mxu0
        %v3284 = vadd.f32 %v2641, %v3283
        %v3285 = vpop.f32.mrf.mxu0
        %3286 = vdwg.mxu0
        %3287 = vmatprep.subr.mxu0 0.0
        %3288 = vmatpush1.msra.mxu0 0.0
        %3289 = vmatprep.subr.mxu0 0.0
        %3290 = vmatpush1.msra.mxu0 0.0
        %3291 = vmatprep.subr.mxu0 0.0
        %3292 = vmatpush1.msra.mxu0 0.0
        %3293 = vmatprep.subr.mxu0 0.0
        %3294 = vmatpush1.msra.mxu0 0.0
        %3295 = vmatprep.subr.mxu0 0.0
        %3296 = vmatpush1.msra.mxu0 0.0
        %3297 = vmatprep.subr.mxu0 0.0
        %3298 = vmatpush1.msra.mxu0 0.0
        %3299 = vmatprep.subr.mxu0 0.0
        %3300 = vmatpush1.msra.mxu0 0.0
        %3301 = vmatprep.subr.mxu0 0.0
        %3302 = vmatpush1.msra.mxu0 0.0
        %3303 = vmatprep.subr.mxu0 0.0
        %3304 = vmatpush1.msra.mxu0 0.0
        %3305 = vmatprep.subr.mxu0 0.0
        %3306 = vmatpush1.msra.mxu0 0.0
        %3307 = vmatprep.subr.mxu0 0.0
        %3308 = vmatpush1.msra.mxu0 0.0
        %3309 = vmatprep.subr.mxu0 0.0
        %3310 = vmatpush1.msra.mxu0 0.0
        %3311 = vmatprep.subr.mxu0 0.0
        %3312 = vmatpush1.msra.mxu0 0.0
        %3313 = vmatprep.subr.mxu0 0.0
        %3314 = vmatpush1.msra.mxu0 0.0
        %3315 = vmatprep.subr.mxu0 0.0
        %v3316 = vand.u32 %v3193, 4294901760
        %v3317 = vsub.f32 %v3193, %v3316
        %v3318 = vand.u32 %v3317, 4294901760
        %v3319 = vsub.f32 %v3317, %v3318
        %v3320 = vand.u32 %v3319, 4294901760
        %3321 = vmatpush1.msra.mxu0 %v3320
        %3322 = vmatprep.subr.mxu0 0.0
        %v3323 = vand.u32 %v3192, 4294901760
        %v3324 = vsub.f32 %v3192, %v3323
        %v3325 = vand.u32 %v3324, 4294901760
        %v3326 = vsub.f32 %v3324, %v3325
        %v3327 = vand.u32 %v3326, 4294901760
        %3328 = vmatpush1.msra.mxu0 %v3327
        %3329 = vmatprep.subr.mxu0 0.0
        %3330 = vmatpush2.msra.mxu0 0.0
        %3331 = vmatprep.subr.mxu0 0.0
        %3332 = vmatpush2.msra.mxu0 0.0
        %3333 = vmatprep.subr.mxu0 0.0
        %3334 = vmatpush2.msra.mxu0 0.0
        %3335 = vmatprep.subr.mxu0 0.0
        %3336 = vmatpush2.msra.mxu0 0.0
        %3337 = vmatprep.subr.mxu0 0.0
        %3338 = vmatpush2.msra.mxu0 0.0
        %3339 = vmatprep.subr.mxu0 0.0
        %3340 = vmatpush2.msra.mxu0 0.0
        %3341 = vmatprep.subr.mxu0 0.0
        %3342 = vmatpush2.msra.mxu0 0.0
        %3343 = vmatprep.subr.mxu0 0.0
        %3344 = vmatpush2.msra.mxu0 0.0
        %3345 = vmatprep.subr.mxu0 0.0
        %3346 = vmatpush2.msra.mxu0 0.0
        %3347 = vmatprep.subr.mxu0 0.0
        %3348 = vmatpush2.msra.mxu0 0.0
        %3349 = vmatprep.subr.mxu0 0.0
        %3350 = vmatpush2.msra.mxu0 0.0
        %3351 = vmatprep.subr.mxu0 0.0
        %3352 = vmatpush2.msra.mxu0 0.0
        %3353 = vmatprep.subr.mxu0 0.0
        %3354 = vmatpush2.msra.mxu0 0.0
        %3355 = vmatprep.subr.mxu0 0.0
        %3356 = vmatpush2.msra.mxu0 0.0
        %3357 = vmatprep.subr.mxu0 0.0
        %3358 = vmatpush2.msra.mxu0 0.0
        %3359 = vmatprep.subr.mxu0 0.0
        %3360 = vmatpush2.msra.mxu0 0.0
        %3361 = vmatprep.mubr.f32.mxu0 0.0
        %v3362 = vand.u32 %v3195, 4294901760
        %3363 = vmatmul.mubr.f32.gmra.mxu0 %v3362
        %v3364 = vpop.f32.mrf.mxu0
        %v3365 = vadd.f32 %v3274, %v3364
        %v3366 = vpop.f32.mrf.mxu0
        %3367 = vmatprep.mubr.f32.mxu0 0.0
        %v3368 = vand.u32 %v3198, 4294901760
        %3369 = vmatmul.mubr.f32.gmra.mxu0 %v3368
        %v3370 = vpop.f32.mrf.mxu0
        %v3371 = vadd.f32 %v3284, %v3370
        %v3372 = vpop.f32.mrf.mxu0
        %3373 = vdwg.mxu0
        %3374 = vmatprep.subr.mxu0 0.0
        %3375 = vmatpush1.msra.mxu0 0.0
        %3376 = vmatprep.subr.mxu0 0.0
        %3377 = vmatpush1.msra.mxu0 0.0
        %3378 = vmatprep.subr.mxu0 0.0
        %3379 = vmatpush1.msra.mxu0 0.0
        %3380 = vmatprep.subr.mxu0 0.0
        %3381 = vmatpush1.msra.mxu0 0.0
        %3382 = vmatprep.subr.mxu0 0.0
        %3383 = vmatpush1.msra.mxu0 0.0
        %3384 = vmatprep.subr.mxu0 0.0
        %3385 = vmatpush1.msra.mxu0 0.0
        %3386 = vmatprep.subr.mxu0 0.0
        %3387 = vmatpush1.msra.mxu0 0.0
        %3388 = vmatprep.subr.mxu0 0.0
        %3389 = vmatpush1.msra.mxu0 0.0
        %3390 = vmatprep.subr.mxu0 0.0
        %3391 = vmatpush1.msra.mxu0 0.0
        %3392 = vmatprep.subr.mxu0 0.0
        %3393 = vmatpush1.msra.mxu0 0.0
        %3394 = vmatprep.subr.mxu0 0.0
        %3395 = vmatpush1.msra.mxu0 0.0
        %3396 = vmatprep.subr.mxu0 0.0
        %3397 = vmatpush1.msra.mxu0 0.0
        %3398 = vmatprep.subr.mxu0 0.0
        %3399 = vmatpush1.msra.mxu0 0.0
        %3400 = vmatprep.subr.mxu0 0.0
        %3401 = vmatpush1.msra.mxu0 0.0
        %3402 = vmatprep.subr.mxu0 0.0
        %v3403 = vand.u32 %v3193, 4294901760
        %v3404 = vsub.f32 %v3193, %v3403
        %3405 = vmatpush1.msra.mxu0 %v3404
        %3406 = vmatprep.subr.mxu0 0.0
        %v3407 = vand.u32 %v3192, 4294901760
        %v3408 = vsub.f32 %v3192, %v3407
        %3409 = vmatpush1.msra.mxu0 %v3408
        %3410 = vmatprep.subr.mxu0 0.0
        %3411 = vmatpush2.msra.mxu0 0.0
        %3412 = vmatprep.subr.mxu0 0.0
        %3413 = vmatpush2.msra.mxu0 0.0
        %3414 = vmatprep.subr.mxu0 0.0
        %3415 = vmatpush2.msra.mxu0 0.0
        %3416 = vmatprep.subr.mxu0 0.0
        %3417 = vmatpush2.msra.mxu0 0.0
        %3418 = vmatprep.subr.mxu0 0.0
        %3419 = vmatpush2.msra.mxu0 0.0
        %3420 = vmatprep.subr.mxu0 0.0
        %3421 = vmatpush2.msra.mxu0 0.0
        %3422 = vmatprep.subr.mxu0 0.0
        %3423 = vmatpush2.msra.mxu0 0.0
        %3424 = vmatprep.subr.mxu0 0.0
        %3425 = vmatpush2.msra.mxu0 0.0
        %3426 = vmatprep.subr.mxu0 0.0
        %3427 = vmatpush2.msra.mxu0 0.0
        %3428 = vmatprep.subr.mxu0 0.0
        %3429 = vmatpush2.msra.mxu0 0.0
        %3430 = vmatprep.subr.mxu0 0.0
        %3431 = vmatpush2.msra.mxu0 0.0
        %3432 = vmatprep.subr.mxu0 0.0
        %3433 = vmatpush2.msra.mxu0 0.0
        %3434 = vmatprep.subr.mxu0 0.0
        %3435 = vmatpush2.msra.mxu0 0.0
        %3436 = vmatprep.subr.mxu0 0.0
        %3437 = vmatpush2.msra.mxu0 0.0
        %3438 = vmatprep.subr.mxu0 0.0
        %3439 = vmatpush2.msra.mxu0 0.0
        %3440 = vmatprep.subr.mxu0 0.0
        %3441 = vmatpush2.msra.mxu0 0.0
        %3442 = vmatprep.mubr.f32.mxu0 0.0
        %v3443 = vand.u32 %v3195, 4294901760
        %v3444 = vsub.f32 %v3195, %v3443
        %3445 = vmatmul.mubr.f32.gmra.mxu0 %v3444
        %v3446 = vpop.f32.mrf.mxu0
        %v3447 = vadd.f32 %v3365, %v3446
        %v3448 = vpop.f32.mrf.mxu0
        %3449 = vmatprep.mubr.f32.mxu0 0.0
        %v3450 = vand.u32 %v3198, 4294901760
        %v3451 = vsub.f32 %v3198, %v3450
        %3452 = vmatmul.mubr.f32.gmra.mxu0 %v3451
        %v3453 = vpop.f32.mrf.mxu0
        %v3454 = vadd.f32 %v3371, %v3453
        %v3455 = vpop.f32.mrf.mxu0
        %3456 = vdwg.mxu0
        %3457 = vmatprep.subr.mxu0 0.0
        %3458 = vmatpush1.msra.mxu0 0.0
        %3459 = vmatprep.subr.mxu0 0.0
        %3460 = vmatpush1.msra.mxu0 0.0
        %3461 = vmatprep.subr.mxu0 0.0
        %3462 = vmatpush1.msra.mxu0 0.0
        %3463 = vmatprep.subr.mxu0 0.0
        %3464 = vmatpush1.msra.mxu0 0.0
        %3465 = vmatprep.subr.mxu0 0.0
        %3466 = vmatpush1.msra.mxu0 0.0
        %3467 = vmatprep.subr.mxu0 0.0
        %3468 = vmatpush1.msra.mxu0 0.0
        %3469 = vmatprep.subr.mxu0 0.0
        %3470 = vmatpush1.msra.mxu0 0.0
        %3471 = vmatprep.subr.mxu0 0.0
        %3472 = vmatpush1.msra.mxu0 0.0
        %3473 = vmatprep.subr.mxu0 0.0
        %3474 = vmatpush1.msra.mxu0 0.0
        %3475 = vmatprep.subr.mxu0 0.0
        %3476 = vmatpush1.msra.mxu0 0.0
        %3477 = vmatprep.subr.mxu0 0.0
        %3478 = vmatpush1.msra.mxu0 0.0
        %3479 = vmatprep.subr.mxu0 0.0
        %3480 = vmatpush1.msra.mxu0 0.0
        %3481 = vmatprep.subr.mxu0 0.0
        %3482 = vmatpush1.msra.mxu0 0.0
        %3483 = vmatprep.subr.mxu0 0.0
        %3484 = vmatpush1.msra.mxu0 0.0
        %3485 = vmatprep.subr.mxu0 0.0
        %v3486 = vand.u32 %v3193, 4294901760
        %3487 = vmatpush1.msra.mxu0 %v3486
        %3488 = vmatprep.subr.mxu0 0.0
        %v3489 = vand.u32 %v3192, 4294901760
        %3490 = vmatpush1.msra.mxu0 %v3489
        %3491 = vmatprep.subr.mxu0 0.0
        %3492 = vmatpush2.msra.mxu0 0.0
        %3493 = vmatprep.subr.mxu0 0.0
        %3494 = vmatpush2.msra.mxu0 0.0
        %3495 = vmatprep.subr.mxu0 0.0
        %3496 = vmatpush2.msra.mxu0 0.0
        %3497 = vmatprep.subr.mxu0 0.0
        %3498 = vmatpush2.msra.mxu0 0.0
        %3499 = vmatprep.subr.mxu0 0.0
        %3500 = vmatpush2.msra.mxu0 0.0
        %3501 = vmatprep.subr.mxu0 0.0
        %3502 = vmatpush2.msra.mxu0 0.0
        %3503 = vmatprep.subr.mxu0 0.0
        %3504 = vmatpush2.msra.mxu0 0.0
        %3505 = vmatprep.subr.mxu0 0.0
        %3506 = vmatpush2.msra.mxu0 0.0
        %3507 = vmatprep.subr.mxu0 0.0
        %3508 = vmatpush2.msra.mxu0 0.0
        %3509 = vmatprep.subr.mxu0 0.0
        %3510 = vmatpush2.msra.mxu0 0.0
        %3511 = vmatprep.subr.mxu0 0.0
        %3512 = vmatpush2.msra.mxu0 0.0
        %3513 = vmatprep.subr.mxu0 0.0
        %3514 = vmatpush2.msra.mxu0 0.0
        %3515 = vmatprep.subr.mxu0 0.0
        %3516 = vmatpush2.msra.mxu0 0.0
        %3517 = vmatprep.subr.mxu0 0.0
        %3518 = vmatpush2.msra.mxu0 0.0
        %3519 = vmatprep.subr.mxu0 0.0
        %3520 = vmatpush2.msra.mxu0 0.0
        %3521 = vmatprep.subr.mxu0 0.0
        %3522 = vmatpush2.msra.mxu0 0.0
        %3523 = vmatprep.mubr.f32.mxu0 0.0
        %v3524 = vand.u32 %v3195, 4294901760
        %v3525 = vsub.f32 %v3195, %v3524
        %v3526 = vand.u32 %v3525, 4294901760
        %3527 = vmatmul.mubr.f32.gmra.mxu0 %v3526
        %v3528 = vpop.f32.mrf.mxu0
        %v3529 = vadd.f32 %v3447, %v3528
        %v3530 = vpop.f32.mrf.mxu0
        %3531 = vmatprep.mubr.f32.mxu0 0.0
        %v3532 = vand.u32 %v3198, 4294901760
        %v3533 = vsub.f32 %v3198, %v3532
        %v3534 = vand.u32 %v3533, 4294901760
        %3535 = vmatmul.mubr.f32.gmra.mxu0 %v3534
        %v3536 = vpop.f32.mrf.mxu0
        %v3537 = vadd.f32 %v3454, %v3536
        %v3538 = vpop.f32.mrf.mxu0
        %3539 = vdwg.mxu0
        %3540 = vmatprep.subr.mxu0 0.0
        %3541 = vmatpush1.msra.mxu0 0.0
        %3542 = vmatprep.subr.mxu0 0.0
        %3543 = vmatpush1.msra.mxu0 0.0
        %3544 = vmatprep.subr.mxu0 0.0
        %3545 = vmatpush1.msra.mxu0 0.0
        %3546 = vmatprep.subr.mxu0 0.0
        %3547 = vmatpush1.msra.mxu0 0.0
        %3548 = vmatprep.subr.mxu0 0.0
        %3549 = vmatpush1.msra.mxu0 0.0
        %3550 = vmatprep.subr.mxu0 0.0
        %3551 = vmatpush1.msra.mxu0 0.0
        %3552 = vmatprep.subr.mxu0 0.0
        %3553 = vmatpush1.msra.mxu0 0.0
        %3554 = vmatprep.subr.mxu0 0.0
        %3555 = vmatpush1.msra.mxu0 0.0
        %3556 = vmatprep.subr.mxu0 0.0
        %3557 = vmatpush1.msra.mxu0 0.0
        %3558 = vmatprep.subr.mxu0 0.0
        %3559 = vmatpush1.msra.mxu0 0.0
        %3560 = vmatprep.subr.mxu0 0.0
        %3561 = vmatpush1.msra.mxu0 0.0
        %3562 = vmatprep.subr.mxu0 0.0
        %3563 = vmatpush1.msra.mxu0 0.0
        %3564 = vmatprep.subr.mxu0 0.0
        %3565 = vmatpush1.msra.mxu0 0.0
        %3566 = vmatprep.subr.mxu0 0.0
        %3567 = vmatpush1.msra.mxu0 0.0
        %3568 = vmatprep.subr.mxu0 0.0
        %v3569 = vand.u32 %v3193, 4294901760
        %v3570 = vsub.f32 %v3193, %v3569
        %v3571 = vand.u32 %v3570, 4294901760
        %3572 = vmatpush1.msra.mxu0 %v3571
        %3573 = vmatprep.subr.mxu0 0.0
        %v3574 = vand.u32 %v3192, 4294901760
        %v3575 = vsub.f32 %v3192, %v3574
        %v3576 = vand.u32 %v3575, 4294901760
        %3577 = vmatpush1.msra.mxu0 %v3576
        %3578 = vmatprep.subr.mxu0 0.0
        %3579 = vmatpush2.msra.mxu0 0.0
        %3580 = vmatprep.subr.mxu0 0.0
        %3581 = vmatpush2.msra.mxu0 0.0
        %3582 = vmatprep.subr.mxu0 0.0
        %3583 = vmatpush2.msra.mxu0 0.0
        %3584 = vmatprep.subr.mxu0 0.0
        %3585 = vmatpush2.msra.mxu0 0.0
        %3586 = vmatprep.subr.mxu0 0.0
        %3587 = vmatpush2.msra.mxu0 0.0
        %3588 = vmatprep.subr.mxu0 0.0
        %3589 = vmatpush2.msra.mxu0 0.0
        %3590 = vmatprep.subr.mxu0 0.0
        %3591 = vmatpush2.msra.mxu0 0.0
        %3592 = vmatprep.subr.mxu0 0.0
        %3593 = vmatpush2.msra.mxu0 0.0
        %3594 = vmatprep.subr.mxu0 0.0
        %3595 = vmatpush2.msra.mxu0 0.0
        %3596 = vmatprep.subr.mxu0 0.0
        %3597 = vmatpush2.msra.mxu0 0.0
        %3598 = vmatprep.subr.mxu0 0.0
        %3599 = vmatpush2.msra.mxu0 0.0
        %3600 = vmatprep.subr.mxu0 0.0
        %3601 = vmatpush2.msra.mxu0 0.0
        %3602 = vmatprep.subr.mxu0 0.0
        %3603 = vmatpush2.msra.mxu0 0.0
        %3604 = vmatprep.subr.mxu0 0.0
        %3605 = vmatpush2.msra.mxu0 0.0
        %3606 = vmatprep.subr.mxu0 0.0
        %3607 = vmatpush2.msra.mxu0 0.0
        %3608 = vmatprep.subr.mxu0 0.0
        %3609 = vmatpush2.msra.mxu0 0.0
        %3610 = vmatprep.mubr.f32.mxu0 0.0
        %v3611 = vand.u32 %v3195, 4294901760
        %3612 = vmatmul.mubr.f32.gmra.mxu0 %v3611
        %v3613 = vpop.f32.mrf.mxu0
        %v3614 = vadd.f32 %v3529, %v3613
        %v3615 = vpop.f32.mrf.mxu0
        %3616 = vmatprep.mubr.f32.mxu0 0.0
        %v3617 = vand.u32 %v3198, 4294901760
        %3618 = vmatmul.mubr.f32.gmra.mxu0 %v3617
        %v3619 = vpop.f32.mrf.mxu0
        %v3620 = vadd.f32 %v3537, %v3619
        %v3621 = vpop.f32.mrf.mxu0
        %3622 = vdwg.mxu0
        %3623 = vmatprep.subr.mxu0 0.0
        %3624 = vmatpush1.msra.mxu0 0.0
        %3625 = vmatprep.subr.mxu0 0.0
        %3626 = vmatpush1.msra.mxu0 0.0
        %3627 = vmatprep.subr.mxu0 0.0
        %3628 = vmatpush1.msra.mxu0 0.0
        %3629 = vmatprep.subr.mxu0 0.0
        %3630 = vmatpush1.msra.mxu0 0.0
        %3631 = vmatprep.subr.mxu0 0.0
        %3632 = vmatpush1.msra.mxu0 0.0
        %3633 = vmatprep.subr.mxu0 0.0
        %3634 = vmatpush1.msra.mxu0 0.0
        %3635 = vmatprep.subr.mxu0 0.0
        %3636 = vmatpush1.msra.mxu0 0.0
        %3637 = vmatprep.subr.mxu0 0.0
        %3638 = vmatpush1.msra.mxu0 0.0
        %3639 = vmatprep.subr.mxu0 0.0
        %3640 = vmatpush1.msra.mxu0 0.0
        %3641 = vmatprep.subr.mxu0 0.0
        %3642 = vmatpush1.msra.mxu0 0.0
        %3643 = vmatprep.subr.mxu0 0.0
        %3644 = vmatpush1.msra.mxu0 0.0
        %3645 = vmatprep.subr.mxu0 0.0
        %3646 = vmatpush1.msra.mxu0 0.0
        %3647 = vmatprep.subr.mxu0 0.0
        %3648 = vmatpush1.msra.mxu0 0.0
        %3649 = vmatprep.subr.mxu0 0.0
        %3650 = vmatpush1.msra.mxu0 0.0
        %3651 = vmatprep.subr.mxu0 0.0
        %v3652 = vand.u32 %v3193, 4294901760
        %3653 = vmatpush1.msra.mxu0 %v3652
        %3654 = vmatprep.subr.mxu0 0.0
        %v3655 = vand.u32 %v3192, 4294901760
        %3656 = vmatpush1.msra.mxu0 %v3655
        %3657 = vmatprep.subr.mxu0 0.0
        %3658 = vmatpush2.msra.mxu0 0.0
        %3659 = vmatprep.subr.mxu0 0.0
        %3660 = vmatpush2.msra.mxu0 0.0
        %3661 = vmatprep.subr.mxu0 0.0
        %3662 = vmatpush2.msra.mxu0 0.0
        %3663 = vmatprep.subr.mxu0 0.0
        %3664 = vmatpush2.msra.mxu0 0.0
        %3665 = vmatprep.subr.mxu0 0.0
        %3666 = vmatpush2.msra.mxu0 0.0
        %3667 = vmatprep.subr.mxu0 0.0
        %3668 = vmatpush2.msra.mxu0 0.0
        %3669 = vmatprep.subr.mxu0 0.0
        %3670 = vmatpush2.msra.mxu0 0.0
        %3671 = vmatprep.subr.mxu0 0.0
        %3672 = vmatpush2.msra.mxu0 0.0
        %3673 = vmatprep.subr.mxu0 0.0
        %3674 = vmatpush2.msra.mxu0 0.0
        %3675 = vmatprep.subr.mxu0 0.0
        %3676 = vmatpush2.msra.mxu0 0.0
        %3677 = vmatprep.subr.mxu0 0.0
        %3678 = vmatpush2.msra.mxu0 0.0
        %3679 = vmatprep.subr.mxu0 0.0
        %3680 = vmatpush2.msra.mxu0 0.0
        %3681 = vmatprep.subr.mxu0 0.0
        %3682 = vmatpush2.msra.mxu0 0.0
        %3683 = vmatprep.subr.mxu0 0.0
        %3684 = vmatpush2.msra.mxu0 0.0
        %3685 = vmatprep.subr.mxu0 0.0
        %3686 = vmatpush2.msra.mxu0 0.0
        %3687 = vmatprep.subr.mxu0 0.0
        %3688 = vmatpush2.msra.mxu0 0.0
        %3689 = vmatprep.mubr.f32.mxu0 0.0
        %v3690 = vand.u32 %v3195, 4294901760
        %3691 = vmatmul.mubr.f32.gmra.mxu0 %v3690
        %v3692 = vpop.f32.mrf.mxu0
        %v3693 = vadd.f32 %v3614, %v3692
        %v3694 = vpop.f32.mrf.mxu0
        %3695 = vmatprep.mubr.f32.mxu0 0.0
        %v3696 = vand.u32 %v3198, 4294901760
        %3697 = vmatmul.mubr.f32.gmra.mxu0 %v3696
        %v3698 = vpop.f32.mrf.mxu0
        %v3699 = vadd.f32 %v3620, %v3698
        %v3700 = vpop.f32.mrf.mxu0
        %3701 = vdwg.mxu0
        %v3702 = vsel %vm1489, %v3693, 0.0
        %3703 = vadd.xlane.f32.xlu0 %v3702
        %v3704 = vpop.xlane.xlu0 %3703
        %v3705 = vsel %vm1489, %v3699, 0.0
        %3706 = vadd.xlane.f32.xlu0 %v3705
        %v3707 = vpop.xlane.xlu0 %3706
        %v3708 = vmul.f32 %v3704, %v1496
        %v3709 = vmul.f32 %v3707, %v1496
        %v3710 = vsub.f32 %v3693, %v3708
        %v3711 = vsub.f32 %v3699, %v3709
        %v3712 = vmul.f32 %v3710, %v3710
        %v3713 = vmul.f32 %v3711, %v3711
        %v3714 = vsel %vm1489, %v3712, 0.0
        %3715 = vadd.xlane.f32.xlu0 %v3714
        %v3716 = vpop.xlane.xlu0 %3715
        %v3717 = vsel %vm1489, %v3713, 0.0
        %3718 = vadd.xlane.f32.xlu0 %v3717
        %v3719 = vpop.xlane.xlu0 %3718
        %v3720 = vmul.f32 %v3716, %v1496
        %v3721 = vmul.f32 %v3719, %v1496
        %v3722 = vadd.f32 %v3720, 1e-05
        %v3723 = vadd.f32 %v3721, 1e-05
        %v3724 = vrsqrt.pop %v3722
        %v3725 = vrsqrt.pop %v3723
        %v3726 = vmul.f32 %v3710, %v3724
        %v3727 = vmul.f32 %v3711, %v3725
        %v3728 = vlaneseq
        %v3729 = vshrl.u32 %v3728, 7
        %v3730 = vsub.s32 6, %v3729
        %v3731 = vrot.slane %v387, %v3730
        %v3732 = vmul.f32 %v3726, %v3731
        %v3733 = vmul.f32 %v3727, %v3731
        %v3734 = vlaneseq
        %v3735 = vshrl.u32 %v3734, 7
        %v3736 = vsub.s32 7, %v3735
        %v3737 = vrot.slane %v387, %v3736
        %v3738 = vadd.f32 %v3732, %v3737
        %v3739 = vadd.f32 %v3733, %v3737
        %v3740 = vmax.f32 %v3738, 0.0
        %v3741 = vmax.f32 %v3739, 0.0
        %v3742 = vsel %vm1489, %v3740, -inf
        %3743 = vmax.xlane.f32.xlu0 %v3742
        %v3744 = vpop.xlane.xlu0 %3743
        %v3745 = vsel %vm1489, %v3741, -inf
        %3746 = vmax.xlane.f32.xlu0 %v3745
        %v3747 = vpop.xlane.xlu0 %3746
        %v3748 = vsub.f32 %v3740, %v3744
        %v3749 = vsub.f32 %v3741, %v3747
        %v3750 = vmul.f32 %v3748, 1.442695
        %v3751 = vpow.pop %v3750
        %v3752 = vmul.f32 %v3749, 1.442695
        %v3753 = vpow.pop %v3752
        %v3754 = vsel %vm1489, %v3751, 0.0
        %3755 = vadd.xlane.f32.xlu0 %v3754
        %v3756 = vpop.xlane.xlu0 %3755
        %v3757 = vsel %vm1489, %v3753, 0.0
        %3758 = vadd.xlane.f32.xlu0 %v3757
        %v3759 = vpop.xlane.xlu0 %3758
        %v3760 = vrcp.pop %v3756
        %v3761 = vrcp.pop %v3759
        %v3762 = vmul.f32 %v3751, %v3760
        %v3763 = vmul.f32 %v3753, %v3761
        %3764 = vst.msk [vmem:[%s380] sm:$0xff] %vm1489, %v3762
        %3765 = vst.msk [vmem:[%s380 + $0x8] sm:$0xff] %vm1489, %v3763
        %s3766 = sand.u32 %s228, 1
        %s3767 = scalar_lea.sflag [#allocation4], %s3766
        %s3768 = sand.u32 %s228, 1
        %s3769 = smul.addr %s3768, 16
        %s3770 = scalar_lea.vmem [#allocation10], %s3769
        // Predicated region
        $region73: #{tpu_custom_call.1} parent=55 // pred_check
          %p3771 = pneg %p238
        $region74: #{tpu_custom_call.1} parent=55 // pred_check_branch
          %3773 = sbr.rel (%p3771) target = $region76
        $region75: #{tpu_custom_call.1} parent=55 // pred_region
          %s3775 = ssub.s32 256, 256
          %3776 = vsyncadd %s3767, %s3775
          %s3777 = smul.addr %s26, 2
          %s3778 = smul.addr %s3777, 128
          %s3779 = scalar_lea.hbm %s9, %s3778
          %s3780 = sshll.u32 %s3770, 4
          %s3781 = int_to_ptr.vmem [resolvable:$true] %s3780
          %3786 = dma.vmem_to_hbm [thread:$0]  %s3781, 256, %s3779, %s3767, 128, 128, 8
        $region76: #{tpu_custom_call.1} parent=55 // pred_fallthru
          _
      $region56: #{tpu_custom_call.1} parent=5 // pred_fallthru
        _
      %p3787 = scmp.le.s32.totalorder 2, %s21
      // Predicated region
      $region77: #{tpu_custom_call.1} parent=5 // pred_check
        %p3788 = pneg %p3787
      $region78: #{tpu_custom_call.1} parent=5 // pred_check_branch
        %3790 = sbr.rel (%p3788) target = $region80
      $region79: #{tpu_custom_call.1} parent=5 // pred_region
        %s3791 = ssub.s32 %s21, 2
        // Predicated region
        $region81: #{tpu_custom_call.1} parent=79 // pred_check
          %p3792 = pneg %p244
        $region82: #{tpu_custom_call.1} parent=79 // pred_check_branch
          %3794 = sbr.rel (%p3792) target = $region84
        $region83: #{tpu_custom_call.1} parent=79 // pred_region
          %s3795 = sand.u32 %s229, 1
          %s3796 = scalar_lea.sflag [#allocation4], %s3795
          %s3797 = sand.u32 %s229, 1
          %s3798 = smul.addr %s3797, 16
          %s3799 = scalar_lea.vmem [#allocation10], %s3798
          %3800 = dma.done %s3796, 256
        $region84: #{tpu_custom_call.1} parent=79 // pred_fallthru
          _
      $region80: #{tpu_custom_call.1} parent=5 // pred_fallthru
        _
    $region6: #{tpu_custom_call.1} parent=1 // loop_footer
      %s25 = sadd.s32 1, %s21
    $region7: #{tpu_custom_call.1} parent=1 // loop_footer_branch
      %20 = sbr.rel target = $region3
    $region8: #{tpu_custom_call.1} parent=1 // loop_exit
      _
    %3801 = vsyncpa [#allocation3], 1
    %s3802 = scalar_lea.sflag [#allocation3], 1
    %3803 = vsyncpa %s3802, 1
    %3804 = vsyncpa [#allocation6], 1
    %3805 = vsyncpa [#allocation9], 1
    %3806 = vsyncpa [#allocation4], 1
    %s3807 = scalar_lea.sflag [#allocation4], 1
    %3808 = vsyncpa %s3807, 1

</llo_original>
